<compile_context>
chip_gen: v6e
topology: v6e:2x2x1
jax: 0.10.0
libtpu: 0.0.40
codegen_flags: <defaults>
</compile_context>

<pallas_src>
import jax
import jax.numpy as jnp
from jax import lax
from jax.experimental import pallas as pl
from jax.experimental.pallas import tpu as pltpu


# ----------------------------------------------------------------------------
# Fused kernel: multi-layer LSTM + gather(data_index) + tanh + Linear head.
# ----------------------------------------------------------------------------
def _make_lstm_head_kernel(n_layers, Hp, T, tb, unroll, carry_state, cdtype):
    has_seq = n_layers > 1
    n_in = 2 + 3 * n_layers + 2

    def kernel(*refs):
        idx_ref = refs[0]                       # (tb, 1) int32
        x_ref = refs[1]                         # (T, tb, E) cdtype
        w_refs = refs[2:2 + 3 * n_layers]       # per layer: wih^T, whh^T, bias
        w_line_ref = refs[2 + 3 * n_layers]     # (Hp, E) cdtype
        b_line_ref = refs[3 + 3 * n_layers]     # (1, E)  f32
        out_ref = refs[n_in]                    # (tb, E) f32
        scr = list(refs[n_in + 1:])
        pre_scr = scr.pop(0)                    # (T*tb, 4Hp) cdtype
        seq_scr = scr.pop(0) if has_seq else None   # (T*tb, Hp) cdtype
        if not carry_state:
            h_scr, c_scr, sel_scr = scr         # (tb, Hp) f32 each

        idx = idx_ref[...]                      # (tb, 1) int32
        sel_result = None

        for layer in range(n_layers):
            wih = w_refs[3 * layer][...]        # (in_dim, 4Hp) cdtype
            whh = w_refs[3 * layer + 1][...]    # (Hp, 4Hp)    cdtype
            bias = w_refs[3 * layer + 2][...]   # (1, 4Hp)     f32
            is_last = layer == n_layers - 1

            # ---- hoisted input projection: ONE big matmul per layer --------
            if layer == 0:
                xin = x_ref[...].reshape(T * tb, x_ref.shape[2])
            else:
                xin = seq_scr[...]              # already (T*tb, Hp)
            pre = jnp.dot(xin, wih, preferred_element_type=jnp.float32) + bias
            pre_scr[...] = pre.astype(pre_scr.dtype)

            # ---- serial recurrence: one (tb,Hp)@(Hp,4Hp) matmul per step ----
            def lstm_step(t, h, c, whh=whh):
                off = pl.multiple_of(t * tb, tb)
                gates = (pre_scr[pl.ds(off, tb), :].astype(jnp.float32)
                         + jnp.dot(h.astype(cdtype), whh,
                                   preferred_element_type=jnp.float32))
                sig = jax.nn.sigmoid(gates[:, :3 * Hp])    # [i | f | o]
                i_g = sig[:, 0:Hp]
                f_g = sig[:, Hp:2 * Hp]
                o_g = sig[:, 2 * Hp:3 * Hp]
                g_g = jnp.tanh(gates[:, 3 * Hp:4 * Hp])
                c_new = f_g * c + i_g * g_g
                h_new = o_g * jnp.tanh(c_new)
                return h_new, c_new

            zeros = jnp.zeros((tb, Hp), jnp.float32)

            if carry_state:
                if is_last:
                    def body(t, carry):
                        h, c, sel = carry
                        h_new, c_new = lstm_step(t, h, c)
                        # incremental gather: output[b, data_index[b]]
                        sel = jnp.where(idx == t, h_new, sel)
                        return h_new, c_new, sel
                    _, _, sel_result = lax.fori_loop(
                        0, T, body, (zeros, zeros, zeros), unroll=unroll)
                else:
                    def body(t, carry):
                        h, c = carry
                        h_new, c_new = lstm_step(t, h, c)
                        off = pl.multiple_of(t * tb, tb)
                        seq_scr[pl.ds(off, tb), :] = h_new.astype(seq_scr.dtype)
                        return h_new, c_new
                    lax.fori_loop(0, T, body, (zeros, zeros), unroll=unroll)
            else:
                h_scr[...] = zeros
                c_scr[...] = zeros
                if is_last:
                    sel_scr[...] = zeros

                def body(t, carry, is_last=is_last):
                    h_new, c_new = lstm_step(t, h_scr[...], c_scr[...])
                    h_scr[...] = h_new
                    c_scr[...] = c_new
                    if is_last:
                        sel_scr[...] = jnp.where(idx == t, h_new, sel_scr[...])
                    else:
                        off = pl.multiple_of(t * tb, tb)
                        seq_scr[pl.ds(off, tb), :] = h_new.astype(seq_scr.dtype)
                    return carry

                lax.fori_loop(0, T, body, 0, unroll=unroll)
                if is_last:
                    sel_result = sel_scr[...]

        # ---- fused head: tanh + Linear(Hp -> E) -----------------------------
        h_sel = jnp.tanh(sel_result)                        # (tb, Hp) f32
        out_ref[...] = (jnp.dot(h_sel.astype(cdtype), w_line_ref[...],
                                preferred_element_type=jnp.float32)
                        + b_line_ref[...])

    return kernel


# ----------------------------------------------------------------------------
# Tiling / VMEM helpers.
# ----------------------------------------------------------------------------
def _pick_batch_tile(B):
    """Return (padded_B, batch_tile). Batch padded to a sublane multiple so
    (T, tb, *) <-> (T*tb, *) reshapes are layout-free; tb=256 for big batches
    (fills v6e/v7x MXU M dim and gives >= 2 grid programs for 2 TCs)."""
    Bp = ((B + 7) // 8) * 8
    if Bp <= 256:
        return Bp, Bp
    tb = 256
    return ((B + tb - 1) // tb) * tb, tb


def _vmem_limit_bytes():
    try:
        cap = getattr(pltpu.get_tpu_info(), "vmem_capacity_bytes", None)
        if cap:
            # ~109 MiB on 128 MiB parts (v5e/v6e), ~54 MiB on v7x (64 MiB/TC).
            return int(cap * 0.85)
    except Exception:
        pass
    return 48 * 1024 * 1024


# ----------------------------------------------------------------------------
# Wrapper: pads batch, builds specs, launches the single fused kernel.
# ----------------------------------------------------------------------------
def model_forward(kparams, input_data, data_index):
    B, T, E = input_data.shape
    Hp = kparams["whh_t"][0].shape[0]
    n_layers = len(kparams["wih_t"])
    cdtype = kparams["wih_t"][0].dtype
    Bp, tb = _pick_batch_tile(B)
    # carry h/c/sel in vregs only when the tile is small enough to not spill
    carry_state = tb * Hp * 4 <= 64 * 1024
    unroll = True if T <= 32 else 8

    x = input_data
    idx = data_index.astype(jnp.int32)
    if Bp != B:
        x = jnp.pad(x, ((0, Bp - B), (0, 0), (0, 0)))
        idx = jnp.pad(idx, (0, Bp - B))
    x_tm = jnp.transpose(x, (1, 0, 2)).astype(cdtype)       # (T, Bp, E) bf16
    idx2d = idx.reshape(Bp, 1)

    flat_w = []
    in_specs = [
        pl.BlockSpec((tb, 1), lambda i: (i, 0)),             # data_index tile
        pl.BlockSpec((T, tb, E), lambda i: (0, i, 0)),       # x tile, time-major
    ]
    for wih, whh, b in zip(kparams["wih_t"], kparams["whh_t"], kparams["bias"]):
        flat_w += [wih, whh, b]
        in_specs += [
            pl.BlockSpec(wih.shape, lambda i: (0, 0)),       # VMEM-resident
            pl.BlockSpec(whh.shape, lambda i: (0, 0)),
            pl.BlockSpec(b.shape, lambda i: (0, 0)),
        ]
    in_specs += [
        pl.BlockSpec(kparams["w_line_t"].shape, lambda i: (0, 0)),
        pl.BlockSpec(kparams["b_line"].shape, lambda i: (0, 0)),
    ]

    scratch = [pltpu.VMEM((T * tb, 4 * Hp), cdtype)]         # hoisted pregates
    if n_layers > 1:
        scratch.append(pltpu.VMEM((T * tb, Hp), cdtype))     # inter-layer seq
    if not carry_state:
        scratch += [
            pltpu.VMEM((tb, Hp), jnp.float32),               # h state
            pltpu.VMEM((tb, Hp), jnp.float32),               # c state
            pltpu.VMEM((tb, Hp), jnp.float32),               # selected h
        ]

    kernel = _make_lstm_head_kernel(n_layers, Hp, T, tb, unroll,
                                    carry_state, cdtype)

    out = pl.pallas_call(
        kernel,
        out_shape=jax.ShapeDtypeStruct((Bp, E), jnp.float32),
        grid=(Bp // tb,),
        in_specs=in_specs,
        out_specs=pl.BlockSpec((tb, E), lambda i: (i, 0)),
        scratch_shapes=scratch,
        compiler_params=pltpu.CompilerParams(
            dimension_semantics=("parallel",),
            vmem_limit_bytes=_vmem_limit_bytes(),
        ),
    )(idx2d, x_tm, *flat_w, kparams["w_line_t"], kparams["b_line"])
    return out[:B]


# ----------------------------------------------------------------------------
# Parameter init (raw PyTorch layout) + kernel-layout preparation.
# ----------------------------------------------------------------------------
def init_raw_params(key, embed_size, hidden_size, n_layers):
    H = hidden_size
    bound = 1.0 / float(jnp.sqrt(jnp.float32(H)))
    layers = []
    for l in range(n_layers):
        in_dim = embed_size if l == 0 else H
        key, k1, k2, k3, k4 = jax.random.split(key, 5)
        layers.append(dict(
            w_ih=jax.random.uniform(k1, (4 * H, in_dim), jnp.float32, -bound, bound),
            w_hh=jax.random.uniform(k2, (4 * H, H), jnp.float32, -bound, bound),
            b_ih=jax.random.uniform(k3, (4 * H,), jnp.float32, -bound, bound),
            b_hh=jax.random.uniform(k4, (4 * H,), jnp.float32, -bound, bound),
        ))
    key, k5, k6 = jax.random.split(key, 3)
    w_line = jax.random.uniform(k5, (embed_size, H), jnp.float32, -bound, bound)
    b_line = jax.random.uniform(k6, (embed_size,), jnp.float32, -bound, bound)
    return dict(hidden_size=H, layers=layers, w_line=w_line, b_line=b_line)


def prepare_kernel_params(raw, cdtype=jnp.bfloat16):
    """Permute PyTorch gate order [i,f,g,o] -> [i,f,o,g], zero-pad H to a
    multiple of 128 (padded lanes provably stay 0 through the recurrence),
    pre-transpose, and cast matmul operands to the MXU compute dtype."""
    H = raw["hidden_size"]
    Hp = ((H + 127) // 128) * 128

    def w4(w, pad_in):                      # (4H, in) -> (in+pad_in, 4Hp)
        i, f, g, o = jnp.split(w, 4, axis=0)
        blocks = [jnp.pad(blk, ((0, Hp - H), (0, pad_in))) for blk in (i, f, o, g)]
        return jnp.concatenate(blocks, axis=0).T.astype(cdtype)

    def b4(b):                              # (4H,) -> (1, 4Hp) f32
        i, f, g, o = jnp.split(b, 4)
        blocks = [jnp.pad(blk, (0, Hp - H)) for blk in (i, f, o, g)]
        return jnp.concatenate(blocks)[None, :].astype(jnp.float32)

    p = {"wih_t": [], "whh_t": [], "bias": []}
    for l, lay in enumerate(raw["layers"]):
        pad_in = 0 if l == 0 else Hp - H
        p["wih_t"].append(w4(lay["w_ih"], pad_in))
        p["whh_t"].append(w4(lay["w_hh"], Hp - H))
        p["bias"].append(b4(lay["b_ih"] + lay["b_hh"]))
    p["w_line_t"] = jnp.pad(raw["w_line"].T, ((0, Hp - H), (0, 0))).astype(cdtype)
    p["b_line"] = raw["b_line"][None, :].astype(jnp.float32)
    return p


# ----------------------------------------------------------------------------
# Pure-JAX f32 reference (PyTorch semantics) for correctness check.
# ----------------------------------------------------------------------------
def ref_forward(raw, x, data_index):
    B, T, E = x.shape
    H = raw["hidden_size"]
    inp = x
    for lay in raw["layers"]:
        b = lay["b_ih"] + lay["b_hh"]
        h = jnp.zeros((B, H), jnp.float32)
        c = jnp.zeros((B, H), jnp.float32)
        outs = []
        for t in range(T):
            g = inp[:, t, :] @ lay["w_ih"].T + h @ lay["w_hh"].T + b
            i = jax.nn.sigmoid(g[:, 0:H])
            f = jax.nn.sigmoid(g[:, H:2 * H])
            gg = jnp.tanh(g[:, 2 * H:3 * H])
            o = jax.nn.sigmoid(g[:, 3 * H:4 * H])
            c = f * c + i * gg
            h = o * jnp.tanh(c)
            outs.append(h)
        inp = jnp.stack(outs, axis=1)
    sel = inp[jnp.arange(B), data_index]
    return jnp.tanh(sel) @ raw["w_line"].T + raw["b_line"]


if __name__ == "__main__":
    B, T, E, H, L = 2, 8, 16, 32, 2

    key = jax.random.PRNGKey(0)
    key, kx, ki, kp = jax.random.split(key, 4)
    input_data = jax.random.normal(kx, (B, T, E), jnp.float32)
    data_index = jax.random.randint(ki, (B,), 0, T, jnp.int32)

    raw = init_raw_params(kp, E, H, L)
    kparams = prepare_kernel_params(raw, cdtype=jnp.bfloat16)

    out = model_forward(kparams, input_data, data_index)
    out = jax.block_until_ready(out)

    ref = ref_forward(raw, input_data, data_index)
    assert out.shape == (B, E), out.shape
    err = float(jnp.max(jnp.abs(out - ref)))
    # bf16 matmul operands vs an all-f32 reference -> bf16-level tolerance.
    assert err < 2e-2, ("mismatch", err)

    print("KERNEL_OK")
</pallas_src>

<mosaic_0001>
module attributes {stable_mosaic.version = 11 : i64} {
  func.func @kernel(%arg0: i32, %arg1: memref<8x1xi32, #tpu.memory_space<vmem>>, %arg2: memref<8x8x16xbf16, #tpu.memory_space<vmem>>, %arg3: memref<16x512xbf16, #tpu.memory_space<vmem>>, %arg4: memref<128x512xbf16, #tpu.memory_space<vmem>>, %arg5: memref<1x512xf32, #tpu.memory_space<vmem>>, %arg6: memref<128x512xbf16, #tpu.memory_space<vmem>>, %arg7: memref<128x512xbf16, #tpu.memory_space<vmem>>, %arg8: memref<1x512xf32, #tpu.memory_space<vmem>>, %arg9: memref<128x16xbf16, #tpu.memory_space<vmem>>, %arg10: memref<1x16xf32, #tpu.memory_space<vmem>>, %arg11: memref<8x16xf32, #tpu.memory_space<vmem>>, %arg12: memref<64x512xbf16, #tpu.memory_space<vmem>>, %arg13: memref<64x128xbf16, #tpu.memory_space<vmem>>) attributes {dimension_semantics = [#tpu.dimension_semantics<parallel>], iteration_bounds = array<i64: 1>, scalar_prefetch = 0 : i64, scratch_operands = 2 : i64, tpu.core_type = #tpu.core_type<tc>, window_params = [{transform_indices = @transform_0, window_bounds = array<i64: 8, 1>}, {transform_indices = @transform_1, window_bounds = array<i64: 8, 8, 16>}, {pipeline_mode = #tpu.pipeline_mode<synchronous>, transform_indices = @transform_2, window_bounds = array<i64: 16, 512>}, {pipeline_mode = #tpu.pipeline_mode<synchronous>, transform_indices = @transform_3, window_bounds = array<i64: 128, 512>}, {pipeline_mode = #tpu.pipeline_mode<synchronous>, transform_indices = @transform_4, window_bounds = array<i64: 1, 512>}, {pipeline_mode = #tpu.pipeline_mode<synchronous>, transform_indices = @transform_5, window_bounds = array<i64: 128, 512>}, {pipeline_mode = #tpu.pipeline_mode<synchronous>, transform_indices = @transform_6, window_bounds = array<i64: 128, 512>}, {pipeline_mode = #tpu.pipeline_mode<synchronous>, transform_indices = @transform_7, window_bounds = array<i64: 1, 512>}, {pipeline_mode = #tpu.pipeline_mode<synchronous>, transform_indices = @transform_8, window_bounds = array<i64: 128, 16>}, {pipeline_mode = #tpu.pipeline_mode<synchronous>, transform_indices = @transform_9, window_bounds = array<i64: 1, 16>}, {transform_indices = @transform_10, window_bounds = array<i64: 8, 16>}]} {
    %c0 = arith.constant 0 : index
    %c0_0 = arith.constant 0 : index
    %0 = vector.load %arg1[%c0, %c0_0] : memref<8x1xi32, #tpu.memory_space<vmem>>, vector<8x1xi32>
    %c0_1 = arith.constant 0 : index
    %c0_2 = arith.constant 0 : index
    %1 = vector.load %arg3[%c0_1, %c0_2] : memref<16x512xbf16, #tpu.memory_space<vmem>>, vector<16x512xbf16>
    %c0_3 = arith.constant 0 : index
    %c0_4 = arith.constant 0 : index
    %2 = vector.load %arg4[%c0_3, %c0_4] : memref<128x512xbf16, #tpu.memory_space<vmem>>, vector<128x512xbf16>
    %c0_5 = arith.constant 0 : index
    %c0_6 = arith.constant 0 : index
    %3 = vector.load %arg5[%c0_5, %c0_6] : memref<1x512xf32, #tpu.memory_space<vmem>>, vector<1x512xf32>
    %c0_7 = arith.constant 0 : index
    %c0_8 = arith.constant 0 : index
    %c0_9 = arith.constant 0 : index
    %4 = vector.load %arg2[%c0_7, %c0_8, %c0_9] : memref<8x8x16xbf16, #tpu.memory_space<vmem>>, vector<8x8x16xbf16>
    %5 = vector.shape_cast %4 : vector<8x8x16xbf16> to vector<64x16xbf16>
    %cst = arith.constant dense<0.000000e+00> : vector<64x512xf32>
    %6 = tpu.matmul %5, %1, %cst {dimension_numbers = #tpu.dot_dimension_numbers<[1], [0], [0], [1], [0, 0, 1, 1], [], []>} : vector<64x16xbf16>, vector<16x512xbf16>, vector<64x512xf32> -> vector<64x512xf32>
    %7 = vector.broadcast %3 : vector<1x512xf32> to vector<64x512xf32>
    %8 = arith.addf %6, %7 : vector<64x512xf32>
    %9 = arith.truncf %8 : vector<64x512xf32> to vector<64x512xbf16>
    %c0_10 = arith.constant 0 : index
    %c0_11 = arith.constant 0 : index
    %10 = vector.load %arg12[%c0_10, %c0_11] : memref<64x512xbf16, #tpu.memory_space<vmem>>, vector<64x512xbf16>
    tpu.vector_store %arg12[%c0_10, %c0_11], %9 {strides = array<i32>} : memref<64x512xbf16, #tpu.memory_space<vmem>>, vector<64x512xbf16>,
    %cst_12 = arith.constant 0.000000e+00 : f32
    %11 = vector.broadcast %cst_12 : f32 to vector<8x128xf32>
    %c0_i32 = arith.constant 0 : i32
    %c8_i32 = arith.constant 8 : i32
    %12 = arith.muli %c0_i32, %c8_i32 : i32
    %13 = tpu.assume_multiple %12, 8 : i32
    %14 = arith.index_cast %13 : i32 to index
    %c0_13 = arith.constant 0 : index
    %15 = vector.load %arg12[%14, %c0_13] : memref<64x512xbf16, #tpu.memory_space<vmem>>, vector<8x512xbf16>
    %16 = arith.extf %15 : vector<8x512xbf16> to vector<8x512xf32>
    %17 = arith.truncf %11 : vector<8x128xf32> to vector<8x128xbf16>
    %cst_14 = arith.constant dense<0.000000e+00> : vector<8x512xf32>
    %18 = tpu.matmul %17, %2, %cst_14 {dimension_numbers = #tpu.dot_dimension_numbers<[1], [0], [0], [1], [0, 0, 1, 1], [], []>} : vector<8x128xbf16>, vector<128x512xbf16>, vector<8x512xf32> -> vector<8x512xf32>
    %19 = arith.addf %16, %18 : vector<8x512xf32>
    %20 = vector.extract_strided_slice %19 {offsets = [0, 0], sizes = [8, 384], strides = [1, 1]} : vector<8x512xf32> to vector<8x384xf32>
    %21 = arith.negf %20 : vector<8x384xf32>
    %22 = math.exp %21 : vector<8x384xf32>
    %cst_15 = arith.constant 1.000000e+00 : f32
    %23 = vector.broadcast %cst_15 : f32 to vector<8x384xf32>
    %24 = arith.addf %23, %22 : vector<8x384xf32>
    %25 = arith.divf %23, %24 : vector<8x384xf32>
    %26 = vector.extract_strided_slice %25 {offsets = [0, 0], sizes = [8, 128], strides = [1, 1]} : vector<8x384xf32> to vector<8x128xf32>
    %27 = vector.extract_strided_slice %25 {offsets = [0, 128], sizes = [8, 128], strides = [1, 1]} : vector<8x384xf32> to vector<8x128xf32>
    %28 = vector.extract_strided_slice %25 {offsets = [0, 256], sizes = [8, 128], strides = [1, 1]} : vector<8x384xf32> to vector<8x128xf32>
    %29 = vector.extract_strided_slice %19 {offsets = [0, 384], sizes = [8, 128], strides = [1, 1]} : vector<8x512xf32> to vector<8x128xf32>
    %30 = math.tanh %29 : vector<8x128xf32>
    %31 = arith.mulf %27, %11 : vector<8x128xf32>
    %32 = arith.mulf %26, %30 : vector<8x128xf32>
    %33 = arith.addf %31, %32 : vector<8x128xf32>
    %34 = math.tanh %33 : vector<8x128xf32>
    %35 = arith.mulf %28, %34 : vector<8x128xf32>
    %c8_i32_16 = arith.constant 8 : i32
    %36 = arith.muli %c0_i32, %c8_i32_16 : i32
    %37 = tpu.assume_multiple %36, 8 : i32
    %38 = arith.truncf %35 : vector<8x128xf32> to vector<8x128xbf16>
    %39 = arith.index_cast %37 : i32 to index
    %c0_17 = arith.constant 0 : index
    %40 = vector.load %arg13[%39, %c0_17] : memref<64x128xbf16, #tpu.memory_space<vmem>>, vector<8x128xbf16>
    tpu.vector_store %arg13[%39, %c0_17], %38 {strides = array<i32>} : memref<64x128xbf16, #tpu.memory_space<vmem>>, vector<8x128xbf16>,
    %c1_i32 = arith.constant 1 : i32
    %c8_i32_18 = arith.constant 8 : i32
    %41 = arith.muli %c1_i32, %c8_i32_18 : i32
    %42 = tpu.assume_multiple %41, 8 : i32
    %43 = arith.index_cast %42 : i32 to index
    %c0_19 = arith.constant 0 : index
    %44 = vector.load %arg12[%43, %c0_19] : memref<64x512xbf16, #tpu.memory_space<vmem>>, vector<8x512xbf16>
    %45 = arith.extf %44 : vector<8x512xbf16> to vector<8x512xf32>
    %46 = arith.truncf %35 : vector<8x128xf32> to vector<8x128xbf16>
    %cst_20 = arith.constant dense<0.000000e+00> : vector<8x512xf32>
    %47 = tpu.matmul %46, %2, %cst_20 {dimension_numbers = #tpu.dot_dimension_numbers<[1], [0], [0], [1], [0, 0, 1, 1], [], []>} : vector<8x128xbf16>, vector<128x512xbf16>, vector<8x512xf32> -> vector<8x512xf32>
    %48 = arith.addf %45, %47 : vector<8x512xf32>
    %49 = vector.extract_strided_slice %48 {offsets = [0, 0], sizes = [8, 384], strides = [1, 1]} : vector<8x512xf32> to vector<8x384xf32>
    %50 = arith.negf %49 : vector<8x384xf32>
    %51 = math.exp %50 : vector<8x384xf32>
    %cst_21 = arith.constant 1.000000e+00 : f32
    %52 = vector.broadcast %cst_21 : f32 to vector<8x384xf32>
    %53 = arith.addf %52, %51 : vector<8x384xf32>
    %54 = arith.divf %52, %53 : vector<8x384xf32>
    %55 = vector.extract_strided_slice %54 {offsets = [0, 0], sizes = [8, 128], strides = [1, 1]} : vector<8x384xf32> to vector<8x128xf32>
    %56 = vector.extract_strided_slice %54 {offsets = [0, 128], sizes = [8, 128], strides = [1, 1]} : vector<8x384xf32> to vector<8x128xf32>
    %57 = vector.extract_strided_slice %54 {offsets = [0, 256], sizes = [8, 128], strides = [1, 1]} : vector<8x384xf32> to vector<8x128xf32>
    %58 = vector.extract_strided_slice %48 {offsets = [0, 384], sizes = [8, 128], strides = [1, 1]} : vector<8x512xf32> to vector<8x128xf32>
    %59 = math.tanh %58 : vector<8x128xf32>
    %60 = arith.mulf %56, %33 : vector<8x128xf32>
    %61 = arith.mulf %55, %59 : vector<8x128xf32>
    %62 = arith.addf %60, %61 : vector<8x128xf32>
    %63 = math.tanh %62 : vector<8x128xf32>
    %64 = arith.mulf %57, %63 : vector<8x128xf32>
    %c8_i32_22 = arith.constant 8 : i32
    %65 = arith.muli %c1_i32, %c8_i32_22 : i32
    %66 = tpu.assume_multiple %65, 8 : i32
    %67 = arith.truncf %64 : vector<8x128xf32> to vector<8x128xbf16>
    %68 = arith.index_cast %66 : i32 to index
    %c0_23 = arith.constant 0 : index
    %69 = vector.load %arg13[%68, %c0_23] : memref<64x128xbf16, #tpu.memory_space<vmem>>, vector<8x128xbf16>
    tpu.vector_store %arg13[%68, %c0_23], %67 {strides = array<i32>} : memref<64x128xbf16, #tpu.memory_space<vmem>>, vector<8x128xbf16>,
    %c2_i32 = arith.constant 2 : i32
    %c8_i32_24 = arith.constant 8 : i32
    %70 = arith.muli %c2_i32, %c8_i32_24 : i32
    %71 = tpu.assume_multiple %70, 8 : i32
    %72 = arith.index_cast %71 : i32 to index
    %c0_25 = arith.constant 0 : index
    %73 = vector.load %arg12[%72, %c0_25] : memref<64x512xbf16, #tpu.memory_space<vmem>>, vector<8x512xbf16>
    %74 = arith.extf %73 : vector<8x512xbf16> to vector<8x512xf32>
    %75 = arith.truncf %64 : vector<8x128xf32> to vector<8x128xbf16>
    %cst_26 = arith.constant dense<0.000000e+00> : vector<8x512xf32>
    %76 = tpu.matmul %75, %2, %cst_26 {dimension_numbers = #tpu.dot_dimension_numbers<[1], [0], [0], [1], [0, 0, 1, 1], [], []>} : vector<8x128xbf16>, vector<128x512xbf16>, vector<8x512xf32> -> vector<8x512xf32>
    %77 = arith.addf %74, %76 : vector<8x512xf32>
    %78 = vector.extract_strided_slice %77 {offsets = [0, 0], sizes = [8, 384], strides = [1, 1]} : vector<8x512xf32> to vector<8x384xf32>
    %79 = arith.negf %78 : vector<8x384xf32>
    %80 = math.exp %79 : vector<8x384xf32>
    %cst_27 = arith.constant 1.000000e+00 : f32
    %81 = vector.broadcast %cst_27 : f32 to vector<8x384xf32>
    %82 = arith.addf %81, %80 : vector<8x384xf32>
    %83 = arith.divf %81, %82 : vector<8x384xf32>
    %84 = vector.extract_strided_slice %83 {offsets = [0, 0], sizes = [8, 128], strides = [1, 1]} : vector<8x384xf32> to vector<8x128xf32>
    %85 = vector.extract_strided_slice %83 {offsets = [0, 128], sizes = [8, 128], strides = [1, 1]} : vector<8x384xf32> to vector<8x128xf32>
    %86 = vector.extract_strided_slice %83 {offsets = [0, 256], sizes = [8, 128], strides = [1, 1]} : vector<8x384xf32> to vector<8x128xf32>
    %87 = vector.extract_strided_slice %77 {offsets = [0, 384], sizes = [8, 128], strides = [1, 1]} : vector<8x512xf32> to vector<8x128xf32>
    %88 = math.tanh %87 : vector<8x128xf32>
    %89 = arith.mulf %85, %62 : vector<8x128xf32>
    %90 = arith.mulf %84, %88 : vector<8x128xf32>
    %91 = arith.addf %89, %90 : vector<8x128xf32>
    %92 = math.tanh %91 : vector<8x128xf32>
    %93 = arith.mulf %86, %92 : vector<8x128xf32>
    %c8_i32_28 = arith.constant 8 : i32
    %94 = arith.muli %c2_i32, %c8_i32_28 : i32
    %95 = tpu.assume_multiple %94, 8 : i32
    %96 = arith.truncf %93 : vector<8x128xf32> to vector<8x128xbf16>
    %97 = arith.index_cast %95 : i32 to index
    %c0_29 = arith.constant 0 : index
    %98 = vector.load %arg13[%97, %c0_29] : memref<64x128xbf16, #tpu.memory_space<vmem>>, vector<8x128xbf16>
    tpu.vector_store %arg13[%97, %c0_29], %96 {strides = array<i32>} : memref<64x128xbf16, #tpu.memory_space<vmem>>, vector<8x128xbf16>,
    %c3_i32 = arith.constant 3 : i32
    %c8_i32_30 = arith.constant 8 : i32
    %99 = arith.muli %c3_i32, %c8_i32_30 : i32
    %100 = tpu.assume_multiple %99, 8 : i32
    %101 = arith.index_cast %100 : i32 to index
    %c0_31 = arith.constant 0 : index
    %102 = vector.load %arg12[%101, %c0_31] : memref<64x512xbf16, #tpu.memory_space<vmem>>, vector<8x512xbf16>
    %103 = arith.extf %102 : vector<8x512xbf16> to vector<8x512xf32>
    %104 = arith.truncf %93 : vector<8x128xf32> to vector<8x128xbf16>
    %cst_32 = arith.constant dense<0.000000e+00> : vector<8x512xf32>
    %105 = tpu.matmul %104, %2, %cst_32 {dimension_numbers = #tpu.dot_dimension_numbers<[1], [0], [0], [1], [0, 0, 1, 1], [], []>} : vector<8x128xbf16>, vector<128x512xbf16>, vector<8x512xf32> -> vector<8x512xf32>
    %106 = arith.addf %103, %105 : vector<8x512xf32>
    %107 = vector.extract_strided_slice %106 {offsets = [0, 0], sizes = [8, 384], strides = [1, 1]} : vector<8x512xf32> to vector<8x384xf32>
    %108 = arith.negf %107 : vector<8x384xf32>
    %109 = math.exp %108 : vector<8x384xf32>
    %cst_33 = arith.constant 1.000000e+00 : f32
    %110 = vector.broadcast %cst_33 : f32 to vector<8x384xf32>
    %111 = arith.addf %110, %109 : vector<8x384xf32>
    %112 = arith.divf %110, %111 : vector<8x384xf32>
    %113 = vector.extract_strided_slice %112 {offsets = [0, 0], sizes = [8, 128], strides = [1, 1]} : vector<8x384xf32> to vector<8x128xf32>
    %114 = vector.extract_strided_slice %112 {offsets = [0, 128], sizes = [8, 128], strides = [1, 1]} : vector<8x384xf32> to vector<8x128xf32>
    %115 = vector.extract_strided_slice %112 {offsets = [0, 256], sizes = [8, 128], strides = [1, 1]} : vector<8x384xf32> to vector<8x128xf32>
    %116 = vector.extract_strided_slice %106 {offsets = [0, 384], sizes = [8, 128], strides = [1, 1]} : vector<8x512xf32> to vector<8x128xf32>
    %117 = math.tanh %116 : vector<8x128xf32>
    %118 = arith.mulf %114, %91 : vector<8x128xf32>
    %119 = arith.mulf %113, %117 : vector<8x128xf32>
    %120 = arith.addf %118, %119 : vector<8x128xf32>
    %121 = math.tanh %120 : vector<8x128xf32>
    %122 = arith.mulf %115, %121 : vector<8x128xf32>
    %c8_i32_34 = arith.constant 8 : i32
    %123 = arith.muli %c3_i32, %c8_i32_34 : i32
    %124 = tpu.assume_multiple %123, 8 : i32
    %125 = arith.truncf %122 : vector<8x128xf32> to vector<8x128xbf16>
    %126 = arith.index_cast %124 : i32 to index
    %c0_35 = arith.constant 0 : index
    %127 = vector.load %arg13[%126, %c0_35] : memref<64x128xbf16, #tpu.memory_space<vmem>>, vector<8x128xbf16>
    tpu.vector_store %arg13[%126, %c0_35], %125 {strides = array<i32>} : memref<64x128xbf16, #tpu.memory_space<vmem>>, vector<8x128xbf16>,
    %c4_i32 = arith.constant 4 : i32
    %c8_i32_36 = arith.constant 8 : i32
    %128 = arith.muli %c4_i32, %c8_i32_36 : i32
    %129 = tpu.assume_multiple %128, 8 : i32
    %130 = arith.index_cast %129 : i32 to index
    %c0_37 = arith.constant 0 : index
    %131 = vector.load %arg12[%130, %c0_37] : memref<64x512xbf16, #tpu.memory_space<vmem>>, vector<8x512xbf16>
    %132 = arith.extf %131 : vector<8x512xbf16> to vector<8x512xf32>
    %133 = arith.truncf %122 : vector<8x128xf32> to vector<8x128xbf16>
    %cst_38 = arith.constant dense<0.000000e+00> : vector<8x512xf32>
    %134 = tpu.matmul %133, %2, %cst_38 {dimension_numbers = #tpu.dot_dimension_numbers<[1], [0], [0], [1], [0, 0, 1, 1], [], []>} : vector<8x128xbf16>, vector<128x512xbf16>, vector<8x512xf32> -> vector<8x512xf32>
    %135 = arith.addf %132, %134 : vector<8x512xf32>
    %136 = vector.extract_strided_slice %135 {offsets = [0, 0], sizes = [8, 384], strides = [1, 1]} : vector<8x512xf32> to vector<8x384xf32>
    %137 = arith.negf %136 : vector<8x384xf32>
    %138 = math.exp %137 : vector<8x384xf32>
    %cst_39 = arith.constant 1.000000e+00 : f32
    %139 = vector.broadcast %cst_39 : f32 to vector<8x384xf32>
    %140 = arith.addf %139, %138 : vector<8x384xf32>
    %141 = arith.divf %139, %140 : vector<8x384xf32>
    %142 = vector.extract_strided_slice %141 {offsets = [0, 0], sizes = [8, 128], strides = [1, 1]} : vector<8x384xf32> to vector<8x128xf32>
    %143 = vector.extract_strided_slice %141 {offsets = [0, 128], sizes = [8, 128], strides = [1, 1]} : vector<8x384xf32> to vector<8x128xf32>
    %144 = vector.extract_strided_slice %141 {offsets = [0, 256], sizes = [8, 128], strides = [1, 1]} : vector<8x384xf32> to vector<8x128xf32>
    %145 = vector.extract_strided_slice %135 {offsets = [0, 384], sizes = [8, 128], strides = [1, 1]} : vector<8x512xf32> to vector<8x128xf32>
    %146 = math.tanh %145 : vector<8x128xf32>
    %147 = arith.mulf %143, %120 : vector<8x128xf32>
    %148 = arith.mulf %142, %146 : vector<8x128xf32>
    %149 = arith.addf %147, %148 : vector<8x128xf32>
    %150 = math.tanh %149 : vector<8x128xf32>
    %151 = arith.mulf %144, %150 : vector<8x128xf32>
    %c8_i32_40 = arith.constant 8 : i32
    %152 = arith.muli %c4_i32, %c8_i32_40 : i32
    %153 = tpu.assume_multiple %152, 8 : i32
    %154 = arith.truncf %151 : vector<8x128xf32> to vector<8x128xbf16>
    %155 = arith.index_cast %153 : i32 to index
    %c0_41 = arith.constant 0 : index
    %156 = vector.load %arg13[%155, %c0_41] : memref<64x128xbf16, #tpu.memory_space<vmem>>, vector<8x128xbf16>
    tpu.vector_store %arg13[%155, %c0_41], %154 {strides = array<i32>} : memref<64x128xbf16, #tpu.memory_space<vmem>>, vector<8x128xbf16>,
    %c5_i32 = arith.constant 5 : i32
    %c8_i32_42 = arith.constant 8 : i32
    %157 = arith.muli %c5_i32, %c8_i32_42 : i32
    %158 = tpu.assume_multiple %157, 8 : i32
    %159 = arith.index_cast %158 : i32 to index
    %c0_43 = arith.constant 0 : index
    %160 = vector.load %arg12[%159, %c0_43] : memref<64x512xbf16, #tpu.memory_space<vmem>>, vector<8x512xbf16>
    %161 = arith.extf %160 : vector<8x512xbf16> to vector<8x512xf32>
    %162 = arith.truncf %151 : vector<8x128xf32> to vector<8x128xbf16>
    %cst_44 = arith.constant dense<0.000000e+00> : vector<8x512xf32>
    %163 = tpu.matmul %162, %2, %cst_44 {dimension_numbers = #tpu.dot_dimension_numbers<[1], [0], [0], [1], [0, 0, 1, 1], [], []>} : vector<8x128xbf16>, vector<128x512xbf16>, vector<8x512xf32> -> vector<8x512xf32>
    %164 = arith.addf %161, %163 : vector<8x512xf32>
    %165 = vector.extract_strided_slice %164 {offsets = [0, 0], sizes = [8, 384], strides = [1, 1]} : vector<8x512xf32> to vector<8x384xf32>
    %166 = arith.negf %165 : vector<8x384xf32>
    %167 = math.exp %166 : vector<8x384xf32>
    %cst_45 = arith.constant 1.000000e+00 : f32
    %168 = vector.broadcast %cst_45 : f32 to vector<8x384xf32>
    %169 = arith.addf %168, %167 : vector<8x384xf32>
    %170 = arith.divf %168, %169 : vector<8x384xf32>
    %171 = vector.extract_strided_slice %170 {offsets = [0, 0], sizes = [8, 128], strides = [1, 1]} : vector<8x384xf32> to vector<8x128xf32>
    %172 = vector.extract_strided_slice %170 {offsets = [0, 128], sizes = [8, 128], strides = [1, 1]} : vector<8x384xf32> to vector<8x128xf32>
    %173 = vector.extract_strided_slice %170 {offsets = [0, 256], sizes = [8, 128], strides = [1, 1]} : vector<8x384xf32> to vector<8x128xf32>
    %174 = vector.extract_strided_slice %164 {offsets = [0, 384], sizes = [8, 128], strides = [1, 1]} : vector<8x512xf32> to vector<8x128xf32>
    %175 = math.tanh %174 : vector<8x128xf32>
    %176 = arith.mulf %172, %149 : vector<8x128xf32>
    %177 = arith.mulf %171, %175 : vector<8x128xf32>
    %178 = arith.addf %176, %177 : vector<8x128xf32>
    %179 = math.tanh %178 : vector<8x128xf32>
    %180 = arith.mulf %173, %179 : vector<8x128xf32>
    %c8_i32_46 = arith.constant 8 : i32
    %181 = arith.muli %c5_i32, %c8_i32_46 : i32
    %182 = tpu.assume_multiple %181, 8 : i32
    %183 = arith.truncf %180 : vector<8x128xf32> to vector<8x128xbf16>
    %184 = arith.index_cast %182 : i32 to index
    %c0_47 = arith.constant 0 : index
    %185 = vector.load %arg13[%184, %c0_47] : memref<64x128xbf16, #tpu.memory_space<vmem>>, vector<8x128xbf16>
    tpu.vector_store %arg13[%184, %c0_47], %183 {strides = array<i32>} : memref<64x128xbf16, #tpu.memory_space<vmem>>, vector<8x128xbf16>,
    %c6_i32 = arith.constant 6 : i32
    %c8_i32_48 = arith.constant 8 : i32
    %186 = arith.muli %c6_i32, %c8_i32_48 : i32
    %187 = tpu.assume_multiple %186, 8 : i32
    %188 = arith.index_cast %187 : i32 to index
    %c0_49 = arith.constant 0 : index
    %189 = vector.load %arg12[%188, %c0_49] : memref<64x512xbf16, #tpu.memory_space<vmem>>, vector<8x512xbf16>
    %190 = arith.extf %189 : vector<8x512xbf16> to vector<8x512xf32>
    %191 = arith.truncf %180 : vector<8x128xf32> to vector<8x128xbf16>
    %cst_50 = arith.constant dense<0.000000e+00> : vector<8x512xf32>
    %192 = tpu.matmul %191, %2, %cst_50 {dimension_numbers = #tpu.dot_dimension_numbers<[1], [0], [0], [1], [0, 0, 1, 1], [], []>} : vector<8x128xbf16>, vector<128x512xbf16>, vector<8x512xf32> -> vector<8x512xf32>
    %193 = arith.addf %190, %192 : vector<8x512xf32>
    %194 = vector.extract_strided_slice %193 {offsets = [0, 0], sizes = [8, 384], strides = [1, 1]} : vector<8x512xf32> to vector<8x384xf32>
    %195 = arith.negf %194 : vector<8x384xf32>
    %196 = math.exp %195 : vector<8x384xf32>
    %cst_51 = arith.constant 1.000000e+00 : f32
    %197 = vector.broadcast %cst_51 : f32 to vector<8x384xf32>
    %198 = arith.addf %197, %196 : vector<8x384xf32>
    %199 = arith.divf %197, %198 : vector<8x384xf32>
    %200 = vector.extract_strided_slice %199 {offsets = [0, 0], sizes = [8, 128], strides = [1, 1]} : vector<8x384xf32> to vector<8x128xf32>
    %201 = vector.extract_strided_slice %199 {offsets = [0, 128], sizes = [8, 128], strides = [1, 1]} : vector<8x384xf32> to vector<8x128xf32>
    %202 = vector.extract_strided_slice %199 {offsets = [0, 256], sizes = [8, 128], strides = [1, 1]} : vector<8x384xf32> to vector<8x128xf32>
    %203 = vector.extract_strided_slice %193 {offsets = [0, 384], sizes = [8, 128], strides = [1, 1]} : vector<8x512xf32> to vector<8x128xf32>
    %204 = math.tanh %203 : vector<8x128xf32>
    %205 = arith.mulf %201, %178 : vector<8x128xf32>
    %206 = arith.mulf %200, %204 : vector<8x128xf32>
    %207 = arith.addf %205, %206 : vector<8x128xf32>
    %208 = math.tanh %207 : vector<8x128xf32>
    %209 = arith.mulf %202, %208 : vector<8x128xf32>
    %c8_i32_52 = arith.constant 8 : i32
    %210 = arith.muli %c6_i32, %c8_i32_52 : i32
    %211 = tpu.assume_multiple %210, 8 : i32
    %212 = arith.truncf %209 : vector<8x128xf32> to vector<8x128xbf16>
    %213 = arith.index_cast %211 : i32 to index
    %c0_53 = arith.constant 0 : index
    %214 = vector.load %arg13[%213, %c0_53] : memref<64x128xbf16, #tpu.memory_space<vmem>>, vector<8x128xbf16>
    tpu.vector_store %arg13[%213, %c0_53], %212 {strides = array<i32>} : memref<64x128xbf16, #tpu.memory_space<vmem>>, vector<8x128xbf16>,
    %c7_i32 = arith.constant 7 : i32
    %c8_i32_54 = arith.constant 8 : i32
    %215 = arith.muli %c7_i32, %c8_i32_54 : i32
    %216 = tpu.assume_multiple %215, 8 : i32
    %217 = arith.index_cast %216 : i32 to index
    %c0_55 = arith.constant 0 : index
    %218 = vector.load %arg12[%217, %c0_55] : memref<64x512xbf16, #tpu.memory_space<vmem>>, vector<8x512xbf16>
    %219 = arith.extf %218 : vector<8x512xbf16> to vector<8x512xf32>
    %220 = arith.truncf %209 : vector<8x128xf32> to vector<8x128xbf16>
    %cst_56 = arith.constant dense<0.000000e+00> : vector<8x512xf32>
    %221 = tpu.matmul %220, %2, %cst_56 {dimension_numbers = #tpu.dot_dimension_numbers<[1], [0], [0], [1], [0, 0, 1, 1], [], []>} : vector<8x128xbf16>, vector<128x512xbf16>, vector<8x512xf32> -> vector<8x512xf32>
    %222 = arith.addf %219, %221 : vector<8x512xf32>
    %223 = vector.extract_strided_slice %222 {offsets = [0, 0], sizes = [8, 384], strides = [1, 1]} : vector<8x512xf32> to vector<8x384xf32>
    %224 = arith.negf %223 : vector<8x384xf32>
    %225 = math.exp %224 : vector<8x384xf32>
    %cst_57 = arith.constant 1.000000e+00 : f32
    %226 = vector.broadcast %cst_57 : f32 to vector<8x384xf32>
    %227 = arith.addf %226, %225 : vector<8x384xf32>
    %228 = arith.divf %226, %227 : vector<8x384xf32>
    %229 = vector.extract_strided_slice %228 {offsets = [0, 0], sizes = [8, 128], strides = [1, 1]} : vector<8x384xf32> to vector<8x128xf32>
    %230 = vector.extract_strided_slice %228 {offsets = [0, 128], sizes = [8, 128], strides = [1, 1]} : vector<8x384xf32> to vector<8x128xf32>
    %231 = vector.extract_strided_slice %228 {offsets = [0, 256], sizes = [8, 128], strides = [1, 1]} : vector<8x384xf32> to vector<8x128xf32>
    %232 = vector.extract_strided_slice %222 {offsets = [0, 384], sizes = [8, 128], strides = [1, 1]} : vector<8x512xf32> to vector<8x128xf32>
    %233 = math.tanh %232 : vector<8x128xf32>
    %234 = arith.mulf %230, %207 : vector<8x128xf32>
    %235 = arith.mulf %229, %233 : vector<8x128xf32>
    %236 = arith.addf %234, %235 : vector<8x128xf32>
    %237 = math.tanh %236 : vector<8x128xf32>
    %238 = arith.mulf %231, %237 : vector<8x128xf32>
    %c8_i32_58 = arith.constant 8 : i32
    %239 = arith.muli %c7_i32, %c8_i32_58 : i32
    %240 = tpu.assume_multiple %239, 8 : i32
    %241 = arith.truncf %238 : vector<8x128xf32> to vector<8x128xbf16>
    %242 = arith.index_cast %240 : i32 to index
    %c0_59 = arith.constant 0 : index
    %243 = vector.load %arg13[%242, %c0_59] : memref<64x128xbf16, #tpu.memory_space<vmem>>, vector<8x128xbf16>
    tpu.vector_store %arg13[%242, %c0_59], %241 {strides = array<i32>} : memref<64x128xbf16, #tpu.memory_space<vmem>>, vector<8x128xbf16>,
    %c8_i32_60 = arith.constant 8 : i32
    %c0_61 = arith.constant 0 : index
    %c0_62 = arith.constant 0 : index
    %244 = vector.load %arg6[%c0_61, %c0_62] : memref<128x512xbf16, #tpu.memory_space<vmem>>, vector<128x512xbf16>
    %c0_63 = arith.constant 0 : index
    %c0_64 = arith.constant 0 : index
    %245 = vector.load %arg7[%c0_63, %c0_64] : memref<128x512xbf16, #tpu.memory_space<vmem>>, vector<128x512xbf16>
    %c0_65 = arith.constant 0 : index
    %c0_66 = arith.constant 0 : index
    %246 = vector.load %arg8[%c0_65, %c0_66] : memref<1x512xf32, #tpu.memory_space<vmem>>, vector<1x512xf32>
    %c0_67 = arith.constant 0 : index
    %c0_68 = arith.constant 0 : index
    %247 = vector.load %arg13[%c0_67, %c0_68] : memref<64x128xbf16, #tpu.memory_space<vmem>>, vector<64x128xbf16>
    %cst_69 = arith.constant dense<0.000000e+00> : vector<64x512xf32>
    %248 = tpu.matmul %247, %244, %cst_69 {dimension_numbers = #tpu.dot_dimension_numbers<[1], [0], [0], [1], [0, 0, 1, 1], [], []>} : vector<64x128xbf16>, vector<128x512xbf16>, vector<64x512xf32> -> vector<64x512xf32>
    %249 = vector.broadcast %246 : vector<1x512xf32> to vector<64x512xf32>
    %250 = arith.addf %248, %249 : vector<64x512xf32>
    %251 = arith.truncf %250 : vector<64x512xf32> to vector<64x512xbf16>
    %c0_70 = arith.constant 0 : index
    %c0_71 = arith.constant 0 : index
    %252 = vector.load %arg12[%c0_70, %c0_71] : memref<64x512xbf16, #tpu.memory_space<vmem>>, vector<64x512xbf16>
    tpu.vector_store %arg12[%c0_70, %c0_71], %251 {strides = array<i32>} : memref<64x512xbf16, #tpu.memory_space<vmem>>, vector<64x512xbf16>,
    %cst_72 = arith.constant 0.000000e+00 : f32
    %253 = vector.broadcast %cst_72 : f32 to vector<8x128xf32>
    %c0_i32_73 = arith.constant 0 : i32
    %c8_i32_74 = arith.constant 8 : i32
    %254 = arith.muli %c0_i32_73, %c8_i32_74 : i32
    %255 = tpu.assume_multiple %254, 8 : i32
    %256 = arith.index_cast %255 : i32 to index
    %c0_75 = arith.constant 0 : index
    %257 = vector.load %arg12[%256, %c0_75] : memref<64x512xbf16, #tpu.memory_space<vmem>>, vector<8x512xbf16>
    %258 = arith.extf %257 : vector<8x512xbf16> to vector<8x512xf32>
    %259 = arith.truncf %253 : vector<8x128xf32> to vector<8x128xbf16>
    %cst_76 = arith.constant dense<0.000000e+00> : vector<8x512xf32>
    %260 = tpu.matmul %259, %245, %cst_76 {dimension_numbers = #tpu.dot_dimension_numbers<[1], [0], [0], [1], [0, 0, 1, 1], [], []>} : vector<8x128xbf16>, vector<128x512xbf16>, vector<8x512xf32> -> vector<8x512xf32>
    %261 = arith.addf %258, %260 : vector<8x512xf32>
    %262 = vector.extract_strided_slice %261 {offsets = [0, 0], sizes = [8, 384], strides = [1, 1]} : vector<8x512xf32> to vector<8x384xf32>
    %263 = arith.negf %262 : vector<8x384xf32>
    %264 = math.exp %263 : vector<8x384xf32>
    %cst_77 = arith.constant 1.000000e+00 : f32
    %265 = vector.broadcast %cst_77 : f32 to vector<8x384xf32>
    %266 = arith.addf %265, %264 : vector<8x384xf32>
    %267 = arith.divf %265, %266 : vector<8x384xf32>
    %268 = vector.extract_strided_slice %267 {offsets = [0, 0], sizes = [8, 128], strides = [1, 1]} : vector<8x384xf32> to vector<8x128xf32>
    %269 = vector.extract_strided_slice %267 {offsets = [0, 128], sizes = [8, 128], strides = [1, 1]} : vector<8x384xf32> to vector<8x128xf32>
    %270 = vector.extract_strided_slice %267 {offsets = [0, 256], sizes = [8, 128], strides = [1, 1]} : vector<8x384xf32> to vector<8x128xf32>
    %271 = vector.extract_strided_slice %261 {offsets = [0, 384], sizes = [8, 128], strides = [1, 1]} : vector<8x512xf32> to vector<8x128xf32>
    %272 = math.tanh %271 : vector<8x128xf32>
    %273 = arith.mulf %269, %253 : vector<8x128xf32>
    %274 = arith.mulf %268, %272 : vector<8x128xf32>
    %275 = arith.addf %273, %274 : vector<8x128xf32>
    %276 = math.tanh %275 : vector<8x128xf32>
    %277 = arith.mulf %270, %276 : vector<8x128xf32>
    %278 = vector.broadcast %c0_i32_73 : i32 to vector<8x1xi32>
    %279 = arith.cmpi eq, %0, %278 : vector<8x1xi32>
    %280 = vector.shape_cast %279 : vector<8x1xi1> to vector<8x1xi1>
    %281 = vector.broadcast %280 : vector<8x1xi1> to vector<8x128xi1>
    %282 = arith.select %281, %277, %253 : vector<8x128xi1>, vector<8x128xf32>
    %c1_i32_78 = arith.constant 1 : i32
    %c8_i32_79 = arith.constant 8 : i32
    %283 = arith.muli %c1_i32_78, %c8_i32_79 : i32
    %284 = tpu.assume_multiple %283, 8 : i32
    %285 = arith.index_cast %284 : i32 to index
    %c0_80 = arith.constant 0 : index
    %286 = vector.load %arg12[%285, %c0_80] : memref<64x512xbf16, #tpu.memory_space<vmem>>, vector<8x512xbf16>
    %287 = arith.extf %286 : vector<8x512xbf16> to vector<8x512xf32>
    %288 = arith.truncf %277 : vector<8x128xf32> to vector<8x128xbf16>
    %cst_81 = arith.constant dense<0.000000e+00> : vector<8x512xf32>
    %289 = tpu.matmul %288, %245, %cst_81 {dimension_numbers = #tpu.dot_dimension_numbers<[1], [0], [0], [1], [0, 0, 1, 1], [], []>} : vector<8x128xbf16>, vector<128x512xbf16>, vector<8x512xf32> -> vector<8x512xf32>
    %290 = arith.addf %287, %289 : vector<8x512xf32>
    %291 = vector.extract_strided_slice %290 {offsets = [0, 0], sizes = [8, 384], strides = [1, 1]} : vector<8x512xf32> to vector<8x384xf32>
    %292 = arith.negf %291 : vector<8x384xf32>
    %293 = math.exp %292 : vector<8x384xf32>
    %cst_82 = arith.constant 1.000000e+00 : f32
    %294 = vector.broadcast %cst_82 : f32 to vector<8x384xf32>
    %295 = arith.addf %294, %293 : vector<8x384xf32>
    %296 = arith.divf %294, %295 : vector<8x384xf32>
    %297 = vector.extract_strided_slice %296 {offsets = [0, 0], sizes = [8, 128], strides = [1, 1]} : vector<8x384xf32> to vector<8x128xf32>
    %298 = vector.extract_strided_slice %296 {offsets = [0, 128], sizes = [8, 128], strides = [1, 1]} : vector<8x384xf32> to vector<8x128xf32>
    %299 = vector.extract_strided_slice %296 {offsets = [0, 256], sizes = [8, 128], strides = [1, 1]} : vector<8x384xf32> to vector<8x128xf32>
    %300 = vector.extract_strided_slice %290 {offsets = [0, 384], sizes = [8, 128], strides = [1, 1]} : vector<8x512xf32> to vector<8x128xf32>
    %301 = math.tanh %300 : vector<8x128xf32>
    %302 = arith.mulf %298, %275 : vector<8x128xf32>
    %303 = arith.mulf %297, %301 : vector<8x128xf32>
    %304 = arith.addf %302, %303 : vector<8x128xf32>
    %305 = math.tanh %304 : vector<8x128xf32>
    %306 = arith.mulf %299, %305 : vector<8x128xf32>
    %307 = vector.broadcast %c1_i32_78 : i32 to vector<8x1xi32>
    %308 = arith.cmpi eq, %0, %307 : vector<8x1xi32>
    %309 = vector.shape_cast %308 : vector<8x1xi1> to vector<8x1xi1>
    %310 = vector.broadcast %309 : vector<8x1xi1> to vector<8x128xi1>
    %311 = arith.select %310, %306, %282 : vector<8x128xi1>, vector<8x128xf32>
    %c2_i32_83 = arith.constant 2 : i32
    %c8_i32_84 = arith.constant 8 : i32
    %312 = arith.muli %c2_i32_83, %c8_i32_84 : i32
    %313 = tpu.assume_multiple %312, 8 : i32
    %314 = arith.index_cast %313 : i32 to index
    %c0_85 = arith.constant 0 : index
    %315 = vector.load %arg12[%314, %c0_85] : memref<64x512xbf16, #tpu.memory_space<vmem>>, vector<8x512xbf16>
    %316 = arith.extf %315 : vector<8x512xbf16> to vector<8x512xf32>
    %317 = arith.truncf %306 : vector<8x128xf32> to vector<8x128xbf16>
    %cst_86 = arith.constant dense<0.000000e+00> : vector<8x512xf32>
    %318 = tpu.matmul %317, %245, %cst_86 {dimension_numbers = #tpu.dot_dimension_numbers<[1], [0], [0], [1], [0, 0, 1, 1], [], []>} : vector<8x128xbf16>, vector<128x512xbf16>, vector<8x512xf32> -> vector<8x512xf32>
    %319 = arith.addf %316, %318 : vector<8x512xf32>
    %320 = vector.extract_strided_slice %319 {offsets = [0, 0], sizes = [8, 384], strides = [1, 1]} : vector<8x512xf32> to vector<8x384xf32>
    %321 = arith.negf %320 : vector<8x384xf32>
    %322 = math.exp %321 : vector<8x384xf32>
    %cst_87 = arith.constant 1.000000e+00 : f32
    %323 = vector.broadcast %cst_87 : f32 to vector<8x384xf32>
    %324 = arith.addf %323, %322 : vector<8x384xf32>
    %325 = arith.divf %323, %324 : vector<8x384xf32>
    %326 = vector.extract_strided_slice %325 {offsets = [0, 0], sizes = [8, 128], strides = [1, 1]} : vector<8x384xf32> to vector<8x128xf32>
    %327 = vector.extract_strided_slice %325 {offsets = [0, 128], sizes = [8, 128], strides = [1, 1]} : vector<8x384xf32> to vector<8x128xf32>
    %328 = vector.extract_strided_slice %325 {offsets = [0, 256], sizes = [8, 128], strides = [1, 1]} : vector<8x384xf32> to vector<8x128xf32>
    %329 = vector.extract_strided_slice %319 {offsets = [0, 384], sizes = [8, 128], strides = [1, 1]} : vector<8x512xf32> to vector<8x128xf32>
    %330 = math.tanh %329 : vector<8x128xf32>
    %331 = arith.mulf %327, %304 : vector<8x128xf32>
    %332 = arith.mulf %326, %330 : vector<8x128xf32>
    %333 = arith.addf %331, %332 : vector<8x128xf32>
    %334 = math.tanh %333 : vector<8x128xf32>
    %335 = arith.mulf %328, %334 : vector<8x128xf32>
    %336 = vector.broadcast %c2_i32_83 : i32 to vector<8x1xi32>
    %337 = arith.cmpi eq, %0, %336 : vector<8x1xi32>
    %338 = vector.shape_cast %337 : vector<8x1xi1> to vector<8x1xi1>
    %339 = vector.broadcast %338 : vector<8x1xi1> to vector<8x128xi1>
    %340 = arith.select %339, %335, %311 : vector<8x128xi1>, vector<8x128xf32>
    %c3_i32_88 = arith.constant 3 : i32
    %c8_i32_89 = arith.constant 8 : i32
    %341 = arith.muli %c3_i32_88, %c8_i32_89 : i32
    %342 = tpu.assume_multiple %341, 8 : i32
    %343 = arith.index_cast %342 : i32 to index
    %c0_90 = arith.constant 0 : index
    %344 = vector.load %arg12[%343, %c0_90] : memref<64x512xbf16, #tpu.memory_space<vmem>>, vector<8x512xbf16>
    %345 = arith.extf %344 : vector<8x512xbf16> to vector<8x512xf32>
    %346 = arith.truncf %335 : vector<8x128xf32> to vector<8x128xbf16>
    %cst_91 = arith.constant dense<0.000000e+00> : vector<8x512xf32>
    %347 = tpu.matmul %346, %245, %cst_91 {dimension_numbers = #tpu.dot_dimension_numbers<[1], [0], [0], [1], [0, 0, 1, 1], [], []>} : vector<8x128xbf16>, vector<128x512xbf16>, vector<8x512xf32> -> vector<8x512xf32>
    %348 = arith.addf %345, %347 : vector<8x512xf32>
    %349 = vector.extract_strided_slice %348 {offsets = [0, 0], sizes = [8, 384], strides = [1, 1]} : vector<8x512xf32> to vector<8x384xf32>
    %350 = arith.negf %349 : vector<8x384xf32>
    %351 = math.exp %350 : vector<8x384xf32>
    %cst_92 = arith.constant 1.000000e+00 : f32
    %352 = vector.broadcast %cst_92 : f32 to vector<8x384xf32>
    %353 = arith.addf %352, %351 : vector<8x384xf32>
    %354 = arith.divf %352, %353 : vector<8x384xf32>
    %355 = vector.extract_strided_slice %354 {offsets = [0, 0], sizes = [8, 128], strides = [1, 1]} : vector<8x384xf32> to vector<8x128xf32>
    %356 = vector.extract_strided_slice %354 {offsets = [0, 128], sizes = [8, 128], strides = [1, 1]} : vector<8x384xf32> to vector<8x128xf32>
    %357 = vector.extract_strided_slice %354 {offsets = [0, 256], sizes = [8, 128], strides = [1, 1]} : vector<8x384xf32> to vector<8x128xf32>
    %358 = vector.extract_strided_slice %348 {offsets = [0, 384], sizes = [8, 128], strides = [1, 1]} : vector<8x512xf32> to vector<8x128xf32>
    %359 = math.tanh %358 : vector<8x128xf32>
    %360 = arith.mulf %356, %333 : vector<8x128xf32>
    %361 = arith.mulf %355, %359 : vector<8x128xf32>
    %362 = arith.addf %360, %361 : vector<8x128xf32>
    %363 = math.tanh %362 : vector<8x128xf32>
    %364 = arith.mulf %357, %363 : vector<8x128xf32>
    %365 = vector.broadcast %c3_i32_88 : i32 to vector<8x1xi32>
    %366 = arith.cmpi eq, %0, %365 : vector<8x1xi32>
    %367 = vector.shape_cast %366 : vector<8x1xi1> to vector<8x1xi1>
    %368 = vector.broadcast %367 : vector<8x1xi1> to vector<8x128xi1>
    %369 = arith.select %368, %364, %340 : vector<8x128xi1>, vector<8x128xf32>
    %c4_i32_93 = arith.constant 4 : i32
    %c8_i32_94 = arith.constant 8 : i32
    %370 = arith.muli %c4_i32_93, %c8_i32_94 : i32
    %371 = tpu.assume_multiple %370, 8 : i32
    %372 = arith.index_cast %371 : i32 to index
    %c0_95 = arith.constant 0 : index
    %373 = vector.load %arg12[%372, %c0_95] : memref<64x512xbf16, #tpu.memory_space<vmem>>, vector<8x512xbf16>
    %374 = arith.extf %373 : vector<8x512xbf16> to vector<8x512xf32>
    %375 = arith.truncf %364 : vector<8x128xf32> to vector<8x128xbf16>
    %cst_96 = arith.constant dense<0.000000e+00> : vector<8x512xf32>
    %376 = tpu.matmul %375, %245, %cst_96 {dimension_numbers = #tpu.dot_dimension_numbers<[1], [0], [0], [1], [0, 0, 1, 1], [], []>} : vector<8x128xbf16>, vector<128x512xbf16>, vector<8x512xf32> -> vector<8x512xf32>
    %377 = arith.addf %374, %376 : vector<8x512xf32>
    %378 = vector.extract_strided_slice %377 {offsets = [0, 0], sizes = [8, 384], strides = [1, 1]} : vector<8x512xf32> to vector<8x384xf32>
    %379 = arith.negf %378 : vector<8x384xf32>
    %380 = math.exp %379 : vector<8x384xf32>
    %cst_97 = arith.constant 1.000000e+00 : f32
    %381 = vector.broadcast %cst_97 : f32 to vector<8x384xf32>
    %382 = arith.addf %381, %380 : vector<8x384xf32>
    %383 = arith.divf %381, %382 : vector<8x384xf32>
    %384 = vector.extract_strided_slice %383 {offsets = [0, 0], sizes = [8, 128], strides = [1, 1]} : vector<8x384xf32> to vector<8x128xf32>
    %385 = vector.extract_strided_slice %383 {offsets = [0, 128], sizes = [8, 128], strides = [1, 1]} : vector<8x384xf32> to vector<8x128xf32>
    %386 = vector.extract_strided_slice %383 {offsets = [0, 256], sizes = [8, 128], strides = [1, 1]} : vector<8x384xf32> to vector<8x128xf32>
    %387 = vector.extract_strided_slice %377 {offsets = [0, 384], sizes = [8, 128], strides = [1, 1]} : vector<8x512xf32> to vector<8x128xf32>
    %388 = math.tanh %387 : vector<8x128xf32>
    %389 = arith.mulf %385, %362 : vector<8x128xf32>
    %390 = arith.mulf %384, %388 : vector<8x128xf32>
    %391 = arith.addf %389, %390 : vector<8x128xf32>
    %392 = math.tanh %391 : vector<8x128xf32>
    %393 = arith.mulf %386, %392 : vector<8x128xf32>
    %394 = vector.broadcast %c4_i32_93 : i32 to vector<8x1xi32>
    %395 = arith.cmpi eq, %0, %394 : vector<8x1xi32>
    %396 = vector.shape_cast %395 : vector<8x1xi1> to vector<8x1xi1>
    %397 = vector.broadcast %396 : vector<8x1xi1> to vector<8x128xi1>
    %398 = arith.select %397, %393, %369 : vector<8x128xi1>, vector<8x128xf32>
    %c5_i32_98 = arith.constant 5 : i32
    %c8_i32_99 = arith.constant 8 : i32
    %399 = arith.muli %c5_i32_98, %c8_i32_99 : i32
    %400 = tpu.assume_multiple %399, 8 : i32
    %401 = arith.index_cast %400 : i32 to index
    %c0_100 = arith.constant 0 : index
    %402 = vector.load %arg12[%401, %c0_100] : memref<64x512xbf16, #tpu.memory_space<vmem>>, vector<8x512xbf16>
    %403 = arith.extf %402 : vector<8x512xbf16> to vector<8x512xf32>
    %404 = arith.truncf %393 : vector<8x128xf32> to vector<8x128xbf16>
    %cst_101 = arith.constant dense<0.000000e+00> : vector<8x512xf32>
    %405 = tpu.matmul %404, %245, %cst_101 {dimension_numbers = #tpu.dot_dimension_numbers<[1], [0], [0], [1], [0, 0, 1, 1], [], []>} : vector<8x128xbf16>, vector<128x512xbf16>, vector<8x512xf32> -> vector<8x512xf32>
    %406 = arith.addf %403, %405 : vector<8x512xf32>
    %407 = vector.extract_strided_slice %406 {offsets = [0, 0], sizes = [8, 384], strides = [1, 1]} : vector<8x512xf32> to vector<8x384xf32>
    %408 = arith.negf %407 : vector<8x384xf32>
    %409 = math.exp %408 : vector<8x384xf32>
    %cst_102 = arith.constant 1.000000e+00 : f32
    %410 = vector.broadcast %cst_102 : f32 to vector<8x384xf32>
    %411 = arith.addf %410, %409 : vector<8x384xf32>
    %412 = arith.divf %410, %411 : vector<8x384xf32>
    %413 = vector.extract_strided_slice %412 {offsets = [0, 0], sizes = [8, 128], strides = [1, 1]} : vector<8x384xf32> to vector<8x128xf32>
    %414 = vector.extract_strided_slice %412 {offsets = [0, 128], sizes = [8, 128], strides = [1, 1]} : vector<8x384xf32> to vector<8x128xf32>
    %415 = vector.extract_strided_slice %412 {offsets = [0, 256], sizes = [8, 128], strides = [1, 1]} : vector<8x384xf32> to vector<8x128xf32>
    %416 = vector.extract_strided_slice %406 {offsets = [0, 384], sizes = [8, 128], strides = [1, 1]} : vector<8x512xf32> to vector<8x128xf32>
    %417 = math.tanh %416 : vector<8x128xf32>
    %418 = arith.mulf %414, %391 : vector<8x128xf32>
    %419 = arith.mulf %413, %417 : vector<8x128xf32>
    %420 = arith.addf %418, %419 : vector<8x128xf32>
    %421 = math.tanh %420 : vector<8x128xf32>
    %422 = arith.mulf %415, %421 : vector<8x128xf32>
    %423 = vector.broadcast %c5_i32_98 : i32 to vector<8x1xi32>
    %424 = arith.cmpi eq, %0, %423 : vector<8x1xi32>
    %425 = vector.shape_cast %424 : vector<8x1xi1> to vector<8x1xi1>
    %426 = vector.broadcast %425 : vector<8x1xi1> to vector<8x128xi1>
    %427 = arith.select %426, %422, %398 : vector<8x128xi1>, vector<8x128xf32>
    %c6_i32_103 = arith.constant 6 : i32
    %c8_i32_104 = arith.constant 8 : i32
    %428 = arith.muli %c6_i32_103, %c8_i32_104 : i32
    %429 = tpu.assume_multiple %428, 8 : i32
    %430 = arith.index_cast %429 : i32 to index
    %c0_105 = arith.constant 0 : index
    %431 = vector.load %arg12[%430, %c0_105] : memref<64x512xbf16, #tpu.memory_space<vmem>>, vector<8x512xbf16>
    %432 = arith.extf %431 : vector<8x512xbf16> to vector<8x512xf32>
    %433 = arith.truncf %422 : vector<8x128xf32> to vector<8x128xbf16>
    %cst_106 = arith.constant dense<0.000000e+00> : vector<8x512xf32>
    %434 = tpu.matmul %433, %245, %cst_106 {dimension_numbers = #tpu.dot_dimension_numbers<[1], [0], [0], [1], [0, 0, 1, 1], [], []>} : vector<8x128xbf16>, vector<128x512xbf16>, vector<8x512xf32> -> vector<8x512xf32>
    %435 = arith.addf %432, %434 : vector<8x512xf32>
    %436 = vector.extract_strided_slice %435 {offsets = [0, 0], sizes = [8, 384], strides = [1, 1]} : vector<8x512xf32> to vector<8x384xf32>
    %437 = arith.negf %436 : vector<8x384xf32>
    %438 = math.exp %437 : vector<8x384xf32>
    %cst_107 = arith.constant 1.000000e+00 : f32
    %439 = vector.broadcast %cst_107 : f32 to vector<8x384xf32>
    %440 = arith.addf %439, %438 : vector<8x384xf32>
    %441 = arith.divf %439, %440 : vector<8x384xf32>
    %442 = vector.extract_strided_slice %441 {offsets = [0, 0], sizes = [8, 128], strides = [1, 1]} : vector<8x384xf32> to vector<8x128xf32>
    %443 = vector.extract_strided_slice %441 {offsets = [0, 128], sizes = [8, 128], strides = [1, 1]} : vector<8x384xf32> to vector<8x128xf32>
    %444 = vector.extract_strided_slice %441 {offsets = [0, 256], sizes = [8, 128], strides = [1, 1]} : vector<8x384xf32> to vector<8x128xf32>
    %445 = vector.extract_strided_slice %435 {offsets = [0, 384], sizes = [8, 128], strides = [1, 1]} : vector<8x512xf32> to vector<8x128xf32>
    %446 = math.tanh %445 : vector<8x128xf32>
    %447 = arith.mulf %443, %420 : vector<8x128xf32>
    %448 = arith.mulf %442, %446 : vector<8x128xf32>
    %449 = arith.addf %447, %448 : vector<8x128xf32>
    %450 = math.tanh %449 : vector<8x128xf32>
    %451 = arith.mulf %444, %450 : vector<8x128xf32>
    %452 = vector.broadcast %c6_i32_103 : i32 to vector<8x1xi32>
    %453 = arith.cmpi eq, %0, %452 : vector<8x1xi32>
    %454 = vector.shape_cast %453 : vector<8x1xi1> to vector<8x1xi1>
    %455 = vector.broadcast %454 : vector<8x1xi1> to vector<8x128xi1>
    %456 = arith.select %455, %451, %427 : vector<8x128xi1>, vector<8x128xf32>
    %c7_i32_108 = arith.constant 7 : i32
    %c8_i32_109 = arith.constant 8 : i32
    %457 = arith.muli %c7_i32_108, %c8_i32_109 : i32
    %458 = tpu.assume_multiple %457, 8 : i32
    %459 = arith.index_cast %458 : i32 to index
    %c0_110 = arith.constant 0 : index
    %460 = vector.load %arg12[%459, %c0_110] : memref<64x512xbf16, #tpu.memory_space<vmem>>, vector<8x512xbf16>
    %461 = arith.extf %460 : vector<8x512xbf16> to vector<8x512xf32>
    %462 = arith.truncf %451 : vector<8x128xf32> to vector<8x128xbf16>
    %cst_111 = arith.constant dense<0.000000e+00> : vector<8x512xf32>
    %463 = tpu.matmul %462, %245, %cst_111 {dimension_numbers = #tpu.dot_dimension_numbers<[1], [0], [0], [1], [0, 0, 1, 1], [], []>} : vector<8x128xbf16>, vector<128x512xbf16>, vector<8x512xf32> -> vector<8x512xf32>
    %464 = arith.addf %461, %463 : vector<8x512xf32>
    %465 = vector.extract_strided_slice %464 {offsets = [0, 0], sizes = [8, 384], strides = [1, 1]} : vector<8x512xf32> to vector<8x384xf32>
    %466 = arith.negf %465 : vector<8x384xf32>
    %467 = math.exp %466 : vector<8x384xf32>
    %cst_112 = arith.constant 1.000000e+00 : f32
    %468 = vector.broadcast %cst_112 : f32 to vector<8x384xf32>
    %469 = arith.addf %468, %467 : vector<8x384xf32>
    %470 = arith.divf %468, %469 : vector<8x384xf32>
    %471 = vector.extract_strided_slice %470 {offsets = [0, 0], sizes = [8, 128], strides = [1, 1]} : vector<8x384xf32> to vector<8x128xf32>
    %472 = vector.extract_strided_slice %470 {offsets = [0, 128], sizes = [8, 128], strides = [1, 1]} : vector<8x384xf32> to vector<8x128xf32>
    %473 = vector.extract_strided_slice %470 {offsets = [0, 256], sizes = [8, 128], strides = [1, 1]} : vector<8x384xf32> to vector<8x128xf32>
    %474 = vector.extract_strided_slice %464 {offsets = [0, 384], sizes = [8, 128], strides = [1, 1]} : vector<8x512xf32> to vector<8x128xf32>
    %475 = math.tanh %474 : vector<8x128xf32>
    %476 = arith.mulf %472, %449 : vector<8x128xf32>
    %477 = arith.mulf %471, %475 : vector<8x128xf32>
    %478 = arith.addf %476, %477 : vector<8x128xf32>
    %479 = math.tanh %478 : vector<8x128xf32>
    %480 = arith.mulf %473, %479 : vector<8x128xf32>
    %481 = vector.broadcast %c7_i32_108 : i32 to vector<8x1xi32>
    %482 = arith.cmpi eq, %0, %481 : vector<8x1xi32>
    %483 = vector.shape_cast %482 : vector<8x1xi1> to vector<8x1xi1>
    %484 = vector.broadcast %483 : vector<8x1xi1> to vector<8x128xi1>
    %485 = arith.select %484, %480, %456 : vector<8x128xi1>, vector<8x128xf32>
    %c8_i32_113 = arith.constant 8 : i32
    %486 = math.tanh %485 : vector<8x128xf32>
    %487 = arith.truncf %486 : vector<8x128xf32> to vector<8x128xbf16>
    %c0_114 = arith.constant 0 : index
    %c0_115 = arith.constant 0 : index
    %488 = vector.load %arg9[%c0_114, %c0_115] : memref<128x16xbf16, #tpu.memory_space<vmem>>, vector<128x16xbf16>
    %cst_116 = arith.constant dense<0.000000e+00> : vector<8x16xf32>
    %489 = tpu.matmul %487, %488, %cst_116 {dimension_numbers = #tpu.dot_dimension_numbers<[1], [0], [0], [1], [0, 0, 1, 1], [], []>} : vector<8x128xbf16>, vector<128x16xbf16>, vector<8x16xf32> -> vector<8x16xf32>
    %c0_117 = arith.constant 0 : index
    %c0_118 = arith.constant 0 : index
    %490 = vector.load %arg10[%c0_117, %c0_118] : memref<1x16xf32, #tpu.memory_space<vmem>>, vector<1x16xf32>
    %491 = vector.broadcast %490 : vector<1x16xf32> to vector<8x16xf32>
    %492 = arith.addf %489, %491 : vector<8x16xf32>
    %c0_119 = arith.constant 0 : index
    %c0_120 = arith.constant 0 : index
    %493 = vector.load %arg11[%c0_119, %c0_120] : memref<8x16xf32, #tpu.memory_space<vmem>>, vector<8x16xf32>
    tpu.vector_store %arg11[%c0_119, %c0_120], %492 {strides = array<i32>} : memref<8x16xf32, #tpu.memory_space<vmem>>, vector<8x16xf32>,
    return
  }
  func.func @transform_0(%arg0: i32) -> (i32, i32) {
    %c0_i32 = arith.constant 0 : i32
    %c0_i32_0 = arith.constant 0 : i32
    return %arg0, %c0_i32 : i32, i32
  }
  func.func @transform_1(%arg0: i32) -> (i32, i32, i32) {
    %c0_i32 = arith.constant 0 : i32
    %c0_i32_0 = arith.constant 0 : i32
    %c0_i32_1 = arith.constant 0 : i32
    return %c0_i32, %arg0, %c0_i32_0 : i32, i32, i32
  }
  func.func @transform_2(%arg0: i32) -> (i32, i32) {
    %c0_i32 = arith.constant 0 : i32
    %c0_i32_0 = arith.constant 0 : i32
    %c0_i32_1 = arith.constant 0 : i32
    return %c0_i32, %c0_i32_0 : i32, i32
  }
  func.func @transform_3(%arg0: i32) -> (i32, i32) {
    %c0_i32 = arith.constant 0 : i32
    %c0_i32_0 = arith.constant 0 : i32
    %c0_i32_1 = arith.constant 0 : i32
    return %c0_i32, %c0_i32_0 : i32, i32
  }
  func.func @transform_4(%arg0: i32) -> (i32, i32) {
    %c0_i32 = arith.constant 0 : i32
    %c0_i32_0 = arith.constant 0 : i32
    %c0_i32_1 = arith.constant 0 : i32
    return %c0_i32, %c0_i32_0 : i32, i32
  }
  func.func @transform_5(%arg0: i32) -> (i32, i32) {
    %c0_i32 = arith.constant 0 : i32
    %c0_i32_0 = arith.constant 0 : i32
    %c0_i32_1 = arith.constant 0 : i32
    return %c0_i32, %c0_i32_0 : i32, i32
  }
  func.func @transform_6(%arg0: i32) -> (i32, i32) {
    %c0_i32 = arith.constant 0 : i32
    %c0_i32_0 = arith.constant 0 : i32
    %c0_i32_1 = arith.constant 0 : i32
    return %c0_i32, %c0_i32_0 : i32, i32
  }
  func.func @transform_7(%arg0: i32) -> (i32, i32) {
    %c0_i32 = arith.constant 0 : i32
    %c0_i32_0 = arith.constant 0 : i32
    %c0_i32_1 = arith.constant 0 : i32
    return %c0_i32, %c0_i32_0 : i32, i32
  }
  func.func @transform_8(%arg0: i32) -> (i32, i32) {
    %c0_i32 = arith.constant 0 : i32
    %c0_i32_0 = arith.constant 0 : i32
    %c0_i32_1 = arith.constant 0 : i32
    return %c0_i32, %c0_i32_0 : i32, i32
  }
  func.func @transform_9(%arg0: i32) -> (i32, i32) {
    %c0_i32 = arith.constant 0 : i32
    %c0_i32_0 = arith.constant 0 : i32
    %c0_i32_1 = arith.constant 0 : i32
    return %c0_i32, %c0_i32_0 : i32, i32
  }
  func.func @transform_10(%arg0: i32) -> (i32, i32) {
    %c0_i32 = arith.constant 0 : i32
    %c0_i32_0 = arith.constant 0 : i32
    return %arg0, %c0_i32 : i32, i32
  }
}

</mosaic_0001>

<llo_original>
// kernel: tpu_custom_call.1
$region0: #{tpu_custom_call.1}
  #allocation0 [shape = 'u32[]', space=smem, size = 0x4, offset = 0x4, fixed_abs, tag = 'smem constant byte address 0x4 - core index']
  #allocation1 [shape = 'u32[144,128]{1,0:T(1,128)}', space=vmem, size = 0x12000, scoped, tag = 'internal scratch']
  #allocation2 [shape = 'bf16[64,512]{1,0:T(8,128)(2,1)}', space=vmem, size = 0x10000, scoped, tag = 'scratch operand']
  #allocation3 [shape = 'bf16[64,128]{1,0:T(8,128)(2,1)}', space=vmem, size = 0x4000, scoped, tag = 'scratch operand']
  %s0 = inlined_call_operand.vmem [shape: s32[8,1], index: 0, kind: input, shape index: {}]
  %s1 = inlined_call_operand.vmem [shape: bf16[8,8,16], index: 1, kind: input, shape index: {}]
  %s2 = inlined_call_operand.vmem [shape: bf16[16,512], index: 2, kind: input, shape index: {}]
  %s3 = inlined_call_operand.hbm [shape: bf16[128,512], index: 3, kind: input, shape index: {}]
  %s4 = inlined_call_operand.vmem [shape: f32[1,512], index: 4, kind: input, shape index: {}]
  %s5 = inlined_call_operand.hbm [shape: bf16[128,512], index: 5, kind: input, shape index: {}]
  %s6 = inlined_call_operand.hbm [shape: bf16[128,512], index: 6, kind: input, shape index: {}]
  %s7 = inlined_call_operand.vmem [shape: f32[1,512], index: 7, kind: input, shape index: {}]
  %s8 = inlined_call_operand.vmem [shape: bf16[128,16], index: 8, kind: input, shape index: {}]
  %s9 = inlined_call_operand.vmem [shape: f32[1,16], index: 9, kind: input, shape index: {}]
  %s10 = inlined_call_operand.hbm [shape: f32[8,16], index: 10, kind: output, shape index: {}]
  %s11 = sld [smem:[#allocation0]]
  $region62: #{tpu_custom_call.1} parent=0
    _
  %s13 = ssub.s32 1, %s11
  %s14 = scalar_select 0, %s13, %s11
  $region1: #{tpu_custom_call.1} parent=0
    #allocation4 [shape = 'u8[131072]{0}', space=vmem, size = 0x20000, scoped, tag = 'input window, operand 3, single buffered']
    #allocation5 [shape = 's32[1]{0}', space=sflag, size = 0x4, scoped, tag = 'scoped memory for tpu_custom_call.1']
    #allocation6 [shape = 's32[1]{0}', space=sflag, size = 0x4, scoped, tag = 'scoped memory for tpu_custom_call.1']
    #allocation7 [shape = 'u8[131072]{0}', space=vmem, size = 0x20000, scoped, tag = 'input window, operand 5, single buffered']
    #allocation8 [shape = 's32[1]{0}', space=sflag, size = 0x4, scoped, tag = 'scoped memory for tpu_custom_call.1']
    #allocation9 [shape = 'u8[131072]{0}', space=vmem, size = 0x20000, scoped, tag = 'input window, operand 6, single buffered']
    #allocation10 [shape = 'u8[4096]{0}', space=vmem, size = 0x1000, scoped, tag = 'output window, operand 0, single buffered']
    %15 = vsyncpa [#allocation5], 0
    %16 = vsyncpa [#allocation8], 0
    %17 = vsyncpa [#allocation6], 0
    // Predicated region
    $region2: #{tpu_custom_call.1} parent=1 // pred_check
      _
    $region3: #{tpu_custom_call.1} parent=1 // pred_check_branch
      %19 = sbr.rel (0) target = $region5
    $region4: #{tpu_custom_call.1} parent=1 // pred_region
      _
    $region5: #{tpu_custom_call.1} parent=1 // pred_fallthru
      _
    // Predicated region
    $region6: #{tpu_custom_call.1} parent=1 // pred_check
      _
    $region7: #{tpu_custom_call.1} parent=1 // pred_check_branch
      %21 = sbr.rel (0) target = $region9
    $region8: #{tpu_custom_call.1} parent=1 // pred_region
      _
    $region9: #{tpu_custom_call.1} parent=1 // pred_fallthru
      _
    // Predicated region
    $region10: #{tpu_custom_call.1} parent=1 // pred_check
      _
    $region11: #{tpu_custom_call.1} parent=1 // pred_check_branch
      %23 = sbr.rel (0) target = $region13
    $region12: #{tpu_custom_call.1} parent=1 // pred_region
      _
    $region13: #{tpu_custom_call.1} parent=1 // pred_fallthru
      _
    // Predicated region
    $region14: #{tpu_custom_call.1} parent=1 // pred_check
      _
    $region15: #{tpu_custom_call.1} parent=1 // pred_check_branch
      %25 = sbr.rel (0) target = $region17
    $region16: #{tpu_custom_call.1} parent=1 // pred_region
      %s27 = ssub.s32 4096, 4096
      %28 = vsyncadd [#allocation5], %s27
      %s29 = sshll.u32 [#allocation4], 4
      %s30 = int_to_ptr.vmem [resolvable:$true] %s29
      %35 = dma.hbm_to_vmem [thread:$0]  %s3, 4096, %s30, [#allocation5], 256, 256, 16
    $region17: #{tpu_custom_call.1} parent=1 // pred_fallthru
      _
    // Predicated region
    $region18: #{tpu_custom_call.1} parent=1 // pred_check
      _
    $region19: #{tpu_custom_call.1} parent=1 // pred_check_branch
      %37 = sbr.rel (0) target = $region21
    $region20: #{tpu_custom_call.1} parent=1 // pred_region
      _
    $region21: #{tpu_custom_call.1} parent=1 // pred_fallthru
      _
    // Predicated region
    $region22: #{tpu_custom_call.1} parent=1 // pred_check
      _
    $region23: #{tpu_custom_call.1} parent=1 // pred_check_branch
      %39 = sbr.rel (0) target = $region25
    $region24: #{tpu_custom_call.1} parent=1 // pred_region
      %s41 = ssub.s32 4096, 4096
      %42 = vsyncadd [#allocation8], %s41
      %s43 = sshll.u32 [#allocation7], 4
      %s44 = int_to_ptr.vmem [resolvable:$true] %s43
      %49 = dma.hbm_to_vmem [thread:$0]  %s5, 4096, %s44, [#allocation8], 256, 256, 16
    $region25: #{tpu_custom_call.1} parent=1 // pred_fallthru
      _
    // Predicated region
    $region26: #{tpu_custom_call.1} parent=1 // pred_check
      _
    $region27: #{tpu_custom_call.1} parent=1 // pred_check_branch
      %51 = sbr.rel (0) target = $region29
    $region28: #{tpu_custom_call.1} parent=1 // pred_region
      %s53 = ssub.s32 4096, 4096
      %54 = vsyncadd [#allocation8], %s53
      %s55 = sshll.u32 [#allocation9], 4
      %s56 = int_to_ptr.vmem [resolvable:$true] %s55
      %61 = dma.hbm_to_vmem [thread:$0]  %s6, 4096, %s56, [#allocation8], 256, 256, 16
    $region29: #{tpu_custom_call.1} parent=1 // pred_fallthru
      _
    // Predicated region
    $region30: #{tpu_custom_call.1} parent=1 // pred_check
      _
    $region31: #{tpu_custom_call.1} parent=1 // pred_check_branch
      %63 = sbr.rel (0) target = $region33
    $region32: #{tpu_custom_call.1} parent=1 // pred_region
      _
    $region33: #{tpu_custom_call.1} parent=1 // pred_fallthru
      _
    // Predicated region
    $region34: #{tpu_custom_call.1} parent=1 // pred_check
      _
    $region35: #{tpu_custom_call.1} parent=1 // pred_check_branch
      %65 = sbr.rel (0) target = $region37
    $region36: #{tpu_custom_call.1} parent=1 // pred_region
      _
    $region37: #{tpu_custom_call.1} parent=1 // pred_fallthru
      _
    // Predicated region
    $region38: #{tpu_custom_call.1} parent=1 // pred_check
      _
    $region39: #{tpu_custom_call.1} parent=1 // pred_check_branch
      %67 = sbr.rel (0) target = $region41
    $region40: #{tpu_custom_call.1} parent=1 // pred_region
      _
    $region41: #{tpu_custom_call.1} parent=1 // pred_fallthru
      _
    // Predicated region
    $region42: #{tpu_custom_call.1} parent=1 // pred_check
      _
    $region43: #{tpu_custom_call.1} parent=1 // pred_check_branch
      %69 = sbr.rel (0) target = $region45
    $region44: #{tpu_custom_call.1} parent=1 // pred_region
      %70 = dma.done [#allocation5], 4096
    $region45: #{tpu_custom_call.1} parent=1 // pred_fallthru
      _
    // Predicated region
    $region46: #{tpu_custom_call.1} parent=1 // pred_check
      _
    $region47: #{tpu_custom_call.1} parent=1 // pred_check_branch
      %72 = sbr.rel (0) target = $region49
    $region48: #{tpu_custom_call.1} parent=1 // pred_region
      %73 = dma.done [#allocation8], 4096
    $region49: #{tpu_custom_call.1} parent=1 // pred_fallthru
      _
    // Predicated region
    $region50: #{tpu_custom_call.1} parent=1 // pred_check
      _
    $region51: #{tpu_custom_call.1} parent=1 // pred_check_branch
      %75 = sbr.rel (0) target = $region53
    $region52: #{tpu_custom_call.1} parent=1 // pred_region
      %76 = dma.done [#allocation8], 4096
    $region53: #{tpu_custom_call.1} parent=1 // pred_fallthru
      _
    %v78 = vld [vmem:[%s0] sm:$0xff]
    %v79 = vld [vmem:[%s2] sm:$0xff]
    %v80 = vld [vmem:[%s2 + $0x8] sm:$0xff]
    %v81 = vld [vmem:[%s2 + $0x10] sm:$0xff]
    %v82 = vld [vmem:[%s2 + $0x18] sm:$0xff]
    %v83 = vld [vmem:[#allocation4] sm:$0xff]
    %v84 = vld [vmem:[#allocation4 + $0x8] sm:$0xff]
    %v85 = vld [vmem:[#allocation4 + $0x10] sm:$0xff]
    %v86 = vld [vmem:[#allocation4 + $0x18] sm:$0xff]
    %v87 = vld [vmem:[#allocation4 + $0x20] sm:$0xff]
    %v88 = vld [vmem:[#allocation4 + $0x28] sm:$0xff]
    %v89 = vld [vmem:[#allocation4 + $0x30] sm:$0xff]
    %v90 = vld [vmem:[#allocation4 + $0x38] sm:$0xff]
    %v91 = vld [vmem:[#allocation4 + $0x40] sm:$0xff]
    %v92 = vld [vmem:[#allocation4 + $0x48] sm:$0xff]
    %v93 = vld [vmem:[#allocation4 + $0x50] sm:$0xff]
    %v94 = vld [vmem:[#allocation4 + $0x58] sm:$0xff]
    %v95 = vld [vmem:[#allocation4 + $0x60] sm:$0xff]
    %v96 = vld [vmem:[#allocation4 + $0x68] sm:$0xff]
    %v97 = vld [vmem:[#allocation4 + $0x70] sm:$0xff]
    %v98 = vld [vmem:[#allocation4 + $0x78] sm:$0xff]
    %v99 = vld [vmem:[#allocation4 + $0x80] sm:$0xff]
    %v100 = vld [vmem:[#allocation4 + $0x88] sm:$0xff]
    %v101 = vld [vmem:[#allocation4 + $0x90] sm:$0xff]
    %v102 = vld [vmem:[#allocation4 + $0x98] sm:$0xff]
    %v103 = vld [vmem:[#allocation4 + $0xa0] sm:$0xff]
    %v104 = vld [vmem:[#allocation4 + $0xa8] sm:$0xff]
    %v105 = vld [vmem:[#allocation4 + $0xb0] sm:$0xff]
    %v106 = vld [vmem:[#allocation4 + $0xb8] sm:$0xff]
    %v107 = vld [vmem:[#allocation4 + $0xc0] sm:$0xff]
    %v108 = vld [vmem:[#allocation4 + $0xc8] sm:$0xff]
    %v109 = vld [vmem:[#allocation4 + $0xd0] sm:$0xff]
    %v110 = vld [vmem:[#allocation4 + $0xd8] sm:$0xff]
    %v111 = vld [vmem:[#allocation4 + $0xe0] sm:$0xff]
    %v112 = vld [vmem:[#allocation4 + $0xe8] sm:$0xff]
    %v113 = vld [vmem:[#allocation4 + $0xf0] sm:$0xff]
    %v114 = vld [vmem:[#allocation4 + $0xf8] sm:$0xff]
    %v115 = vld [vmem:[%s4] sm:$0xf]
    %v116 = vld [vmem:[%s1] sm:$0xf]
    %v117 = vld [vmem:[%s1 + $0x4] sm:$0xf]
    %v118 = vld [vmem:[%s1 + $0x8] sm:$0xf]
    %v119 = vld [vmem:[%s1 + $0xc] sm:$0xf]
    %v120 = vld [vmem:[%s1 + $0x10] sm:$0xf]
    %v121 = vld [vmem:[%s1 + $0x14] sm:$0xf]
    %v122 = vld [vmem:[%s1 + $0x18] sm:$0xf]
    %v123 = vld [vmem:[%s1 + $0x1c] sm:$0xf]
    %v125 = vlaneseq
    %v126 = vshrl.u32 %v125, 7
    %v127 = vsub.s32 0, %v126
    %v128 = vrot.slane %v115, %v127
    %v129 = vlaneseq
    %v130 = vshrl.u32 %v129, 7
    %v131 = vsub.s32 1, %v130
    %v132 = vrot.slane %v115, %v131
    %v133 = vlaneseq
    %v134 = vshrl.u32 %v133, 7
    %v135 = vsub.s32 2, %v134
    %v136 = vrot.slane %v115, %v135
    %v137 = vlaneseq
    %v138 = vshrl.u32 %v137, 7
    %v139 = vsub.s32 3, %v138
    %v140 = vrot.slane %v115, %v139
    %v153 = vunpack.c.l.b16 %v116
    %v154 = vunpack.c.l.b16 %v117
    %v155 = vunpack.c.l.b16 %v118
    %v156 = vunpack.c.l.b16 %v119
    %v157 = vunpack.c.l.b16 %v120
    %v158 = vunpack.c.l.b16 %v121
    %v159 = vunpack.c.l.b16 %v122
    %v160 = vunpack.c.l.b16 %v123
    %v161 = vpack.c.b16 %v154, %v153
    %v162 = vpack.c.b16 %v156, %v155
    %v163 = vpack.c.b16 %v158, %v157
    %v164 = vpack.c.b16 %v160, %v159
    %v169 = vunpack.c.l.b16 %v79
    %v170 = vunpack.c.h.b16 %v79
    %v171 = vunpack.c.l.b16 %v80
    %v172 = vunpack.c.h.b16 %v80
    %v173 = vunpack.c.l.b16 %v81
    %v174 = vunpack.c.h.b16 %v81
    %v175 = vunpack.c.l.b16 %v82
    %v176 = vunpack.c.h.b16 %v82
    %v177 = vpack.c.b16 %v173, %v169
    %v178 = vpack.c.b16 %v174, %v170
    %v179 = vpack.c.b16 %v175, %v171
    %v180 = vpack.c.b16 %v176, %v172
    %vm185 = vcmask 130048
    %v187 = vsel %vm185, %v161, 0
    %v190 = vsel %vm185, %v162, 0
    %v193 = vsel %vm185, %v163, 0
    %v196 = vsel %vm185, %v164, 0
    %198 = vmatprep.subr.bf16.mxu0 0
    %199 = vmatpush1.bf16.msra.mxu0 0
    %200 = vmatprep.subr.bf16.mxu0 0
    %201 = vmatpush1.bf16.msra.mxu0 0
    %202 = vmatprep.subr.bf16.mxu0 0
    %203 = vmatpush1.bf16.msra.mxu0 0
    %204 = vmatprep.subr.bf16.mxu0 0
    %205 = vmatpush1.bf16.msra.mxu0 0
    %206 = vmatprep.subr.bf16.mxu0 0
    %207 = vmatpush1.bf16.msra.mxu0 0
    %208 = vmatprep.subr.bf16.mxu0 0
    %209 = vmatpush1.bf16.msra.mxu0 0
    %210 = vmatprep.subr.bf16.mxu0 0
    %211 = vmatpush1.bf16.msra.mxu0 0
    %212 = vmatprep.subr.bf16.mxu0 %v178
    %213 = vmatpush1.bf16.msra.mxu0 %v177
    %214 = vmatprep.subr.bf16.mxu0 0
    %215 = vmatpush2.bf16.msra.mxu0 0
    %216 = vmatprep.subr.bf16.mxu0 0
    %217 = vmatpush2.bf16.msra.mxu0 0
    %218 = vmatprep.subr.bf16.mxu0 0
    %219 = vmatpush2.bf16.msra.mxu0 0
    %220 = vmatprep.subr.bf16.mxu0 0
    %221 = vmatpush2.bf16.msra.mxu0 0
    %222 = vmatprep.subr.bf16.mxu0 0
    %223 = vmatpush2.bf16.msra.mxu0 0
    %224 = vmatprep.subr.bf16.mxu0 0
    %225 = vmatpush2.bf16.msra.mxu0 0
    %226 = vmatprep.subr.bf16.mxu0 0
    %227 = vmatpush2.bf16.msra.mxu0 0
    %228 = vmatprep.subr.bf16.mxu0 0
    %229 = vmatpush2.bf16.msra.mxu0 0
    %230 = vmatprep.mubr.bf16.mxu0 0
    %231 = vmatmul.mubr.bf16.gmra.mxu0 %v187
    %v232 = vpop.f32.mrf.mxu0
    %v233 = vadd.f32 %v128, %v232
    %v234 = vpop.f32.mrf.mxu0
    %v235 = vadd.f32 %v132, %v234
    %v236 = vpop.f32.mrf.mxu0
    %v237 = vadd.f32 %v128, %v236
    %v238 = vpop.f32.mrf.mxu0
    %v239 = vadd.f32 %v132, %v238
    %240 = vmatprep.mubr.bf16.mxu0 0
    %241 = vmatmul.mubr.bf16.gmra.mxu0 %v190
    %v242 = vpop.f32.mrf.mxu0
    %v243 = vadd.f32 %v128, %v242
    %v244 = vpop.f32.mrf.mxu0
    %v245 = vadd.f32 %v132, %v244
    %v246 = vpop.f32.mrf.mxu0
    %v247 = vadd.f32 %v128, %v246
    %v248 = vpop.f32.mrf.mxu0
    %v249 = vadd.f32 %v132, %v248
    %250 = vmatprep.mubr.bf16.mxu0 0
    %251 = vmatmul.mubr.bf16.gmra.mxu0 %v193
    %v252 = vpop.f32.mrf.mxu0
    %v253 = vadd.f32 %v128, %v252
    %v254 = vpop.f32.mrf.mxu0
    %v255 = vadd.f32 %v132, %v254
    %v256 = vpop.f32.mrf.mxu0
    %v257 = vadd.f32 %v128, %v256
    %v258 = vpop.f32.mrf.mxu0
    %v259 = vadd.f32 %v132, %v258
    %260 = vmatprep.mubr.bf16.mxu0 0
    %261 = vmatmul.mubr.bf16.gmra.mxu0 %v196
    %v262 = vpop.f32.mrf.mxu0
    %v263 = vadd.f32 %v128, %v262
    %v264 = vpop.f32.mrf.mxu0
    %v265 = vadd.f32 %v132, %v264
    %v266 = vpop.f32.mrf.mxu0
    %v267 = vadd.f32 %v128, %v266
    %v268 = vpop.f32.mrf.mxu0
    %v269 = vadd.f32 %v132, %v268
    %270 = vdwg.mxu0
    %271 = vmatprep.subr.bf16.mxu0 0
    %272 = vmatpush1.bf16.msra.mxu0 0
    %273 = vmatprep.subr.bf16.mxu0 0
    %274 = vmatpush1.bf16.msra.mxu0 0
    %275 = vmatprep.subr.bf16.mxu0 0
    %276 = vmatpush1.bf16.msra.mxu0 0
    %277 = vmatprep.subr.bf16.mxu0 0
    %278 = vmatpush1.bf16.msra.mxu0 0
    %279 = vmatprep.subr.bf16.mxu0 0
    %280 = vmatpush1.bf16.msra.mxu0 0
    %281 = vmatprep.subr.bf16.mxu0 0
    %282 = vmatpush1.bf16.msra.mxu0 0
    %283 = vmatprep.subr.bf16.mxu0 0
    %284 = vmatpush1.bf16.msra.mxu0 0
    %285 = vmatprep.subr.bf16.mxu0 %v180
    %286 = vmatpush1.bf16.msra.mxu0 %v179
    %287 = vmatprep.subr.bf16.mxu0 0
    %288 = vmatpush2.bf16.msra.mxu0 0
    %289 = vmatprep.subr.bf16.mxu0 0
    %290 = vmatpush2.bf16.msra.mxu0 0
    %291 = vmatprep.subr.bf16.mxu0 0
    %292 = vmatpush2.bf16.msra.mxu0 0
    %293 = vmatprep.subr.bf16.mxu0 0
    %294 = vmatpush2.bf16.msra.mxu0 0
    %295 = vmatprep.subr.bf16.mxu0 0
    %296 = vmatpush2.bf16.msra.mxu0 0
    %297 = vmatprep.subr.bf16.mxu0 0
    %298 = vmatpush2.bf16.msra.mxu0 0
    %299 = vmatprep.subr.bf16.mxu0 0
    %300 = vmatpush2.bf16.msra.mxu0 0
    %301 = vmatprep.subr.bf16.mxu0 0
    %302 = vmatpush2.bf16.msra.mxu0 0
    %303 = vmatprep.mubr.bf16.mxu0 0
    %304 = vmatmul.mubr.bf16.gmra.mxu0 %v187
    %v305 = vpop.f32.mrf.mxu0
    %v306 = vadd.f32 %v136, %v305
    %v307 = vpop.f32.mrf.mxu0
    %v308 = vadd.f32 %v140, %v307
    %v309 = vpop.f32.mrf.mxu0
    %v310 = vadd.f32 %v136, %v309
    %v311 = vpop.f32.mrf.mxu0
    %v312 = vadd.f32 %v140, %v311
    %313 = vmatprep.mubr.bf16.mxu0 0
    %314 = vmatmul.mubr.bf16.gmra.mxu0 %v190
    %v315 = vpop.f32.mrf.mxu0
    %v316 = vadd.f32 %v136, %v315
    %v317 = vpop.f32.mrf.mxu0
    %v318 = vadd.f32 %v140, %v317
    %v319 = vpop.f32.mrf.mxu0
    %v320 = vadd.f32 %v136, %v319
    %v321 = vpop.f32.mrf.mxu0
    %v322 = vadd.f32 %v140, %v321
    %323 = vmatprep.mubr.bf16.mxu0 0
    %324 = vmatmul.mubr.bf16.gmra.mxu0 %v193
    %v325 = vpop.f32.mrf.mxu0
    %v326 = vadd.f32 %v136, %v325
    %v327 = vpop.f32.mrf.mxu0
    %v328 = vadd.f32 %v140, %v327
    %v329 = vpop.f32.mrf.mxu0
    %v330 = vadd.f32 %v136, %v329
    %v331 = vpop.f32.mrf.mxu0
    %v332 = vadd.f32 %v140, %v331
    %333 = vmatprep.mubr.bf16.mxu0 0
    %334 = vmatmul.mubr.bf16.gmra.mxu0 %v196
    %v335 = vpop.f32.mrf.mxu0
    %v336 = vadd.f32 %v136, %v335
    %v337 = vpop.f32.mrf.mxu0
    %v338 = vadd.f32 %v140, %v337
    %v339 = vpop.f32.mrf.mxu0
    %v340 = vadd.f32 %v136, %v339
    %v341 = vpop.f32.mrf.mxu0
    %v342 = vadd.f32 %v140, %v341
    %343 = vdwg.mxu0
    %v344 = vpack.c.bf16 %v237, %v233
    %v345 = vpack.c.bf16 %v239, %v235
    %v346 = vpack.c.bf16 %v310, %v306
    %v347 = vpack.c.bf16 %v312, %v308
    %v348 = vpack.c.bf16 %v247, %v243
    %v349 = vpack.c.bf16 %v249, %v245
    %v350 = vpack.c.bf16 %v320, %v316
    %v351 = vpack.c.bf16 %v322, %v318
    %v352 = vpack.c.bf16 %v257, %v253
    %v353 = vpack.c.bf16 %v259, %v255
    %v354 = vpack.c.bf16 %v330, %v326
    %v355 = vpack.c.bf16 %v332, %v328
    %v356 = vpack.c.bf16 %v267, %v263
    %v357 = vpack.c.bf16 %v269, %v265
    %v358 = vpack.c.bf16 %v340, %v336
    %v359 = vpack.c.bf16 %v342, %v338
    %v376 = vunpack.c.l.b16 %v344
    %v377 = vunpack.c.l.b16 %v345
    %v378 = vunpack.c.l.b16 %v346
    %v379 = vunpack.c.l.b16 %v347
    %v380 = vunpack.c.h.b16 %v344
    %v381 = vunpack.c.h.b16 %v345
    %v382 = vunpack.c.h.b16 %v346
    %v383 = vunpack.c.h.b16 %v347
    %v384 = vunpack.c.l.b16 %v348
    %v385 = vunpack.c.l.b16 %v349
    %v386 = vunpack.c.l.b16 %v350
    %v387 = vunpack.c.l.b16 %v351
    %v388 = vunpack.c.h.b16 %v348
    %v389 = vunpack.c.h.b16 %v349
    %v390 = vunpack.c.h.b16 %v350
    %v391 = vunpack.c.h.b16 %v351
    %v392 = vunpack.c.l.b16 %v352
    %v393 = vunpack.c.l.b16 %v353
    %v394 = vunpack.c.l.b16 %v354
    %v395 = vunpack.c.l.b16 %v355
    %v396 = vunpack.c.h.b16 %v352
    %v397 = vunpack.c.h.b16 %v353
    %v398 = vunpack.c.h.b16 %v354
    %v399 = vunpack.c.h.b16 %v355
    %v400 = vunpack.c.l.b16 %v356
    %v401 = vunpack.c.l.b16 %v357
    %v402 = vunpack.c.l.b16 %v358
    %v403 = vunpack.c.l.b16 %v359
    %v404 = vunpack.c.h.b16 %v356
    %v405 = vunpack.c.h.b16 %v357
    %v406 = vunpack.c.h.b16 %v358
    %v407 = vunpack.c.h.b16 %v359
    %v408 = vpack.c.b16 %v377, %v376
    %v409 = vpack.c.b16 %v379, %v378
    %v410 = vpack.c.b16 %v381, %v380
    %v411 = vpack.c.b16 %v383, %v382
    %v412 = vpack.c.b16 %v385, %v384
    %v413 = vpack.c.b16 %v387, %v386
    %v414 = vpack.c.b16 %v389, %v388
    %v415 = vpack.c.b16 %v391, %v390
    %v416 = vpack.c.b16 %v393, %v392
    %v417 = vpack.c.b16 %v395, %v394
    %v418 = vpack.c.b16 %v397, %v396
    %v419 = vpack.c.b16 %v399, %v398
    %v420 = vpack.c.b16 %v401, %v400
    %v421 = vpack.c.b16 %v403, %v402
    %v422 = vpack.c.b16 %v405, %v404
    %v423 = vpack.c.b16 %v407, %v406
    %440 = vst [vmem:[#allocation2] sm:$0xff] %v408
    %441 = vst [vmem:[#allocation2 + $0x8] sm:$0xff] %v409
    %442 = vst [vmem:[#allocation2 + $0x10] sm:$0xff] %v410
    %443 = vst [vmem:[#allocation2 + $0x18] sm:$0xff] %v411
    %444 = vst [vmem:[#allocation2 + $0x20] sm:$0xff] %v412
    %445 = vst [vmem:[#allocation2 + $0x28] sm:$0xff] %v413
    %446 = vst [vmem:[#allocation2 + $0x30] sm:$0xff] %v414
    %447 = vst [vmem:[#allocation2 + $0x38] sm:$0xff] %v415
    %448 = vst [vmem:[#allocation2 + $0x40] sm:$0xff] %v416
    %449 = vst [vmem:[#allocation2 + $0x48] sm:$0xff] %v417
    %450 = vst [vmem:[#allocation2 + $0x50] sm:$0xff] %v418
    %451 = vst [vmem:[#allocation2 + $0x58] sm:$0xff] %v419
    %452 = vst [vmem:[#allocation2 + $0x60] sm:$0xff] %v420
    %453 = vst [vmem:[#allocation2 + $0x68] sm:$0xff] %v421
    %454 = vst [vmem:[#allocation2 + $0x70] sm:$0xff] %v422
    %455 = vst [vmem:[#allocation2 + $0x78] sm:$0xff] %v423
    %s456 = smul.u32 0, 4
    %s457 = smul.addr %s456, 4
    %s458 = scalar_lea.vmem [#allocation2], %s457
    %v459 = vld [vmem:[%s458] sm:$0xff]
    %v460 = vld [vmem:[%s458 + $0x8] sm:$0xff]
    %v461 = vunpack.c.l.bf16 %v459
    %v462 = vunpack.c.h.bf16 %v459
    %v463 = vunpack.c.l.bf16 %v460
    %v464 = vunpack.c.h.bf16 %v460
    %v497 = vunpack.c.l.b16 %v83
    %v498 = vunpack.c.h.b16 %v83
    %v499 = vunpack.c.l.b16 %v84
    %v500 = vunpack.c.h.b16 %v84
    %v501 = vunpack.c.l.b16 %v85
    %v502 = vunpack.c.h.b16 %v85
    %v503 = vunpack.c.l.b16 %v86
    %v504 = vunpack.c.h.b16 %v86
    %v505 = vunpack.c.l.b16 %v87
    %v506 = vunpack.c.h.b16 %v87
    %v507 = vunpack.c.l.b16 %v88
    %v508 = vunpack.c.h.b16 %v88
    %v509 = vunpack.c.l.b16 %v89
    %v510 = vunpack.c.h.b16 %v89
    %v511 = vunpack.c.l.b16 %v90
    %v512 = vunpack.c.h.b16 %v90
    %v513 = vunpack.c.l.b16 %v91
    %v514 = vunpack.c.h.b16 %v91
    %v515 = vunpack.c.l.b16 %v92
    %v516 = vunpack.c.h.b16 %v92
    %v517 = vunpack.c.l.b16 %v93
    %v518 = vunpack.c.h.b16 %v93
    %v519 = vunpack.c.l.b16 %v94
    %v520 = vunpack.c.h.b16 %v94
    %v521 = vunpack.c.l.b16 %v95
    %v522 = vunpack.c.h.b16 %v95
    %v523 = vunpack.c.l.b16 %v96
    %v524 = vunpack.c.h.b16 %v96
    %v525 = vunpack.c.l.b16 %v97
    %v526 = vunpack.c.h.b16 %v97
    %v527 = vunpack.c.l.b16 %v98
    %v528 = vunpack.c.h.b16 %v98
    %v529 = vunpack.c.l.b16 %v99
    %v530 = vunpack.c.h.b16 %v99
    %v531 = vunpack.c.l.b16 %v100
    %v532 = vunpack.c.h.b16 %v100
    %v533 = vunpack.c.l.b16 %v101
    %v534 = vunpack.c.h.b16 %v101
    %v535 = vunpack.c.l.b16 %v102
    %v536 = vunpack.c.h.b16 %v102
    %v537 = vunpack.c.l.b16 %v103
    %v538 = vunpack.c.h.b16 %v103
    %v539 = vunpack.c.l.b16 %v104
    %v540 = vunpack.c.h.b16 %v104
    %v541 = vunpack.c.l.b16 %v105
    %v542 = vunpack.c.h.b16 %v105
    %v543 = vunpack.c.l.b16 %v106
    %v544 = vunpack.c.h.b16 %v106
    %v545 = vunpack.c.l.b16 %v107
    %v546 = vunpack.c.h.b16 %v107
    %v547 = vunpack.c.l.b16 %v108
    %v548 = vunpack.c.h.b16 %v108
    %v549 = vunpack.c.l.b16 %v109
    %v550 = vunpack.c.h.b16 %v109
    %v551 = vunpack.c.l.b16 %v110
    %v552 = vunpack.c.h.b16 %v110
    %v553 = vunpack.c.l.b16 %v111
    %v554 = vunpack.c.h.b16 %v111
    %v555 = vunpack.c.l.b16 %v112
    %v556 = vunpack.c.h.b16 %v112
    %v557 = vunpack.c.l.b16 %v113
    %v558 = vunpack.c.h.b16 %v113
    %v559 = vunpack.c.l.b16 %v114
    %v560 = vunpack.c.h.b16 %v114
    %v561 = vpack.c.b16 %v501, %v497
    %v562 = vpack.c.b16 %v502, %v498
    %v563 = vpack.c.b16 %v503, %v499
    %v564 = vpack.c.b16 %v504, %v500
    %v565 = vpack.c.b16 %v509, %v505
    %v566 = vpack.c.b16 %v510, %v506
    %v567 = vpack.c.b16 %v511, %v507
    %v568 = vpack.c.b16 %v512, %v508
    %v569 = vpack.c.b16 %v517, %v513
    %v570 = vpack.c.b16 %v518, %v514
    %v571 = vpack.c.b16 %v519, %v515
    %v572 = vpack.c.b16 %v520, %v516
    %v573 = vpack.c.b16 %v525, %v521
    %v574 = vpack.c.b16 %v526, %v522
    %v575 = vpack.c.b16 %v527, %v523
    %v576 = vpack.c.b16 %v528, %v524
    %v577 = vpack.c.b16 %v533, %v529
    %v578 = vpack.c.b16 %v534, %v530
    %v579 = vpack.c.b16 %v535, %v531
    %v580 = vpack.c.b16 %v536, %v532
    %v581 = vpack.c.b16 %v541, %v537
    %v582 = vpack.c.b16 %v542, %v538
    %v583 = vpack.c.b16 %v543, %v539
    %v584 = vpack.c.b16 %v544, %v540
    %v585 = vpack.c.b16 %v549, %v545
    %v586 = vpack.c.b16 %v550, %v546
    %v587 = vpack.c.b16 %v551, %v547
    %v588 = vpack.c.b16 %v552, %v548
    %v589 = vpack.c.b16 %v557, %v553
    %v590 = vpack.c.b16 %v558, %v554
    %v591 = vpack.c.b16 %v559, %v555
    %v592 = vpack.c.b16 %v560, %v556
    %625 = vmatprep.subr.bf16.mxu0 %v590
    %626 = vmatpush1.bf16.msra.mxu0 %v589
    %627 = vmatprep.subr.bf16.mxu0 %v586
    %628 = vmatpush1.bf16.msra.mxu0 %v585
    %629 = vmatprep.subr.bf16.mxu0 %v582
    %630 = vmatpush1.bf16.msra.mxu0 %v581
    %631 = vmatprep.subr.bf16.mxu0 %v578
    %632 = vmatpush1.bf16.msra.mxu0 %v577
    %633 = vmatprep.subr.bf16.mxu0 %v574
    %634 = vmatpush1.bf16.msra.mxu0 %v573
    %635 = vmatprep.subr.bf16.mxu0 %v570
    %636 = vmatpush1.bf16.msra.mxu0 %v569
    %637 = vmatprep.subr.bf16.mxu0 %v566
    %638 = vmatpush1.bf16.msra.mxu0 %v565
    %639 = vmatprep.subr.bf16.mxu0 %v562
    %640 = vmatpush1.bf16.msra.mxu0 %v561
    %641 = vmatprep.subr.bf16.mxu0 0
    %642 = vmatpush2.bf16.msra.mxu0 0
    %643 = vmatprep.subr.bf16.mxu0 0
    %644 = vmatpush2.bf16.msra.mxu0 0
    %645 = vmatprep.subr.bf16.mxu0 0
    %646 = vmatpush2.bf16.msra.mxu0 0
    %647 = vmatprep.subr.bf16.mxu0 0
    %648 = vmatpush2.bf16.msra.mxu0 0
    %649 = vmatprep.subr.bf16.mxu0 0
    %650 = vmatpush2.bf16.msra.mxu0 0
    %651 = vmatprep.subr.bf16.mxu0 0
    %652 = vmatpush2.bf16.msra.mxu0 0
    %653 = vmatprep.subr.bf16.mxu0 0
    %654 = vmatpush2.bf16.msra.mxu0 0
    %655 = vmatprep.subr.bf16.mxu0 0
    %656 = vmatpush2.bf16.msra.mxu0 0
    %657 = vmatprep.mubr.bf16.mxu0 0
    %658 = vmatmul.mubr.bf16.gmra.mxu0 0
    %v659 = vpop.f32.mrf.mxu0
    %v660 = vadd.f32 0.0, %v659
    %v661 = vpop.f32.mrf.mxu0
    %v662 = vadd.f32 0.0, %v661
    %v663 = vpop.f32.mrf.mxu0
    %v664 = vpop.f32.mrf.mxu0
    %665 = vdwg.mxu0
    %666 = vmatprep.subr.bf16.mxu0 %v592
    %667 = vmatpush1.bf16.msra.mxu0 %v591
    %668 = vmatprep.subr.bf16.mxu0 %v588
    %669 = vmatpush1.bf16.msra.mxu0 %v587
    %670 = vmatprep.subr.bf16.mxu0 %v584
    %671 = vmatpush1.bf16.msra.mxu0 %v583
    %672 = vmatprep.subr.bf16.mxu0 %v580
    %673 = vmatpush1.bf16.msra.mxu0 %v579
    %674 = vmatprep.subr.bf16.mxu0 %v576
    %675 = vmatpush1.bf16.msra.mxu0 %v575
    %676 = vmatprep.subr.bf16.mxu0 %v572
    %677 = vmatpush1.bf16.msra.mxu0 %v571
    %678 = vmatprep.subr.bf16.mxu0 %v568
    %679 = vmatpush1.bf16.msra.mxu0 %v567
    %680 = vmatprep.subr.bf16.mxu0 %v564
    %681 = vmatpush1.bf16.msra.mxu0 %v563
    %682 = vmatprep.subr.bf16.mxu0 0
    %683 = vmatpush2.bf16.msra.mxu0 0
    %684 = vmatprep.subr.bf16.mxu0 0
    %685 = vmatpush2.bf16.msra.mxu0 0
    %686 = vmatprep.subr.bf16.mxu0 0
    %687 = vmatpush2.bf16.msra.mxu0 0
    %688 = vmatprep.subr.bf16.mxu0 0
    %689 = vmatpush2.bf16.msra.mxu0 0
    %690 = vmatprep.subr.bf16.mxu0 0
    %691 = vmatpush2.bf16.msra.mxu0 0
    %692 = vmatprep.subr.bf16.mxu0 0
    %693 = vmatpush2.bf16.msra.mxu0 0
    %694 = vmatprep.subr.bf16.mxu0 0
    %695 = vmatpush2.bf16.msra.mxu0 0
    %696 = vmatprep.subr.bf16.mxu0 0
    %697 = vmatpush2.bf16.msra.mxu0 0
    %698 = vmatprep.mubr.bf16.mxu0 0
    %699 = vmatmul.mubr.bf16.gmra.mxu0 0
    %v700 = vpop.f32.mrf.mxu0
    %v701 = vadd.f32 0.0, %v700
    %v702 = vpop.f32.mrf.mxu0
    %v703 = vadd.f32 0.0, %v702
    %v704 = vpop.f32.mrf.mxu0
    %v705 = vpop.f32.mrf.mxu0
    %706 = vdwg.mxu0
    %v707 = vadd.f32 %v461, %v660
    %v708 = vadd.f32 %v462, %v662
    %v709 = vadd.f32 %v463, %v701
    %v710 = vadd.f32 %v464, %v703
    %v711 = vxor.u32 %v707, 2147483648
    %v712 = vxor.u32 %v708, 2147483648
    %v713 = vxor.u32 %v709, 2147483648
    %v714 = vmul.f32 %v711, 1.442695
    %v715 = vpow.pop %v714
    %v716 = vmul.f32 %v712, 1.442695
    %v717 = vpow.pop %v716
    %v718 = vmul.f32 %v713, 1.442695
    %v719 = vpow.pop %v718
    %v720 = vadd.f32 %v715, 1.0
    %v721 = vadd.f32 %v717, 1.0
    %v722 = vadd.f32 %v719, 1.0
    %v723 = vrcp.pop %v720
    %v724 = vmul.f32 1.0, %v723
    %v725 = vrcp.pop %v721
    %v726 = vmul.f32 1.0, %v725
    %v727 = vrcp.pop %v722
    %v728 = vmul.f32 1.0, %v727
    %v729 = vtanh.pop %v710
    %v730 = vmul.f32 %v726, 0.0
    %v731 = vmul.f32 %v724, %v729
    %v732 = vadd.f32 %v730, %v731
    %v733 = vtanh.pop %v732
    %v734 = vmul.f32 %v728, %v733
    %v735 = vpack.c.bf16 %v734, %v734
    %736 = vst [vmem:[#allocation3] sm:$0xf] %v735
    %s737 = smul.u32 1, 4
    %s738 = smul.addr %s737, 4
    %s739 = scalar_lea.vmem [#allocation2], %s738
    %v740 = vld [vmem:[%s739] sm:$0xff]
    %v741 = vld [vmem:[%s739 + $0x8] sm:$0xff]
    %v742 = vunpack.c.l.bf16 %v740
    %v743 = vunpack.c.h.bf16 %v740
    %v744 = vunpack.c.l.bf16 %v741
    %v745 = vunpack.c.h.bf16 %v741
    %746 = vmatprep.subr.bf16.mxu0 %v590
    %747 = vmatpush1.bf16.msra.mxu0 %v589
    %748 = vmatprep.subr.bf16.mxu0 %v586
    %749 = vmatpush1.bf16.msra.mxu0 %v585
    %750 = vmatprep.subr.bf16.mxu0 %v582
    %751 = vmatpush1.bf16.msra.mxu0 %v581
    %752 = vmatprep.subr.bf16.mxu0 %v578
    %753 = vmatpush1.bf16.msra.mxu0 %v577
    %754 = vmatprep.subr.bf16.mxu0 %v574
    %755 = vmatpush1.bf16.msra.mxu0 %v573
    %756 = vmatprep.subr.bf16.mxu0 %v570
    %757 = vmatpush1.bf16.msra.mxu0 %v569
    %758 = vmatprep.subr.bf16.mxu0 %v566
    %759 = vmatpush1.bf16.msra.mxu0 %v565
    %760 = vmatprep.subr.bf16.mxu0 %v562
    %761 = vmatpush1.bf16.msra.mxu0 %v561
    %762 = vmatprep.subr.bf16.mxu0 0
    %763 = vmatpush2.bf16.msra.mxu0 0
    %764 = vmatprep.subr.bf16.mxu0 0
    %765 = vmatpush2.bf16.msra.mxu0 0
    %766 = vmatprep.subr.bf16.mxu0 0
    %767 = vmatpush2.bf16.msra.mxu0 0
    %768 = vmatprep.subr.bf16.mxu0 0
    %769 = vmatpush2.bf16.msra.mxu0 0
    %770 = vmatprep.subr.bf16.mxu0 0
    %771 = vmatpush2.bf16.msra.mxu0 0
    %772 = vmatprep.subr.bf16.mxu0 0
    %773 = vmatpush2.bf16.msra.mxu0 0
    %774 = vmatprep.subr.bf16.mxu0 0
    %775 = vmatpush2.bf16.msra.mxu0 0
    %776 = vmatprep.subr.bf16.mxu0 0
    %777 = vmatpush2.bf16.msra.mxu0 0
    %778 = vmatprep.mubr.bf16.mxu0 0
    %779 = vmatmul.mubr.bf16.gmra.mxu0 %v735
    %v780 = vpop.f32.mrf.mxu0
    %v781 = vadd.f32 0.0, %v780
    %v782 = vpop.f32.mrf.mxu0
    %v783 = vadd.f32 0.0, %v782
    %v784 = vpop.f32.mrf.mxu0
    %v785 = vpop.f32.mrf.mxu0
    %786 = vdwg.mxu0
    %787 = vmatprep.subr.bf16.mxu0 %v592
    %788 = vmatpush1.bf16.msra.mxu0 %v591
    %789 = vmatprep.subr.bf16.mxu0 %v588
    %790 = vmatpush1.bf16.msra.mxu0 %v587
    %791 = vmatprep.subr.bf16.mxu0 %v584
    %792 = vmatpush1.bf16.msra.mxu0 %v583
    %793 = vmatprep.subr.bf16.mxu0 %v580
    %794 = vmatpush1.bf16.msra.mxu0 %v579
    %795 = vmatprep.subr.bf16.mxu0 %v576
    %796 = vmatpush1.bf16.msra.mxu0 %v575
    %797 = vmatprep.subr.bf16.mxu0 %v572
    %798 = vmatpush1.bf16.msra.mxu0 %v571
    %799 = vmatprep.subr.bf16.mxu0 %v568
    %800 = vmatpush1.bf16.msra.mxu0 %v567
    %801 = vmatprep.subr.bf16.mxu0 %v564
    %802 = vmatpush1.bf16.msra.mxu0 %v563
    %803 = vmatprep.subr.bf16.mxu0 0
    %804 = vmatpush2.bf16.msra.mxu0 0
    %805 = vmatprep.subr.bf16.mxu0 0
    %806 = vmatpush2.bf16.msra.mxu0 0
    %807 = vmatprep.subr.bf16.mxu0 0
    %808 = vmatpush2.bf16.msra.mxu0 0
    %809 = vmatprep.subr.bf16.mxu0 0
    %810 = vmatpush2.bf16.msra.mxu0 0
    %811 = vmatprep.subr.bf16.mxu0 0
    %812 = vmatpush2.bf16.msra.mxu0 0
    %813 = vmatprep.subr.bf16.mxu0 0
    %814 = vmatpush2.bf16.msra.mxu0 0
    %815 = vmatprep.subr.bf16.mxu0 0
    %816 = vmatpush2.bf16.msra.mxu0 0
    %817 = vmatprep.subr.bf16.mxu0 0
    %818 = vmatpush2.bf16.msra.mxu0 0
    %819 = vmatprep.mubr.bf16.mxu0 0
    %820 = vmatmul.mubr.bf16.gmra.mxu0 %v735
    %v821 = vpop.f32.mrf.mxu0
    %v822 = vadd.f32 0.0, %v821
    %v823 = vpop.f32.mrf.mxu0
    %v824 = vadd.f32 0.0, %v823
    %v825 = vpop.f32.mrf.mxu0
    %v826 = vpop.f32.mrf.mxu0
    %827 = vdwg.mxu0
    %v828 = vadd.f32 %v742, %v781
    %v829 = vadd.f32 %v743, %v783
    %v830 = vadd.f32 %v744, %v822
    %v831 = vadd.f32 %v745, %v824
    %v832 = vxor.u32 %v828, 2147483648
    %v833 = vxor.u32 %v829, 2147483648
    %v834 = vxor.u32 %v830, 2147483648
    %v835 = vmul.f32 %v832, 1.442695
    %v836 = vpow.pop %v835
    %v837 = vmul.f32 %v833, 1.442695
    %v838 = vpow.pop %v837
    %v839 = vmul.f32 %v834, 1.442695
    %v840 = vpow.pop %v839
    %v841 = vadd.f32 %v836, 1.0
    %v842 = vadd.f32 %v838, 1.0
    %v843 = vadd.f32 %v840, 1.0
    %v844 = vrcp.pop %v841
    %v845 = vmul.f32 1.0, %v844
    %v846 = vrcp.pop %v842
    %v847 = vmul.f32 1.0, %v846
    %v848 = vrcp.pop %v843
    %v849 = vmul.f32 1.0, %v848
    %v850 = vtanh.pop %v831
    %v851 = vmul.f32 %v847, %v732
    %v852 = vmul.f32 %v845, %v850
    %v853 = vadd.f32 %v851, %v852
    %v854 = vtanh.pop %v853
    %v855 = vmul.f32 %v849, %v854
    %v856 = vpack.c.bf16 %v855, %v855
    %s857 = scalar_lea.vmem [#allocation3], 4
    %858 = vst [vmem:[%s857] sm:$0xf] %v856
    %s859 = smul.u32 2, 4
    %s860 = smul.addr %s859, 4
    %s861 = scalar_lea.vmem [#allocation2], %s860
    %v862 = vld [vmem:[%s861] sm:$0xff]
    %v863 = vld [vmem:[%s861 + $0x8] sm:$0xff]
    %v864 = vunpack.c.l.bf16 %v862
    %v865 = vunpack.c.h.bf16 %v862
    %v866 = vunpack.c.l.bf16 %v863
    %v867 = vunpack.c.h.bf16 %v863
    %868 = vmatprep.subr.bf16.mxu0 %v590
    %869 = vmatpush1.bf16.msra.mxu0 %v589
    %870 = vmatprep.subr.bf16.mxu0 %v586
    %871 = vmatpush1.bf16.msra.mxu0 %v585
    %872 = vmatprep.subr.bf16.mxu0 %v582
    %873 = vmatpush1.bf16.msra.mxu0 %v581
    %874 = vmatprep.subr.bf16.mxu0 %v578
    %875 = vmatpush1.bf16.msra.mxu0 %v577
    %876 = vmatprep.subr.bf16.mxu0 %v574
    %877 = vmatpush1.bf16.msra.mxu0 %v573
    %878 = vmatprep.subr.bf16.mxu0 %v570
    %879 = vmatpush1.bf16.msra.mxu0 %v569
    %880 = vmatprep.subr.bf16.mxu0 %v566
    %881 = vmatpush1.bf16.msra.mxu0 %v565
    %882 = vmatprep.subr.bf16.mxu0 %v562
    %883 = vmatpush1.bf16.msra.mxu0 %v561
    %884 = vmatprep.subr.bf16.mxu0 0
    %885 = vmatpush2.bf16.msra.mxu0 0
    %886 = vmatprep.subr.bf16.mxu0 0
    %887 = vmatpush2.bf16.msra.mxu0 0
    %888 = vmatprep.subr.bf16.mxu0 0
    %889 = vmatpush2.bf16.msra.mxu0 0
    %890 = vmatprep.subr.bf16.mxu0 0
    %891 = vmatpush2.bf16.msra.mxu0 0
    %892 = vmatprep.subr.bf16.mxu0 0
    %893 = vmatpush2.bf16.msra.mxu0 0
    %894 = vmatprep.subr.bf16.mxu0 0
    %895 = vmatpush2.bf16.msra.mxu0 0
    %896 = vmatprep.subr.bf16.mxu0 0
    %897 = vmatpush2.bf16.msra.mxu0 0
    %898 = vmatprep.subr.bf16.mxu0 0
    %899 = vmatpush2.bf16.msra.mxu0 0
    %900 = vmatprep.mubr.bf16.mxu0 0
    %901 = vmatmul.mubr.bf16.gmra.mxu0 %v856
    %v902 = vpop.f32.mrf.mxu0
    %v903 = vadd.f32 0.0, %v902
    %v904 = vpop.f32.mrf.mxu0
    %v905 = vadd.f32 0.0, %v904
    %v906 = vpop.f32.mrf.mxu0
    %v907 = vpop.f32.mrf.mxu0
    %908 = vdwg.mxu0
    %909 = vmatprep.subr.bf16.mxu0 %v592
    %910 = vmatpush1.bf16.msra.mxu0 %v591
    %911 = vmatprep.subr.bf16.mxu0 %v588
    %912 = vmatpush1.bf16.msra.mxu0 %v587
    %913 = vmatprep.subr.bf16.mxu0 %v584
    %914 = vmatpush1.bf16.msra.mxu0 %v583
    %915 = vmatprep.subr.bf16.mxu0 %v580
    %916 = vmatpush1.bf16.msra.mxu0 %v579
    %917 = vmatprep.subr.bf16.mxu0 %v576
    %918 = vmatpush1.bf16.msra.mxu0 %v575
    %919 = vmatprep.subr.bf16.mxu0 %v572
    %920 = vmatpush1.bf16.msra.mxu0 %v571
    %921 = vmatprep.subr.bf16.mxu0 %v568
    %922 = vmatpush1.bf16.msra.mxu0 %v567
    %923 = vmatprep.subr.bf16.mxu0 %v564
    %924 = vmatpush1.bf16.msra.mxu0 %v563
    %925 = vmatprep.subr.bf16.mxu0 0
    %926 = vmatpush2.bf16.msra.mxu0 0
    %927 = vmatprep.subr.bf16.mxu0 0
    %928 = vmatpush2.bf16.msra.mxu0 0
    %929 = vmatprep.subr.bf16.mxu0 0
    %930 = vmatpush2.bf16.msra.mxu0 0
    %931 = vmatprep.subr.bf16.mxu0 0
    %932 = vmatpush2.bf16.msra.mxu0 0
    %933 = vmatprep.subr.bf16.mxu0 0
    %934 = vmatpush2.bf16.msra.mxu0 0
    %935 = vmatprep.subr.bf16.mxu0 0
    %936 = vmatpush2.bf16.msra.mxu0 0
    %937 = vmatprep.subr.bf16.mxu0 0
    %938 = vmatpush2.bf16.msra.mxu0 0
    %939 = vmatprep.subr.bf16.mxu0 0
    %940 = vmatpush2.bf16.msra.mxu0 0
    %941 = vmatprep.mubr.bf16.mxu0 0
    %942 = vmatmul.mubr.bf16.gmra.mxu0 %v856
    %v943 = vpop.f32.mrf.mxu0
    %v944 = vadd.f32 0.0, %v943
    %v945 = vpop.f32.mrf.mxu0
    %v946 = vadd.f32 0.0, %v945
    %v947 = vpop.f32.mrf.mxu0
    %v948 = vpop.f32.mrf.mxu0
    %949 = vdwg.mxu0
    %v950 = vadd.f32 %v864, %v903
    %v951 = vadd.f32 %v865, %v905
    %v952 = vadd.f32 %v866, %v944
    %v953 = vadd.f32 %v867, %v946
    %v954 = vxor.u32 %v950, 2147483648
    %v955 = vxor.u32 %v951, 2147483648
    %v956 = vxor.u32 %v952, 2147483648
    %v957 = vmul.f32 %v954, 1.442695
    %v958 = vpow.pop %v957
    %v959 = vmul.f32 %v955, 1.442695
    %v960 = vpow.pop %v959
    %v961 = vmul.f32 %v956, 1.442695
    %v962 = vpow.pop %v961
    %v963 = vadd.f32 %v958, 1.0
    %v964 = vadd.f32 %v960, 1.0
    %v965 = vadd.f32 %v962, 1.0
    %v966 = vrcp.pop %v963
    %v967 = vmul.f32 1.0, %v966
    %v968 = vrcp.pop %v964
    %v969 = vmul.f32 1.0, %v968
    %v970 = vrcp.pop %v965
    %v971 = vmul.f32 1.0, %v970
    %v972 = vtanh.pop %v953
    %v973 = vmul.f32 %v969, %v853
    %v974 = vmul.f32 %v967, %v972
    %v975 = vadd.f32 %v973, %v974
    %v976 = vtanh.pop %v975
    %v977 = vmul.f32 %v971, %v976
    %v978 = vpack.c.bf16 %v977, %v977
    %s979 = scalar_lea.vmem [#allocation3], 8
    %980 = vst [vmem:[%s979] sm:$0xf] %v978
    %s981 = smul.u32 3, 4
    %s982 = smul.addr %s981, 4
    %s983 = scalar_lea.vmem [#allocation2], %s982
    %v984 = vld [vmem:[%s983] sm:$0xff]
    %v985 = vld [vmem:[%s983 + $0x8] sm:$0xff]
    %v986 = vunpack.c.l.bf16 %v984
    %v987 = vunpack.c.h.bf16 %v984
    %v988 = vunpack.c.l.bf16 %v985
    %v989 = vunpack.c.h.bf16 %v985
    %990 = vmatprep.subr.bf16.mxu0 %v590
    %991 = vmatpush1.bf16.msra.mxu0 %v589
    %992 = vmatprep.subr.bf16.mxu0 %v586
    %993 = vmatpush1.bf16.msra.mxu0 %v585
    %994 = vmatprep.subr.bf16.mxu0 %v582
    %995 = vmatpush1.bf16.msra.mxu0 %v581
    %996 = vmatprep.subr.bf16.mxu0 %v578
    %997 = vmatpush1.bf16.msra.mxu0 %v577
    %998 = vmatprep.subr.bf16.mxu0 %v574
    %999 = vmatpush1.bf16.msra.mxu0 %v573
    %1000 = vmatprep.subr.bf16.mxu0 %v570
    %1001 = vmatpush1.bf16.msra.mxu0 %v569
    %1002 = vmatprep.subr.bf16.mxu0 %v566
    %1003 = vmatpush1.bf16.msra.mxu0 %v565
    %1004 = vmatprep.subr.bf16.mxu0 %v562
    %1005 = vmatpush1.bf16.msra.mxu0 %v561
    %1006 = vmatprep.subr.bf16.mxu0 0
    %1007 = vmatpush2.bf16.msra.mxu0 0
    %1008 = vmatprep.subr.bf16.mxu0 0
    %1009 = vmatpush2.bf16.msra.mxu0 0
    %1010 = vmatprep.subr.bf16.mxu0 0
    %1011 = vmatpush2.bf16.msra.mxu0 0
    %1012 = vmatprep.subr.bf16.mxu0 0
    %1013 = vmatpush2.bf16.msra.mxu0 0
    %1014 = vmatprep.subr.bf16.mxu0 0
    %1015 = vmatpush2.bf16.msra.mxu0 0
    %1016 = vmatprep.subr.bf16.mxu0 0
    %1017 = vmatpush2.bf16.msra.mxu0 0
    %1018 = vmatprep.subr.bf16.mxu0 0
    %1019 = vmatpush2.bf16.msra.mxu0 0
    %1020 = vmatprep.subr.bf16.mxu0 0
    %1021 = vmatpush2.bf16.msra.mxu0 0
    %1022 = vmatprep.mubr.bf16.mxu0 0
    %1023 = vmatmul.mubr.bf16.gmra.mxu0 %v978
    %v1024 = vpop.f32.mrf.mxu0
    %v1025 = vadd.f32 0.0, %v1024
    %v1026 = vpop.f32.mrf.mxu0
    %v1027 = vadd.f32 0.0, %v1026
    %v1028 = vpop.f32.mrf.mxu0
    %v1029 = vpop.f32.mrf.mxu0
    %1030 = vdwg.mxu0
    %1031 = vmatprep.subr.bf16.mxu0 %v592
    %1032 = vmatpush1.bf16.msra.mxu0 %v591
    %1033 = vmatprep.subr.bf16.mxu0 %v588
    %1034 = vmatpush1.bf16.msra.mxu0 %v587
    %1035 = vmatprep.subr.bf16.mxu0 %v584
    %1036 = vmatpush1.bf16.msra.mxu0 %v583
    %1037 = vmatprep.subr.bf16.mxu0 %v580
    %1038 = vmatpush1.bf16.msra.mxu0 %v579
    %1039 = vmatprep.subr.bf16.mxu0 %v576
    %1040 = vmatpush1.bf16.msra.mxu0 %v575
    %1041 = vmatprep.subr.bf16.mxu0 %v572
    %1042 = vmatpush1.bf16.msra.mxu0 %v571
    %1043 = vmatprep.subr.bf16.mxu0 %v568
    %1044 = vmatpush1.bf16.msra.mxu0 %v567
    %1045 = vmatprep.subr.bf16.mxu0 %v564
    %1046 = vmatpush1.bf16.msra.mxu0 %v563
    %1047 = vmatprep.subr.bf16.mxu0 0
    %1048 = vmatpush2.bf16.msra.mxu0 0
    %1049 = vmatprep.subr.bf16.mxu0 0
    %1050 = vmatpush2.bf16.msra.mxu0 0
    %1051 = vmatprep.subr.bf16.mxu0 0
    %1052 = vmatpush2.bf16.msra.mxu0 0
    %1053 = vmatprep.subr.bf16.mxu0 0
    %1054 = vmatpush2.bf16.msra.mxu0 0
    %1055 = vmatprep.subr.bf16.mxu0 0
    %1056 = vmatpush2.bf16.msra.mxu0 0
    %1057 = vmatprep.subr.bf16.mxu0 0
    %1058 = vmatpush2.bf16.msra.mxu0 0
    %1059 = vmatprep.subr.bf16.mxu0 0
    %1060 = vmatpush2.bf16.msra.mxu0 0
    %1061 = vmatprep.subr.bf16.mxu0 0
    %1062 = vmatpush2.bf16.msra.mxu0 0
    %1063 = vmatprep.mubr.bf16.mxu0 0
    %1064 = vmatmul.mubr.bf16.gmra.mxu0 %v978
    %v1065 = vpop.f32.mrf.mxu0
    %v1066 = vadd.f32 0.0, %v1065
    %v1067 = vpop.f32.mrf.mxu0
    %v1068 = vadd.f32 0.0, %v1067
    %v1069 = vpop.f32.mrf.mxu0
    %v1070 = vpop.f32.mrf.mxu0
    %1071 = vdwg.mxu0
    %v1072 = vadd.f32 %v986, %v1025
    %v1073 = vadd.f32 %v987, %v1027
    %v1074 = vadd.f32 %v988, %v1066
    %v1075 = vadd.f32 %v989, %v1068
    %v1076 = vxor.u32 %v1072, 2147483648
    %v1077 = vxor.u32 %v1073, 2147483648
    %v1078 = vxor.u32 %v1074, 2147483648
    %v1079 = vmul.f32 %v1076, 1.442695
    %v1080 = vpow.pop %v1079
    %v1081 = vmul.f32 %v1077, 1.442695
    %v1082 = vpow.pop %v1081
    %v1083 = vmul.f32 %v1078, 1.442695
    %v1084 = vpow.pop %v1083
    %v1085 = vadd.f32 %v1080, 1.0
    %v1086 = vadd.f32 %v1082, 1.0
    %v1087 = vadd.f32 %v1084, 1.0
    %v1088 = vrcp.pop %v1085
    %v1089 = vmul.f32 1.0, %v1088
    %v1090 = vrcp.pop %v1086
    %v1091 = vmul.f32 1.0, %v1090
    %v1092 = vrcp.pop %v1087
    %v1093 = vmul.f32 1.0, %v1092
    %v1094 = vtanh.pop %v1075
    %v1095 = vmul.f32 %v1091, %v975
    %v1096 = vmul.f32 %v1089, %v1094
    %v1097 = vadd.f32 %v1095, %v1096
    %v1098 = vtanh.pop %v1097
    %v1099 = vmul.f32 %v1093, %v1098
    %v1100 = vpack.c.bf16 %v1099, %v1099
    %s1101 = scalar_lea.vmem [#allocation3], 12
    %1102 = vst [vmem:[%s1101] sm:$0xf] %v1100
    %s1103 = smul.u32 4, 4
    %s1104 = smul.addr %s1103, 4
    %s1105 = scalar_lea.vmem [#allocation2], %s1104
    %v1106 = vld [vmem:[%s1105] sm:$0xff]
    %v1107 = vld [vmem:[%s1105 + $0x8] sm:$0xff]
    %v1108 = vunpack.c.l.bf16 %v1106
    %v1109 = vunpack.c.h.bf16 %v1106
    %v1110 = vunpack.c.l.bf16 %v1107
    %v1111 = vunpack.c.h.bf16 %v1107
    %1112 = vmatprep.subr.bf16.mxu0 %v590
    %1113 = vmatpush1.bf16.msra.mxu0 %v589
    %1114 = vmatprep.subr.bf16.mxu0 %v586
    %1115 = vmatpush1.bf16.msra.mxu0 %v585
    %1116 = vmatprep.subr.bf16.mxu0 %v582
    %1117 = vmatpush1.bf16.msra.mxu0 %v581
    %1118 = vmatprep.subr.bf16.mxu0 %v578
    %1119 = vmatpush1.bf16.msra.mxu0 %v577
    %1120 = vmatprep.subr.bf16.mxu0 %v574
    %1121 = vmatpush1.bf16.msra.mxu0 %v573
    %1122 = vmatprep.subr.bf16.mxu0 %v570
    %1123 = vmatpush1.bf16.msra.mxu0 %v569
    %1124 = vmatprep.subr.bf16.mxu0 %v566
    %1125 = vmatpush1.bf16.msra.mxu0 %v565
    %1126 = vmatprep.subr.bf16.mxu0 %v562
    %1127 = vmatpush1.bf16.msra.mxu0 %v561
    %1128 = vmatprep.subr.bf16.mxu0 0
    %1129 = vmatpush2.bf16.msra.mxu0 0
    %1130 = vmatprep.subr.bf16.mxu0 0
    %1131 = vmatpush2.bf16.msra.mxu0 0
    %1132 = vmatprep.subr.bf16.mxu0 0
    %1133 = vmatpush2.bf16.msra.mxu0 0
    %1134 = vmatprep.subr.bf16.mxu0 0
    %1135 = vmatpush2.bf16.msra.mxu0 0
    %1136 = vmatprep.subr.bf16.mxu0 0
    %1137 = vmatpush2.bf16.msra.mxu0 0
    %1138 = vmatprep.subr.bf16.mxu0 0
    %1139 = vmatpush2.bf16.msra.mxu0 0
    %1140 = vmatprep.subr.bf16.mxu0 0
    %1141 = vmatpush2.bf16.msra.mxu0 0
    %1142 = vmatprep.subr.bf16.mxu0 0
    %1143 = vmatpush2.bf16.msra.mxu0 0
    %1144 = vmatprep.mubr.bf16.mxu0 0
    %1145 = vmatmul.mubr.bf16.gmra.mxu0 %v1100
    %v1146 = vpop.f32.mrf.mxu0
    %v1147 = vadd.f32 0.0, %v1146
    %v1148 = vpop.f32.mrf.mxu0
    %v1149 = vadd.f32 0.0, %v1148
    %v1150 = vpop.f32.mrf.mxu0
    %v1151 = vpop.f32.mrf.mxu0
    %1152 = vdwg.mxu0
    %1153 = vmatprep.subr.bf16.mxu0 %v592
    %1154 = vmatpush1.bf16.msra.mxu0 %v591
    %1155 = vmatprep.subr.bf16.mxu0 %v588
    %1156 = vmatpush1.bf16.msra.mxu0 %v587
    %1157 = vmatprep.subr.bf16.mxu0 %v584
    %1158 = vmatpush1.bf16.msra.mxu0 %v583
    %1159 = vmatprep.subr.bf16.mxu0 %v580
    %1160 = vmatpush1.bf16.msra.mxu0 %v579
    %1161 = vmatprep.subr.bf16.mxu0 %v576
    %1162 = vmatpush1.bf16.msra.mxu0 %v575
    %1163 = vmatprep.subr.bf16.mxu0 %v572
    %1164 = vmatpush1.bf16.msra.mxu0 %v571
    %1165 = vmatprep.subr.bf16.mxu0 %v568
    %1166 = vmatpush1.bf16.msra.mxu0 %v567
    %1167 = vmatprep.subr.bf16.mxu0 %v564
    %1168 = vmatpush1.bf16.msra.mxu0 %v563
    %1169 = vmatprep.subr.bf16.mxu0 0
    %1170 = vmatpush2.bf16.msra.mxu0 0
    %1171 = vmatprep.subr.bf16.mxu0 0
    %1172 = vmatpush2.bf16.msra.mxu0 0
    %1173 = vmatprep.subr.bf16.mxu0 0
    %1174 = vmatpush2.bf16.msra.mxu0 0
    %1175 = vmatprep.subr.bf16.mxu0 0
    %1176 = vmatpush2.bf16.msra.mxu0 0
    %1177 = vmatprep.subr.bf16.mxu0 0
    %1178 = vmatpush2.bf16.msra.mxu0 0
    %1179 = vmatprep.subr.bf16.mxu0 0
    %1180 = vmatpush2.bf16.msra.mxu0 0
    %1181 = vmatprep.subr.bf16.mxu0 0
    %1182 = vmatpush2.bf16.msra.mxu0 0
    %1183 = vmatprep.subr.bf16.mxu0 0
    %1184 = vmatpush2.bf16.msra.mxu0 0
    %1185 = vmatprep.mubr.bf16.mxu0 0
    %1186 = vmatmul.mubr.bf16.gmra.mxu0 %v1100
    %v1187 = vpop.f32.mrf.mxu0
    %v1188 = vadd.f32 0.0, %v1187
    %v1189 = vpop.f32.mrf.mxu0
    %v1190 = vadd.f32 0.0, %v1189
    %v1191 = vpop.f32.mrf.mxu0
    %v1192 = vpop.f32.mrf.mxu0
    %1193 = vdwg.mxu0
    %v1194 = vadd.f32 %v1108, %v1147
    %v1195 = vadd.f32 %v1109, %v1149
    %v1196 = vadd.f32 %v1110, %v1188
    %v1197 = vadd.f32 %v1111, %v1190
    %v1198 = vxor.u32 %v1194, 2147483648
    %v1199 = vxor.u32 %v1195, 2147483648
    %v1200 = vxor.u32 %v1196, 2147483648
    %v1201 = vmul.f32 %v1198, 1.442695
    %v1202 = vpow.pop %v1201
    %v1203 = vmul.f32 %v1199, 1.442695
    %v1204 = vpow.pop %v1203
    %v1205 = vmul.f32 %v1200, 1.442695
    %v1206 = vpow.pop %v1205
    %v1207 = vadd.f32 %v1202, 1.0
    %v1208 = vadd.f32 %v1204, 1.0
    %v1209 = vadd.f32 %v1206, 1.0
    %v1210 = vrcp.pop %v1207
    %v1211 = vmul.f32 1.0, %v1210
    %v1212 = vrcp.pop %v1208
    %v1213 = vmul.f32 1.0, %v1212
    %v1214 = vrcp.pop %v1209
    %v1215 = vmul.f32 1.0, %v1214
    %v1216 = vtanh.pop %v1197
    %v1217 = vmul.f32 %v1213, %v1097
    %v1218 = vmul.f32 %v1211, %v1216
    %v1219 = vadd.f32 %v1217, %v1218
    %v1220 = vtanh.pop %v1219
    %v1221 = vmul.f32 %v1215, %v1220
    %v1222 = vpack.c.bf16 %v1221, %v1221
    %s1223 = scalar_lea.vmem [#allocation3], 16
    %1224 = vst [vmem:[%s1223] sm:$0xf] %v1222
    %s1225 = smul.u32 5, 4
    %s1226 = smul.addr %s1225, 4
    %s1227 = scalar_lea.vmem [#allocation2], %s1226
    %v1228 = vld [vmem:[%s1227] sm:$0xff]
    %v1229 = vld [vmem:[%s1227 + $0x8] sm:$0xff]
    %v1230 = vunpack.c.l.bf16 %v1228
    %v1231 = vunpack.c.h.bf16 %v1228
    %v1232 = vunpack.c.l.bf16 %v1229
    %v1233 = vunpack.c.h.bf16 %v1229
    %1234 = vmatprep.subr.bf16.mxu0 %v590
    %1235 = vmatpush1.bf16.msra.mxu0 %v589
    %1236 = vmatprep.subr.bf16.mxu0 %v586
    %1237 = vmatpush1.bf16.msra.mxu0 %v585
    %1238 = vmatprep.subr.bf16.mxu0 %v582
    %1239 = vmatpush1.bf16.msra.mxu0 %v581
    %1240 = vmatprep.subr.bf16.mxu0 %v578
    %1241 = vmatpush1.bf16.msra.mxu0 %v577
    %1242 = vmatprep.subr.bf16.mxu0 %v574
    %1243 = vmatpush1.bf16.msra.mxu0 %v573
    %1244 = vmatprep.subr.bf16.mxu0 %v570
    %1245 = vmatpush1.bf16.msra.mxu0 %v569
    %1246 = vmatprep.subr.bf16.mxu0 %v566
    %1247 = vmatpush1.bf16.msra.mxu0 %v565
    %1248 = vmatprep.subr.bf16.mxu0 %v562
    %1249 = vmatpush1.bf16.msra.mxu0 %v561
    %1250 = vmatprep.subr.bf16.mxu0 0
    %1251 = vmatpush2.bf16.msra.mxu0 0
    %1252 = vmatprep.subr.bf16.mxu0 0
    %1253 = vmatpush2.bf16.msra.mxu0 0
    %1254 = vmatprep.subr.bf16.mxu0 0
    %1255 = vmatpush2.bf16.msra.mxu0 0
    %1256 = vmatprep.subr.bf16.mxu0 0
    %1257 = vmatpush2.bf16.msra.mxu0 0
    %1258 = vmatprep.subr.bf16.mxu0 0
    %1259 = vmatpush2.bf16.msra.mxu0 0
    %1260 = vmatprep.subr.bf16.mxu0 0
    %1261 = vmatpush2.bf16.msra.mxu0 0
    %1262 = vmatprep.subr.bf16.mxu0 0
    %1263 = vmatpush2.bf16.msra.mxu0 0
    %1264 = vmatprep.subr.bf16.mxu0 0
    %1265 = vmatpush2.bf16.msra.mxu0 0
    %1266 = vmatprep.mubr.bf16.mxu0 0
    %1267 = vmatmul.mubr.bf16.gmra.mxu0 %v1222
    %v1268 = vpop.f32.mrf.mxu0
    %v1269 = vadd.f32 0.0, %v1268
    %v1270 = vpop.f32.mrf.mxu0
    %v1271 = vadd.f32 0.0, %v1270
    %v1272 = vpop.f32.mrf.mxu0
    %v1273 = vpop.f32.mrf.mxu0
    %1274 = vdwg.mxu0
    %1275 = vmatprep.subr.bf16.mxu0 %v592
    %1276 = vmatpush1.bf16.msra.mxu0 %v591
    %1277 = vmatprep.subr.bf16.mxu0 %v588
    %1278 = vmatpush1.bf16.msra.mxu0 %v587
    %1279 = vmatprep.subr.bf16.mxu0 %v584
    %1280 = vmatpush1.bf16.msra.mxu0 %v583
    %1281 = vmatprep.subr.bf16.mxu0 %v580
    %1282 = vmatpush1.bf16.msra.mxu0 %v579
    %1283 = vmatprep.subr.bf16.mxu0 %v576
    %1284 = vmatpush1.bf16.msra.mxu0 %v575
    %1285 = vmatprep.subr.bf16.mxu0 %v572
    %1286 = vmatpush1.bf16.msra.mxu0 %v571
    %1287 = vmatprep.subr.bf16.mxu0 %v568
    %1288 = vmatpush1.bf16.msra.mxu0 %v567
    %1289 = vmatprep.subr.bf16.mxu0 %v564
    %1290 = vmatpush1.bf16.msra.mxu0 %v563
    %1291 = vmatprep.subr.bf16.mxu0 0
    %1292 = vmatpush2.bf16.msra.mxu0 0
    %1293 = vmatprep.subr.bf16.mxu0 0
    %1294 = vmatpush2.bf16.msra.mxu0 0
    %1295 = vmatprep.subr.bf16.mxu0 0
    %1296 = vmatpush2.bf16.msra.mxu0 0
    %1297 = vmatprep.subr.bf16.mxu0 0
    %1298 = vmatpush2.bf16.msra.mxu0 0
    %1299 = vmatprep.subr.bf16.mxu0 0
    %1300 = vmatpush2.bf16.msra.mxu0 0
    %1301 = vmatprep.subr.bf16.mxu0 0
    %1302 = vmatpush2.bf16.msra.mxu0 0
    %1303 = vmatprep.subr.bf16.mxu0 0
    %1304 = vmatpush2.bf16.msra.mxu0 0
    %1305 = vmatprep.subr.bf16.mxu0 0
    %1306 = vmatpush2.bf16.msra.mxu0 0
    %1307 = vmatprep.mubr.bf16.mxu0 0
    %1308 = vmatmul.mubr.bf16.gmra.mxu0 %v1222
    %v1309 = vpop.f32.mrf.mxu0
    %v1310 = vadd.f32 0.0, %v1309
    %v1311 = vpop.f32.mrf.mxu0
    %v1312 = vadd.f32 0.0, %v1311
    %v1313 = vpop.f32.mrf.mxu0
    %v1314 = vpop.f32.mrf.mxu0
    %1315 = vdwg.mxu0
    %v1316 = vadd.f32 %v1230, %v1269
    %v1317 = vadd.f32 %v1231, %v1271
    %v1318 = vadd.f32 %v1232, %v1310
    %v1319 = vadd.f32 %v1233, %v1312
    %v1320 = vxor.u32 %v1316, 2147483648
    %v1321 = vxor.u32 %v1317, 2147483648
    %v1322 = vxor.u32 %v1318, 2147483648
    %v1323 = vmul.f32 %v1320, 1.442695
    %v1324 = vpow.pop %v1323
    %v1325 = vmul.f32 %v1321, 1.442695
    %v1326 = vpow.pop %v1325
    %v1327 = vmul.f32 %v1322, 1.442695
    %v1328 = vpow.pop %v1327
    %v1329 = vadd.f32 %v1324, 1.0
    %v1330 = vadd.f32 %v1326, 1.0
    %v1331 = vadd.f32 %v1328, 1.0
    %v1332 = vrcp.pop %v1329
    %v1333 = vmul.f32 1.0, %v1332
    %v1334 = vrcp.pop %v1330
    %v1335 = vmul.f32 1.0, %v1334
    %v1336 = vrcp.pop %v1331
    %v1337 = vmul.f32 1.0, %v1336
    %v1338 = vtanh.pop %v1319
    %v1339 = vmul.f32 %v1335, %v1219
    %v1340 = vmul.f32 %v1333, %v1338
    %v1341 = vadd.f32 %v1339, %v1340
    %v1342 = vtanh.pop %v1341
    %v1343 = vmul.f32 %v1337, %v1342
    %v1344 = vpack.c.bf16 %v1343, %v1343
    %s1345 = scalar_lea.vmem [#allocation3], 20
    %1346 = vst [vmem:[%s1345] sm:$0xf] %v1344
    %s1347 = smul.u32 6, 4
    %s1348 = smul.addr %s1347, 4
    %s1349 = scalar_lea.vmem [#allocation2], %s1348
    %v1350 = vld [vmem:[%s1349] sm:$0xff]
    %v1351 = vld [vmem:[%s1349 + $0x8] sm:$0xff]
    %v1352 = vunpack.c.l.bf16 %v1350
    %v1353 = vunpack.c.h.bf16 %v1350
    %v1354 = vunpack.c.l.bf16 %v1351
    %v1355 = vunpack.c.h.bf16 %v1351
    %1356 = vmatprep.subr.bf16.mxu0 %v590
    %1357 = vmatpush1.bf16.msra.mxu0 %v589
    %1358 = vmatprep.subr.bf16.mxu0 %v586
    %1359 = vmatpush1.bf16.msra.mxu0 %v585
    %1360 = vmatprep.subr.bf16.mxu0 %v582
    %1361 = vmatpush1.bf16.msra.mxu0 %v581
    %1362 = vmatprep.subr.bf16.mxu0 %v578
    %1363 = vmatpush1.bf16.msra.mxu0 %v577
    %1364 = vmatprep.subr.bf16.mxu0 %v574
    %1365 = vmatpush1.bf16.msra.mxu0 %v573
    %1366 = vmatprep.subr.bf16.mxu0 %v570
    %1367 = vmatpush1.bf16.msra.mxu0 %v569
    %1368 = vmatprep.subr.bf16.mxu0 %v566
    %1369 = vmatpush1.bf16.msra.mxu0 %v565
    %1370 = vmatprep.subr.bf16.mxu0 %v562
    %1371 = vmatpush1.bf16.msra.mxu0 %v561
    %1372 = vmatprep.subr.bf16.mxu0 0
    %1373 = vmatpush2.bf16.msra.mxu0 0
    %1374 = vmatprep.subr.bf16.mxu0 0
    %1375 = vmatpush2.bf16.msra.mxu0 0
    %1376 = vmatprep.subr.bf16.mxu0 0
    %1377 = vmatpush2.bf16.msra.mxu0 0
    %1378 = vmatprep.subr.bf16.mxu0 0
    %1379 = vmatpush2.bf16.msra.mxu0 0
    %1380 = vmatprep.subr.bf16.mxu0 0
    %1381 = vmatpush2.bf16.msra.mxu0 0
    %1382 = vmatprep.subr.bf16.mxu0 0
    %1383 = vmatpush2.bf16.msra.mxu0 0
    %1384 = vmatprep.subr.bf16.mxu0 0
    %1385 = vmatpush2.bf16.msra.mxu0 0
    %1386 = vmatprep.subr.bf16.mxu0 0
    %1387 = vmatpush2.bf16.msra.mxu0 0
    %1388 = vmatprep.mubr.bf16.mxu0 0
    %1389 = vmatmul.mubr.bf16.gmra.mxu0 %v1344
    %v1390 = vpop.f32.mrf.mxu0
    %v1391 = vadd.f32 0.0, %v1390
    %v1392 = vpop.f32.mrf.mxu0
    %v1393 = vadd.f32 0.0, %v1392
    %v1394 = vpop.f32.mrf.mxu0
    %v1395 = vpop.f32.mrf.mxu0
    %1396 = vdwg.mxu0
    %1397 = vmatprep.subr.bf16.mxu0 %v592
    %1398 = vmatpush1.bf16.msra.mxu0 %v591
    %1399 = vmatprep.subr.bf16.mxu0 %v588
    %1400 = vmatpush1.bf16.msra.mxu0 %v587
    %1401 = vmatprep.subr.bf16.mxu0 %v584
    %1402 = vmatpush1.bf16.msra.mxu0 %v583
    %1403 = vmatprep.subr.bf16.mxu0 %v580
    %1404 = vmatpush1.bf16.msra.mxu0 %v579
    %1405 = vmatprep.subr.bf16.mxu0 %v576
    %1406 = vmatpush1.bf16.msra.mxu0 %v575
    %1407 = vmatprep.subr.bf16.mxu0 %v572
    %1408 = vmatpush1.bf16.msra.mxu0 %v571
    %1409 = vmatprep.subr.bf16.mxu0 %v568
    %1410 = vmatpush1.bf16.msra.mxu0 %v567
    %1411 = vmatprep.subr.bf16.mxu0 %v564
    %1412 = vmatpush1.bf16.msra.mxu0 %v563
    %1413 = vmatprep.subr.bf16.mxu0 0
    %1414 = vmatpush2.bf16.msra.mxu0 0
    %1415 = vmatprep.subr.bf16.mxu0 0
    %1416 = vmatpush2.bf16.msra.mxu0 0
    %1417 = vmatprep.subr.bf16.mxu0 0
    %1418 = vmatpush2.bf16.msra.mxu0 0
    %1419 = vmatprep.subr.bf16.mxu0 0
    %1420 = vmatpush2.bf16.msra.mxu0 0
    %1421 = vmatprep.subr.bf16.mxu0 0
    %1422 = vmatpush2.bf16.msra.mxu0 0
    %1423 = vmatprep.subr.bf16.mxu0 0
    %1424 = vmatpush2.bf16.msra.mxu0 0
    %1425 = vmatprep.subr.bf16.mxu0 0
    %1426 = vmatpush2.bf16.msra.mxu0 0
    %1427 = vmatprep.subr.bf16.mxu0 0
    %1428 = vmatpush2.bf16.msra.mxu0 0
    %1429 = vmatprep.mubr.bf16.mxu0 0
    %1430 = vmatmul.mubr.bf16.gmra.mxu0 %v1344
    %v1431 = vpop.f32.mrf.mxu0
    %v1432 = vadd.f32 0.0, %v1431
    %v1433 = vpop.f32.mrf.mxu0
    %v1434 = vadd.f32 0.0, %v1433
    %v1435 = vpop.f32.mrf.mxu0
    %v1436 = vpop.f32.mrf.mxu0
    %1437 = vdwg.mxu0
    %v1438 = vadd.f32 %v1352, %v1391
    %v1439 = vadd.f32 %v1353, %v1393
    %v1440 = vadd.f32 %v1354, %v1432
    %v1441 = vadd.f32 %v1355, %v1434
    %v1442 = vxor.u32 %v1438, 2147483648
    %v1443 = vxor.u32 %v1439, 2147483648
    %v1444 = vxor.u32 %v1440, 2147483648
    %v1445 = vmul.f32 %v1442, 1.442695
    %v1446 = vpow.pop %v1445
    %v1447 = vmul.f32 %v1443, 1.442695
    %v1448 = vpow.pop %v1447
    %v1449 = vmul.f32 %v1444, 1.442695
    %v1450 = vpow.pop %v1449
    %v1451 = vadd.f32 %v1446, 1.0
    %v1452 = vadd.f32 %v1448, 1.0
    %v1453 = vadd.f32 %v1450, 1.0
    %v1454 = vrcp.pop %v1451
    %v1455 = vmul.f32 1.0, %v1454
    %v1456 = vrcp.pop %v1452
    %v1457 = vmul.f32 1.0, %v1456
    %v1458 = vrcp.pop %v1453
    %v1459 = vmul.f32 1.0, %v1458
    %v1460 = vtanh.pop %v1441
    %v1461 = vmul.f32 %v1457, %v1341
    %v1462 = vmul.f32 %v1455, %v1460
    %v1463 = vadd.f32 %v1461, %v1462
    %v1464 = vtanh.pop %v1463
    %v1465 = vmul.f32 %v1459, %v1464
    %v1466 = vpack.c.bf16 %v1465, %v1465
    %s1467 = scalar_lea.vmem [#allocation3], 24
    %1468 = vst [vmem:[%s1467] sm:$0xf] %v1466
    %s1469 = smul.u32 7, 4
    %s1470 = smul.addr %s1469, 4
    %s1471 = scalar_lea.vmem [#allocation2], %s1470
    %v1472 = vld [vmem:[%s1471] sm:$0xff]
    %v1473 = vld [vmem:[%s1471 + $0x8] sm:$0xff]
    %v1474 = vunpack.c.l.bf16 %v1472
    %v1475 = vunpack.c.h.bf16 %v1472
    %v1476 = vunpack.c.l.bf16 %v1473
    %v1477 = vunpack.c.h.bf16 %v1473
    %1478 = vmatprep.subr.bf16.mxu0 %v590
    %1479 = vmatpush1.bf16.msra.mxu0 %v589
    %1480 = vmatprep.subr.bf16.mxu0 %v586
    %1481 = vmatpush1.bf16.msra.mxu0 %v585
    %1482 = vmatprep.subr.bf16.mxu0 %v582
    %1483 = vmatpush1.bf16.msra.mxu0 %v581
    %1484 = vmatprep.subr.bf16.mxu0 %v578
    %1485 = vmatpush1.bf16.msra.mxu0 %v577
    %1486 = vmatprep.subr.bf16.mxu0 %v574
    %1487 = vmatpush1.bf16.msra.mxu0 %v573
    %1488 = vmatprep.subr.bf16.mxu0 %v570
    %1489 = vmatpush1.bf16.msra.mxu0 %v569
    %1490 = vmatprep.subr.bf16.mxu0 %v566
    %1491 = vmatpush1.bf16.msra.mxu0 %v565
    %1492 = vmatprep.subr.bf16.mxu0 %v562
    %1493 = vmatpush1.bf16.msra.mxu0 %v561
    %1494 = vmatprep.subr.bf16.mxu0 0
    %1495 = vmatpush2.bf16.msra.mxu0 0
    %1496 = vmatprep.subr.bf16.mxu0 0
    %1497 = vmatpush2.bf16.msra.mxu0 0
    %1498 = vmatprep.subr.bf16.mxu0 0
    %1499 = vmatpush2.bf16.msra.mxu0 0
    %1500 = vmatprep.subr.bf16.mxu0 0
    %1501 = vmatpush2.bf16.msra.mxu0 0
    %1502 = vmatprep.subr.bf16.mxu0 0
    %1503 = vmatpush2.bf16.msra.mxu0 0
    %1504 = vmatprep.subr.bf16.mxu0 0
    %1505 = vmatpush2.bf16.msra.mxu0 0
    %1506 = vmatprep.subr.bf16.mxu0 0
    %1507 = vmatpush2.bf16.msra.mxu0 0
    %1508 = vmatprep.subr.bf16.mxu0 0
    %1509 = vmatpush2.bf16.msra.mxu0 0
    %1510 = vmatprep.mubr.bf16.mxu0 0
    %1511 = vmatmul.mubr.bf16.gmra.mxu0 %v1466
    %v1512 = vpop.f32.mrf.mxu0
    %v1513 = vadd.f32 0.0, %v1512
    %v1514 = vpop.f32.mrf.mxu0
    %v1515 = vadd.f32 0.0, %v1514
    %v1516 = vpop.f32.mrf.mxu0
    %v1517 = vpop.f32.mrf.mxu0
    %1518 = vdwg.mxu0
    %1519 = vmatprep.subr.bf16.mxu0 %v592
    %1520 = vmatpush1.bf16.msra.mxu0 %v591
    %1521 = vmatprep.subr.bf16.mxu0 %v588
    %1522 = vmatpush1.bf16.msra.mxu0 %v587
    %1523 = vmatprep.subr.bf16.mxu0 %v584
    %1524 = vmatpush1.bf16.msra.mxu0 %v583
    %1525 = vmatprep.subr.bf16.mxu0 %v580
    %1526 = vmatpush1.bf16.msra.mxu0 %v579
    %1527 = vmatprep.subr.bf16.mxu0 %v576
    %1528 = vmatpush1.bf16.msra.mxu0 %v575
    %1529 = vmatprep.subr.bf16.mxu0 %v572
    %1530 = vmatpush1.bf16.msra.mxu0 %v571
    %1531 = vmatprep.subr.bf16.mxu0 %v568
    %1532 = vmatpush1.bf16.msra.mxu0 %v567
    %1533 = vmatprep.subr.bf16.mxu0 %v564
    %1534 = vmatpush1.bf16.msra.mxu0 %v563
    %1535 = vmatprep.subr.bf16.mxu0 0
    %1536 = vmatpush2.bf16.msra.mxu0 0
    %1537 = vmatprep.subr.bf16.mxu0 0
    %1538 = vmatpush2.bf16.msra.mxu0 0
    %1539 = vmatprep.subr.bf16.mxu0 0
    %1540 = vmatpush2.bf16.msra.mxu0 0
    %1541 = vmatprep.subr.bf16.mxu0 0
    %1542 = vmatpush2.bf16.msra.mxu0 0
    %1543 = vmatprep.subr.bf16.mxu0 0
    %1544 = vmatpush2.bf16.msra.mxu0 0
    %1545 = vmatprep.subr.bf16.mxu0 0
    %1546 = vmatpush2.bf16.msra.mxu0 0
    %1547 = vmatprep.subr.bf16.mxu0 0
    %1548 = vmatpush2.bf16.msra.mxu0 0
    %1549 = vmatprep.subr.bf16.mxu0 0
    %1550 = vmatpush2.bf16.msra.mxu0 0
    %1551 = vmatprep.mubr.bf16.mxu0 0
    %1552 = vmatmul.mubr.bf16.gmra.mxu0 %v1466
    %v1553 = vpop.f32.mrf.mxu0
    %v1554 = vadd.f32 0.0, %v1553
    %v1555 = vpop.f32.mrf.mxu0
    %v1556 = vadd.f32 0.0, %v1555
    %v1557 = vpop.f32.mrf.mxu0
    %v1558 = vpop.f32.mrf.mxu0
    %1559 = vdwg.mxu0
    %v1560 = vadd.f32 %v1474, %v1513
    %v1561 = vadd.f32 %v1475, %v1515
    %v1562 = vadd.f32 %v1476, %v1554
    %v1563 = vadd.f32 %v1477, %v1556
    %v1564 = vxor.u32 %v1560, 2147483648
    %v1565 = vxor.u32 %v1561, 2147483648
    %v1566 = vxor.u32 %v1562, 2147483648
    %v1567 = vmul.f32 %v1564, 1.442695
    %v1568 = vpow.pop %v1567
    %v1569 = vmul.f32 %v1565, 1.442695
    %v1570 = vpow.pop %v1569
    %v1571 = vmul.f32 %v1566, 1.442695
    %v1572 = vpow.pop %v1571
    %v1573 = vadd.f32 %v1568, 1.0
    %v1574 = vadd.f32 %v1570, 1.0
    %v1575 = vadd.f32 %v1572, 1.0
    %v1576 = vrcp.pop %v1573
    %v1577 = vmul.f32 1.0, %v1576
    %v1578 = vrcp.pop %v1574
    %v1579 = vmul.f32 1.0, %v1578
    %v1580 = vrcp.pop %v1575
    %v1581 = vmul.f32 1.0, %v1580
    %v1582 = vtanh.pop %v1563
    %v1583 = vmul.f32 %v1579, %v1463
    %v1584 = vmul.f32 %v1577, %v1582
    %v1585 = vadd.f32 %v1583, %v1584
    %v1586 = vtanh.pop %v1585
    %v1587 = vmul.f32 %v1581, %v1586
    %v1588 = vpack.c.bf16 %v1587, %v1587
    %s1589 = scalar_lea.vmem [#allocation3], 28
    %1590 = vst [vmem:[%s1589] sm:$0xf] %v1588
    %v1591 = vld [vmem:[#allocation7] sm:$0xff]
    %v1592 = vld [vmem:[#allocation7 + $0x8] sm:$0xff]
    %v1593 = vld [vmem:[#allocation7 + $0x10] sm:$0xff]
    %v1594 = vld [vmem:[#allocation7 + $0x18] sm:$0xff]
    %v1595 = vld [vmem:[#allocation7 + $0x20] sm:$0xff]
    %v1596 = vld [vmem:[#allocation7 + $0x28] sm:$0xff]
    %v1597 = vld [vmem:[#allocation7 + $0x30] sm:$0xff]
    %v1598 = vld [vmem:[#allocation7 + $0x38] sm:$0xff]
    %v1599 = vld [vmem:[#allocation7 + $0x40] sm:$0xff]
    %v1600 = vld [vmem:[#allocation7 + $0x48] sm:$0xff]
    %v1601 = vld [vmem:[#allocation7 + $0x50] sm:$0xff]
    %v1602 = vld [vmem:[#allocation7 + $0x58] sm:$0xff]
    %v1603 = vld [vmem:[#allocation7 + $0x60] sm:$0xff]
    %v1604 = vld [vmem:[#allocation7 + $0x68] sm:$0xff]
    %v1605 = vld [vmem:[#allocation7 + $0x70] sm:$0xff]
    %v1606 = vld [vmem:[#allocation7 + $0x78] sm:$0xff]
    %v1607 = vld [vmem:[#allocation7 + $0x80] sm:$0xff]
    %v1608 = vld [vmem:[#allocation7 + $0x88] sm:$0xff]
    %v1609 = vld [vmem:[#allocation7 + $0x90] sm:$0xff]
    %v1610 = vld [vmem:[#allocation7 + $0x98] sm:$0xff]
    %v1611 = vld [vmem:[#allocation7 + $0xa0] sm:$0xff]
    %v1612 = vld [vmem:[#allocation7 + $0xa8] sm:$0xff]
    %v1613 = vld [vmem:[#allocation7 + $0xb0] sm:$0xff]
    %v1614 = vld [vmem:[#allocation7 + $0xb8] sm:$0xff]
    %v1615 = vld [vmem:[#allocation7 + $0xc0] sm:$0xff]
    %v1616 = vld [vmem:[#allocation7 + $0xc8] sm:$0xff]
    %v1617 = vld [vmem:[#allocation7 + $0xd0] sm:$0xff]
    %v1618 = vld [vmem:[#allocation7 + $0xd8] sm:$0xff]
    %v1619 = vld [vmem:[#allocation7 + $0xe0] sm:$0xff]
    %v1620 = vld [vmem:[#allocation7 + $0xe8] sm:$0xff]
    %v1621 = vld [vmem:[#allocation7 + $0xf0] sm:$0xff]
    %v1622 = vld [vmem:[#allocation7 + $0xf8] sm:$0xff]
    %v1623 = vld [vmem:[#allocation9] sm:$0xff]
    %v1624 = vld [vmem:[#allocation9 + $0x8] sm:$0xff]
    %v1625 = vld [vmem:[#allocation9 + $0x10] sm:$0xff]
    %v1626 = vld [vmem:[#allocation9 + $0x18] sm:$0xff]
    %v1627 = vld [vmem:[#allocation9 + $0x20] sm:$0xff]
    %v1628 = vld [vmem:[#allocation9 + $0x28] sm:$0xff]
    %v1629 = vld [vmem:[#allocation9 + $0x30] sm:$0xff]
    %v1630 = vld [vmem:[#allocation9 + $0x38] sm:$0xff]
    %v1631 = vld [vmem:[#allocation9 + $0x40] sm:$0xff]
    %v1632 = vld [vmem:[#allocation9 + $0x48] sm:$0xff]
    %v1633 = vld [vmem:[#allocation9 + $0x50] sm:$0xff]
    %v1634 = vld [vmem:[#allocation9 + $0x58] sm:$0xff]
    %v1635 = vld [vmem:[#allocation9 + $0x60] sm:$0xff]
    %v1636 = vld [vmem:[#allocation9 + $0x68] sm:$0xff]
    %v1637 = vld [vmem:[#allocation9 + $0x70] sm:$0xff]
    %v1638 = vld [vmem:[#allocation9 + $0x78] sm:$0xff]
    %v1639 = vld [vmem:[#allocation9 + $0x80] sm:$0xff]
    %v1640 = vld [vmem:[#allocation9 + $0x88] sm:$0xff]
    %v1641 = vld [vmem:[#allocation9 + $0x90] sm:$0xff]
    %v1642 = vld [vmem:[#allocation9 + $0x98] sm:$0xff]
    %v1643 = vld [vmem:[#allocation9 + $0xa0] sm:$0xff]
    %v1644 = vld [vmem:[#allocation9 + $0xa8] sm:$0xff]
    %v1645 = vld [vmem:[#allocation9 + $0xb0] sm:$0xff]
    %v1646 = vld [vmem:[#allocation9 + $0xb8] sm:$0xff]
    %v1647 = vld [vmem:[#allocation9 + $0xc0] sm:$0xff]
    %v1648 = vld [vmem:[#allocation9 + $0xc8] sm:$0xff]
    %v1649 = vld [vmem:[#allocation9 + $0xd0] sm:$0xff]
    %v1650 = vld [vmem:[#allocation9 + $0xd8] sm:$0xff]
    %v1651 = vld [vmem:[#allocation9 + $0xe0] sm:$0xff]
    %v1652 = vld [vmem:[#allocation9 + $0xe8] sm:$0xff]
    %v1653 = vld [vmem:[#allocation9 + $0xf0] sm:$0xff]
    %v1654 = vld [vmem:[#allocation9 + $0xf8] sm:$0xff]
    %v1655 = vld [vmem:[%s7] sm:$0xf]
    %v1656 = vld [vmem:[#allocation3] sm:$0xf]
    %v1657 = vld [vmem:[#allocation3 + $0x4] sm:$0xf]
    %v1658 = vld [vmem:[#allocation3 + $0x8] sm:$0xf]
    %v1659 = vld [vmem:[#allocation3 + $0xc] sm:$0xf]
    %v1660 = vld [vmem:[#allocation3 + $0x10] sm:$0xf]
    %v1661 = vld [vmem:[#allocation3 + $0x14] sm:$0xf]
    %v1662 = vld [vmem:[#allocation3 + $0x18] sm:$0xf]
    %v1663 = vld [vmem:[#allocation3 + $0x1c] sm:$0xf]
    %v1665 = vlaneseq
    %v1666 = vshrl.u32 %v1665, 7
    %v1667 = vsub.s32 0, %v1666
    %v1668 = vrot.slane %v1655, %v1667
    %v1669 = vlaneseq
    %v1670 = vshrl.u32 %v1669, 7
    %v1671 = vsub.s32 1, %v1670
    %v1672 = vrot.slane %v1655, %v1671
    %v1673 = vlaneseq
    %v1674 = vshrl.u32 %v1673, 7
    %v1675 = vsub.s32 2, %v1674
    %v1676 = vrot.slane %v1655, %v1675
    %v1677 = vlaneseq
    %v1678 = vshrl.u32 %v1677, 7
    %v1679 = vsub.s32 3, %v1678
    %v1680 = vrot.slane %v1655, %v1679
    %v1693 = vunpack.c.l.b16 %v1656
    %v1694 = vunpack.c.l.b16 %v1657
    %v1695 = vunpack.c.l.b16 %v1658
    %v1696 = vunpack.c.l.b16 %v1659
    %v1697 = vunpack.c.l.b16 %v1660
    %v1698 = vunpack.c.l.b16 %v1661
    %v1699 = vunpack.c.l.b16 %v1662
    %v1700 = vunpack.c.l.b16 %v1663
    %v1701 = vpack.c.b16 %v1694, %v1693
    %v1702 = vpack.c.b16 %v1696, %v1695
    %v1703 = vpack.c.b16 %v1698, %v1697
    %v1704 = vpack.c.b16 %v1700, %v1699
    %v1741 = vunpack.c.l.b16 %v1591
    %v1742 = vunpack.c.h.b16 %v1591
    %v1743 = vunpack.c.l.b16 %v1592
    %v1744 = vunpack.c.h.b16 %v1592
    %v1745 = vunpack.c.l.b16 %v1593
    %v1746 = vunpack.c.h.b16 %v1593
    %v1747 = vunpack.c.l.b16 %v1594
    %v1748 = vunpack.c.h.b16 %v1594
    %v1749 = vunpack.c.l.b16 %v1595
    %v1750 = vunpack.c.h.b16 %v1595
    %v1751 = vunpack.c.l.b16 %v1596
    %v1752 = vunpack.c.h.b16 %v1596
    %v1753 = vunpack.c.l.b16 %v1597
    %v1754 = vunpack.c.h.b16 %v1597
    %v1755 = vunpack.c.l.b16 %v1598
    %v1756 = vunpack.c.h.b16 %v1598
    %v1757 = vunpack.c.l.b16 %v1599
    %v1758 = vunpack.c.h.b16 %v1599
    %v1759 = vunpack.c.l.b16 %v1600
    %v1760 = vunpack.c.h.b16 %v1600
    %v1761 = vunpack.c.l.b16 %v1601
    %v1762 = vunpack.c.h.b16 %v1601
    %v1763 = vunpack.c.l.b16 %v1602
    %v1764 = vunpack.c.h.b16 %v1602
    %v1765 = vunpack.c.l.b16 %v1603
    %v1766 = vunpack.c.h.b16 %v1603
    %v1767 = vunpack.c.l.b16 %v1604
    %v1768 = vunpack.c.h.b16 %v1604
    %v1769 = vunpack.c.l.b16 %v1605
    %v1770 = vunpack.c.h.b16 %v1605
    %v1771 = vunpack.c.l.b16 %v1606
    %v1772 = vunpack.c.h.b16 %v1606
    %v1773 = vunpack.c.l.b16 %v1607
    %v1774 = vunpack.c.h.b16 %v1607
    %v1775 = vunpack.c.l.b16 %v1608
    %v1776 = vunpack.c.h.b16 %v1608
    %v1777 = vunpack.c.l.b16 %v1609
    %v1778 = vunpack.c.h.b16 %v1609
    %v1779 = vunpack.c.l.b16 %v1610
    %v1780 = vunpack.c.h.b16 %v1610
    %v1781 = vunpack.c.l.b16 %v1611
    %v1782 = vunpack.c.h.b16 %v1611
    %v1783 = vunpack.c.l.b16 %v1612
    %v1784 = vunpack.c.h.b16 %v1612
    %v1785 = vunpack.c.l.b16 %v1613
    %v1786 = vunpack.c.h.b16 %v1613
    %v1787 = vunpack.c.l.b16 %v1614
    %v1788 = vunpack.c.h.b16 %v1614
    %v1789 = vunpack.c.l.b16 %v1615
    %v1790 = vunpack.c.h.b16 %v1615
    %v1791 = vunpack.c.l.b16 %v1616
    %v1792 = vunpack.c.h.b16 %v1616
    %v1793 = vunpack.c.l.b16 %v1617
    %v1794 = vunpack.c.h.b16 %v1617
    %v1795 = vunpack.c.l.b16 %v1618
    %v1796 = vunpack.c.h.b16 %v1618
    %v1797 = vunpack.c.l.b16 %v1619
    %v1798 = vunpack.c.h.b16 %v1619
    %v1799 = vunpack.c.l.b16 %v1620
    %v1800 = vunpack.c.h.b16 %v1620
    %v1801 = vunpack.c.l.b16 %v1621
    %v1802 = vunpack.c.h.b16 %v1621
    %v1803 = vunpack.c.l.b16 %v1622
    %v1804 = vunpack.c.h.b16 %v1622
    %v1805 = vpack.c.b16 %v1745, %v1741
    %v1806 = vpack.c.b16 %v1746, %v1742
    %v1807 = vpack.c.b16 %v1747, %v1743
    %v1808 = vpack.c.b16 %v1748, %v1744
    %v1809 = vpack.c.b16 %v1753, %v1749
    %v1810 = vpack.c.b16 %v1754, %v1750
    %v1811 = vpack.c.b16 %v1755, %v1751
    %v1812 = vpack.c.b16 %v1756, %v1752
    %v1813 = vpack.c.b16 %v1761, %v1757
    %v1814 = vpack.c.b16 %v1762, %v1758
    %v1815 = vpack.c.b16 %v1763, %v1759
    %v1816 = vpack.c.b16 %v1764, %v1760
    %v1817 = vpack.c.b16 %v1769, %v1765
    %v1818 = vpack.c.b16 %v1770, %v1766
    %v1819 = vpack.c.b16 %v1771, %v1767
    %v1820 = vpack.c.b16 %v1772, %v1768
    %v1821 = vpack.c.b16 %v1777, %v1773
    %v1822 = vpack.c.b16 %v1778, %v1774
    %v1823 = vpack.c.b16 %v1779, %v1775
    %v1824 = vpack.c.b16 %v1780, %v1776
    %v1825 = vpack.c.b16 %v1785, %v1781
    %v1826 = vpack.c.b16 %v1786, %v1782
    %v1827 = vpack.c.b16 %v1787, %v1783
    %v1828 = vpack.c.b16 %v1788, %v1784
    %v1829 = vpack.c.b16 %v1793, %v1789
    %v1830 = vpack.c.b16 %v1794, %v1790
    %v1831 = vpack.c.b16 %v1795, %v1791
    %v1832 = vpack.c.b16 %v1796, %v1792
    %v1833 = vpack.c.b16 %v1801, %v1797
    %v1834 = vpack.c.b16 %v1802, %v1798
    %v1835 = vpack.c.b16 %v1803, %v1799
    %v1836 = vpack.c.b16 %v1804, %v1800
    %1869 = vmatprep.subr.bf16.mxu0 %v1834
    %1870 = vmatpush1.bf16.msra.mxu0 %v1833
    %1871 = vmatprep.subr.bf16.mxu0 %v1830
    %1872 = vmatpush1.bf16.msra.mxu0 %v1829
    %1873 = vmatprep.subr.bf16.mxu0 %v1826
    %1874 = vmatpush1.bf16.msra.mxu0 %v1825
    %1875 = vmatprep.subr.bf16.mxu0 %v1822
    %1876 = vmatpush1.bf16.msra.mxu0 %v1821
    %1877 = vmatprep.subr.bf16.mxu0 %v1818
    %1878 = vmatpush1.bf16.msra.mxu0 %v1817
    %1879 = vmatprep.subr.bf16.mxu0 %v1814
    %1880 = vmatpush1.bf16.msra.mxu0 %v1813
    %1881 = vmatprep.subr.bf16.mxu0 %v1810
    %1882 = vmatpush1.bf16.msra.mxu0 %v1809
    %1883 = vmatprep.subr.bf16.mxu0 %v1806
    %1884 = vmatpush1.bf16.msra.mxu0 %v1805
    %1885 = vmatprep.subr.bf16.mxu0 0
    %1886 = vmatpush2.bf16.msra.mxu0 0
    %1887 = vmatprep.subr.bf16.mxu0 0
    %1888 = vmatpush2.bf16.msra.mxu0 0
    %1889 = vmatprep.subr.bf16.mxu0 0
    %1890 = vmatpush2.bf16.msra.mxu0 0
    %1891 = vmatprep.subr.bf16.mxu0 0
    %1892 = vmatpush2.bf16.msra.mxu0 0
    %1893 = vmatprep.subr.bf16.mxu0 0
    %1894 = vmatpush2.bf16.msra.mxu0 0
    %1895 = vmatprep.subr.bf16.mxu0 0
    %1896 = vmatpush2.bf16.msra.mxu0 0
    %1897 = vmatprep.subr.bf16.mxu0 0
    %1898 = vmatpush2.bf16.msra.mxu0 0
    %1899 = vmatprep.subr.bf16.mxu0 0
    %1900 = vmatpush2.bf16.msra.mxu0 0
    %1901 = vmatprep.mubr.bf16.mxu0 0
    %1902 = vmatmul.mubr.bf16.gmra.mxu0 %v1701
    %v1903 = vpop.f32.mrf.mxu0
    %v1904 = vadd.f32 %v1668, %v1903
    %v1905 = vpop.f32.mrf.mxu0
    %v1906 = vadd.f32 %v1672, %v1905
    %v1907 = vpop.f32.mrf.mxu0
    %v1908 = vadd.f32 %v1668, %v1907
    %v1909 = vpop.f32.mrf.mxu0
    %v1910 = vadd.f32 %v1672, %v1909
    %1911 = vmatprep.mubr.bf16.mxu0 0
    %1912 = vmatmul.mubr.bf16.gmra.mxu0 %v1702
    %v1913 = vpop.f32.mrf.mxu0
    %v1914 = vadd.f32 %v1668, %v1913
    %v1915 = vpop.f32.mrf.mxu0
    %v1916 = vadd.f32 %v1672, %v1915
    %v1917 = vpop.f32.mrf.mxu0
    %v1918 = vadd.f32 %v1668, %v1917
    %v1919 = vpop.f32.mrf.mxu0
    %v1920 = vadd.f32 %v1672, %v1919
    %1921 = vmatprep.mubr.bf16.mxu0 0
    %1922 = vmatmul.mubr.bf16.gmra.mxu0 %v1703
    %v1923 = vpop.f32.mrf.mxu0
    %v1924 = vadd.f32 %v1668, %v1923
    %v1925 = vpop.f32.mrf.mxu0
    %v1926 = vadd.f32 %v1672, %v1925
    %v1927 = vpop.f32.mrf.mxu0
    %v1928 = vadd.f32 %v1668, %v1927
    %v1929 = vpop.f32.mrf.mxu0
    %v1930 = vadd.f32 %v1672, %v1929
    %1931 = vmatprep.mubr.bf16.mxu0 0
    %1932 = vmatmul.mubr.bf16.gmra.mxu0 %v1704
    %v1933 = vpop.f32.mrf.mxu0
    %v1934 = vadd.f32 %v1668, %v1933
    %v1935 = vpop.f32.mrf.mxu0
    %v1936 = vadd.f32 %v1672, %v1935
    %v1937 = vpop.f32.mrf.mxu0
    %v1938 = vadd.f32 %v1668, %v1937
    %v1939 = vpop.f32.mrf.mxu0
    %v1940 = vadd.f32 %v1672, %v1939
    %1941 = vdwg.mxu0
    %1942 = vmatprep.subr.bf16.mxu0 %v1836
    %1943 = vmatpush1.bf16.msra.mxu0 %v1835
    %1944 = vmatprep.subr.bf16.mxu0 %v1832
    %1945 = vmatpush1.bf16.msra.mxu0 %v1831
    %1946 = vmatprep.subr.bf16.mxu0 %v1828
    %1947 = vmatpush1.bf16.msra.mxu0 %v1827
    %1948 = vmatprep.subr.bf16.mxu0 %v1824
    %1949 = vmatpush1.bf16.msra.mxu0 %v1823
    %1950 = vmatprep.subr.bf16.mxu0 %v1820
    %1951 = vmatpush1.bf16.msra.mxu0 %v1819
    %1952 = vmatprep.subr.bf16.mxu0 %v1816
    %1953 = vmatpush1.bf16.msra.mxu0 %v1815
    %1954 = vmatprep.subr.bf16.mxu0 %v1812
    %1955 = vmatpush1.bf16.msra.mxu0 %v1811
    %1956 = vmatprep.subr.bf16.mxu0 %v1808
    %1957 = vmatpush1.bf16.msra.mxu0 %v1807
    %1958 = vmatprep.subr.bf16.mxu0 0
    %1959 = vmatpush2.bf16.msra.mxu0 0
    %1960 = vmatprep.subr.bf16.mxu0 0
    %1961 = vmatpush2.bf16.msra.mxu0 0
    %1962 = vmatprep.subr.bf16.mxu0 0
    %1963 = vmatpush2.bf16.msra.mxu0 0
    %1964 = vmatprep.subr.bf16.mxu0 0
    %1965 = vmatpush2.bf16.msra.mxu0 0
    %1966 = vmatprep.subr.bf16.mxu0 0
    %1967 = vmatpush2.bf16.msra.mxu0 0
    %1968 = vmatprep.subr.bf16.mxu0 0
    %1969 = vmatpush2.bf16.msra.mxu0 0
    %1970 = vmatprep.subr.bf16.mxu0 0
    %1971 = vmatpush2.bf16.msra.mxu0 0
    %1972 = vmatprep.subr.bf16.mxu0 0
    %1973 = vmatpush2.bf16.msra.mxu0 0
    %1974 = vmatprep.mubr.bf16.mxu0 0
    %1975 = vmatmul.mubr.bf16.gmra.mxu0 %v1701
    %v1976 = vpop.f32.mrf.mxu0
    %v1977 = vadd.f32 %v1676, %v1976
    %v1978 = vpop.f32.mrf.mxu0
    %v1979 = vadd.f32 %v1680, %v1978
    %v1980 = vpop.f32.mrf.mxu0
    %v1981 = vadd.f32 %v1676, %v1980
    %v1982 = vpop.f32.mrf.mxu0
    %v1983 = vadd.f32 %v1680, %v1982
    %1984 = vmatprep.mubr.bf16.mxu0 0
    %1985 = vmatmul.mubr.bf16.gmra.mxu0 %v1702
    %v1986 = vpop.f32.mrf.mxu0
    %v1987 = vadd.f32 %v1676, %v1986
    %v1988 = vpop.f32.mrf.mxu0
    %v1989 = vadd.f32 %v1680, %v1988
    %v1990 = vpop.f32.mrf.mxu0
    %v1991 = vadd.f32 %v1676, %v1990
    %v1992 = vpop.f32.mrf.mxu0
    %v1993 = vadd.f32 %v1680, %v1992
    %1994 = vmatprep.mubr.bf16.mxu0 0
    %1995 = vmatmul.mubr.bf16.gmra.mxu0 %v1703
    %v1996 = vpop.f32.mrf.mxu0
    %v1997 = vadd.f32 %v1676, %v1996
    %v1998 = vpop.f32.mrf.mxu0
    %v1999 = vadd.f32 %v1680, %v1998
    %v2000 = vpop.f32.mrf.mxu0
    %v2001 = vadd.f32 %v1676, %v2000
    %v2002 = vpop.f32.mrf.mxu0
    %v2003 = vadd.f32 %v1680, %v2002
    %2004 = vmatprep.mubr.bf16.mxu0 0
    %2005 = vmatmul.mubr.bf16.gmra.mxu0 %v1704
    %v2006 = vpop.f32.mrf.mxu0
    %v2007 = vadd.f32 %v1676, %v2006
    %v2008 = vpop.f32.mrf.mxu0
    %v2009 = vadd.f32 %v1680, %v2008
    %v2010 = vpop.f32.mrf.mxu0
    %v2011 = vadd.f32 %v1676, %v2010
    %v2012 = vpop.f32.mrf.mxu0
    %v2013 = vadd.f32 %v1680, %v2012
    %2014 = vdwg.mxu0
    %v2015 = vpack.c.bf16 %v1908, %v1904
    %v2016 = vpack.c.bf16 %v1910, %v1906
    %v2017 = vpack.c.bf16 %v1981, %v1977
    %v2018 = vpack.c.bf16 %v1983, %v1979
    %v2019 = vpack.c.bf16 %v1918, %v1914
    %v2020 = vpack.c.bf16 %v1920, %v1916
    %v2021 = vpack.c.bf16 %v1991, %v1987
    %v2022 = vpack.c.bf16 %v1993, %v1989
    %v2023 = vpack.c.bf16 %v1928, %v1924
    %v2024 = vpack.c.bf16 %v1930, %v1926
    %v2025 = vpack.c.bf16 %v2001, %v1997
    %v2026 = vpack.c.bf16 %v2003, %v1999
    %v2027 = vpack.c.bf16 %v1938, %v1934
    %v2028 = vpack.c.bf16 %v1940, %v1936
    %v2029 = vpack.c.bf16 %v2011, %v2007
    %v2030 = vpack.c.bf16 %v2013, %v2009
    %v2047 = vunpack.c.l.b16 %v2015
    %v2048 = vunpack.c.l.b16 %v2016
    %v2049 = vunpack.c.l.b16 %v2017
    %v2050 = vunpack.c.l.b16 %v2018
    %v2051 = vunpack.c.h.b16 %v2015
    %v2052 = vunpack.c.h.b16 %v2016
    %v2053 = vunpack.c.h.b16 %v2017
    %v2054 = vunpack.c.h.b16 %v2018
    %v2055 = vunpack.c.l.b16 %v2019
    %v2056 = vunpack.c.l.b16 %v2020
    %v2057 = vunpack.c.l.b16 %v2021
    %v2058 = vunpack.c.l.b16 %v2022
    %v2059 = vunpack.c.h.b16 %v2019
    %v2060 = vunpack.c.h.b16 %v2020
    %v2061 = vunpack.c.h.b16 %v2021
    %v2062 = vunpack.c.h.b16 %v2022
    %v2063 = vunpack.c.l.b16 %v2023
    %v2064 = vunpack.c.l.b16 %v2024
    %v2065 = vunpack.c.l.b16 %v2025
    %v2066 = vunpack.c.l.b16 %v2026
    %v2067 = vunpack.c.h.b16 %v2023
    %v2068 = vunpack.c.h.b16 %v2024
    %v2069 = vunpack.c.h.b16 %v2025
    %v2070 = vunpack.c.h.b16 %v2026
    %v2071 = vunpack.c.l.b16 %v2027
    %v2072 = vunpack.c.l.b16 %v2028
    %v2073 = vunpack.c.l.b16 %v2029
    %v2074 = vunpack.c.l.b16 %v2030
    %v2075 = vunpack.c.h.b16 %v2027
    %v2076 = vunpack.c.h.b16 %v2028
    %v2077 = vunpack.c.h.b16 %v2029
    %v2078 = vunpack.c.h.b16 %v2030
    %v2079 = vpack.c.b16 %v2048, %v2047
    %v2080 = vpack.c.b16 %v2050, %v2049
    %v2081 = vpack.c.b16 %v2052, %v2051
    %v2082 = vpack.c.b16 %v2054, %v2053
    %v2083 = vpack.c.b16 %v2056, %v2055
    %v2084 = vpack.c.b16 %v2058, %v2057
    %v2085 = vpack.c.b16 %v2060, %v2059
    %v2086 = vpack.c.b16 %v2062, %v2061
    %v2087 = vpack.c.b16 %v2064, %v2063
    %v2088 = vpack.c.b16 %v2066, %v2065
    %v2089 = vpack.c.b16 %v2068, %v2067
    %v2090 = vpack.c.b16 %v2070, %v2069
    %v2091 = vpack.c.b16 %v2072, %v2071
    %v2092 = vpack.c.b16 %v2074, %v2073
    %v2093 = vpack.c.b16 %v2076, %v2075
    %v2094 = vpack.c.b16 %v2078, %v2077
    %2111 = vst [vmem:[#allocation2] sm:$0xff] %v2079
    %2112 = vst [vmem:[#allocation2 + $0x8] sm:$0xff] %v2080
    %2113 = vst [vmem:[#allocation2 + $0x10] sm:$0xff] %v2081
    %2114 = vst [vmem:[#allocation2 + $0x18] sm:$0xff] %v2082
    %2115 = vst [vmem:[#allocation2 + $0x20] sm:$0xff] %v2083
    %2116 = vst [vmem:[#allocation2 + $0x28] sm:$0xff] %v2084
    %2117 = vst [vmem:[#allocation2 + $0x30] sm:$0xff] %v2085
    %2118 = vst [vmem:[#allocation2 + $0x38] sm:$0xff] %v2086
    %2119 = vst [vmem:[#allocation2 + $0x40] sm:$0xff] %v2087
    %2120 = vst [vmem:[#allocation2 + $0x48] sm:$0xff] %v2088
    %2121 = vst [vmem:[#allocation2 + $0x50] sm:$0xff] %v2089
    %2122 = vst [vmem:[#allocation2 + $0x58] sm:$0xff] %v2090
    %2123 = vst [vmem:[#allocation2 + $0x60] sm:$0xff] %v2091
    %2124 = vst [vmem:[#allocation2 + $0x68] sm:$0xff] %v2092
    %2125 = vst [vmem:[#allocation2 + $0x70] sm:$0xff] %v2093
    %2126 = vst [vmem:[#allocation2 + $0x78] sm:$0xff] %v2094
    %v2127 = vld [vmem:[%s458] sm:$0xff]
    %v2128 = vld [vmem:[%s458 + $0x8] sm:$0xff]
    %v2129 = vunpack.c.l.bf16 %v2127
    %v2130 = vunpack.c.h.bf16 %v2127
    %v2131 = vunpack.c.l.bf16 %v2128
    %v2132 = vunpack.c.h.bf16 %v2128
    %v2165 = vunpack.c.l.b16 %v1623
    %v2166 = vunpack.c.h.b16 %v1623
    %v2167 = vunpack.c.l.b16 %v1624
    %v2168 = vunpack.c.h.b16 %v1624
    %v2169 = vunpack.c.l.b16 %v1625
    %v2170 = vunpack.c.h.b16 %v1625
    %v2171 = vunpack.c.l.b16 %v1626
    %v2172 = vunpack.c.h.b16 %v1626
    %v2173 = vunpack.c.l.b16 %v1627
    %v2174 = vunpack.c.h.b16 %v1627
    %v2175 = vunpack.c.l.b16 %v1628
    %v2176 = vunpack.c.h.b16 %v1628
    %v2177 = vunpack.c.l.b16 %v1629
    %v2178 = vunpack.c.h.b16 %v1629
    %v2179 = vunpack.c.l.b16 %v1630
    %v2180 = vunpack.c.h.b16 %v1630
    %v2181 = vunpack.c.l.b16 %v1631
    %v2182 = vunpack.c.h.b16 %v1631
    %v2183 = vunpack.c.l.b16 %v1632
    %v2184 = vunpack.c.h.b16 %v1632
    %v2185 = vunpack.c.l.b16 %v1633
    %v2186 = vunpack.c.h.b16 %v1633
    %v2187 = vunpack.c.l.b16 %v1634
    %v2188 = vunpack.c.h.b16 %v1634
    %v2189 = vunpack.c.l.b16 %v1635
    %v2190 = vunpack.c.h.b16 %v1635
    %v2191 = vunpack.c.l.b16 %v1636
    %v2192 = vunpack.c.h.b16 %v1636
    %v2193 = vunpack.c.l.b16 %v1637
    %v2194 = vunpack.c.h.b16 %v1637
    %v2195 = vunpack.c.l.b16 %v1638
    %v2196 = vunpack.c.h.b16 %v1638
    %v2197 = vunpack.c.l.b16 %v1639
    %v2198 = vunpack.c.h.b16 %v1639
    %v2199 = vunpack.c.l.b16 %v1640
    %v2200 = vunpack.c.h.b16 %v1640
    %v2201 = vunpack.c.l.b16 %v1641
    %v2202 = vunpack.c.h.b16 %v1641
    %v2203 = vunpack.c.l.b16 %v1642
    %v2204 = vunpack.c.h.b16 %v1642
    %v2205 = vunpack.c.l.b16 %v1643
    %v2206 = vunpack.c.h.b16 %v1643
    %v2207 = vunpack.c.l.b16 %v1644
    %v2208 = vunpack.c.h.b16 %v1644
    %v2209 = vunpack.c.l.b16 %v1645
    %v2210 = vunpack.c.h.b16 %v1645
    %v2211 = vunpack.c.l.b16 %v1646
    %v2212 = vunpack.c.h.b16 %v1646
    %v2213 = vunpack.c.l.b16 %v1647
    %v2214 = vunpack.c.h.b16 %v1647
    %v2215 = vunpack.c.l.b16 %v1648
    %v2216 = vunpack.c.h.b16 %v1648
    %v2217 = vunpack.c.l.b16 %v1649
    %v2218 = vunpack.c.h.b16 %v1649
    %v2219 = vunpack.c.l.b16 %v1650
    %v2220 = vunpack.c.h.b16 %v1650
    %v2221 = vunpack.c.l.b16 %v1651
    %v2222 = vunpack.c.h.b16 %v1651
    %v2223 = vunpack.c.l.b16 %v1652
    %v2224 = vunpack.c.h.b16 %v1652
    %v2225 = vunpack.c.l.b16 %v1653
    %v2226 = vunpack.c.h.b16 %v1653
    %v2227 = vunpack.c.l.b16 %v1654
    %v2228 = vunpack.c.h.b16 %v1654
    %v2229 = vpack.c.b16 %v2169, %v2165
    %v2230 = vpack.c.b16 %v2170, %v2166
    %v2231 = vpack.c.b16 %v2171, %v2167
    %v2232 = vpack.c.b16 %v2172, %v2168
    %v2233 = vpack.c.b16 %v2177, %v2173
    %v2234 = vpack.c.b16 %v2178, %v2174
    %v2235 = vpack.c.b16 %v2179, %v2175
    %v2236 = vpack.c.b16 %v2180, %v2176
    %v2237 = vpack.c.b16 %v2185, %v2181
    %v2238 = vpack.c.b16 %v2186, %v2182
    %v2239 = vpack.c.b16 %v2187, %v2183
    %v2240 = vpack.c.b16 %v2188, %v2184
    %v2241 = vpack.c.b16 %v2193, %v2189
    %v2242 = vpack.c.b16 %v2194, %v2190
    %v2243 = vpack.c.b16 %v2195, %v2191
    %v2244 = vpack.c.b16 %v2196, %v2192
    %v2245 = vpack.c.b16 %v2201, %v2197
    %v2246 = vpack.c.b16 %v2202, %v2198
    %v2247 = vpack.c.b16 %v2203, %v2199
    %v2248 = vpack.c.b16 %v2204, %v2200
    %v2249 = vpack.c.b16 %v2209, %v2205
    %v2250 = vpack.c.b16 %v2210, %v2206
    %v2251 = vpack.c.b16 %v2211, %v2207
    %v2252 = vpack.c.b16 %v2212, %v2208
    %v2253 = vpack.c.b16 %v2217, %v2213
    %v2254 = vpack.c.b16 %v2218, %v2214
    %v2255 = vpack.c.b16 %v2219, %v2215
    %v2256 = vpack.c.b16 %v2220, %v2216
    %v2257 = vpack.c.b16 %v2225, %v2221
    %v2258 = vpack.c.b16 %v2226, %v2222
    %v2259 = vpack.c.b16 %v2227, %v2223
    %v2260 = vpack.c.b16 %v2228, %v2224
    %2293 = vmatprep.subr.bf16.mxu0 %v2258
    %2294 = vmatpush1.bf16.msra.mxu0 %v2257
    %2295 = vmatprep.subr.bf16.mxu0 %v2254
    %2296 = vmatpush1.bf16.msra.mxu0 %v2253
    %2297 = vmatprep.subr.bf16.mxu0 %v2250
    %2298 = vmatpush1.bf16.msra.mxu0 %v2249
    %2299 = vmatprep.subr.bf16.mxu0 %v2246
    %2300 = vmatpush1.bf16.msra.mxu0 %v2245
    %2301 = vmatprep.subr.bf16.mxu0 %v2242
    %2302 = vmatpush1.bf16.msra.mxu0 %v2241
    %2303 = vmatprep.subr.bf16.mxu0 %v2238
    %2304 = vmatpush1.bf16.msra.mxu0 %v2237
    %2305 = vmatprep.subr.bf16.mxu0 %v2234
    %2306 = vmatpush1.bf16.msra.mxu0 %v2233
    %2307 = vmatprep.subr.bf16.mxu0 %v2230
    %2308 = vmatpush1.bf16.msra.mxu0 %v2229
    %2309 = vmatprep.subr.bf16.mxu0 0
    %2310 = vmatpush2.bf16.msra.mxu0 0
    %2311 = vmatprep.subr.bf16.mxu0 0
    %2312 = vmatpush2.bf16.msra.mxu0 0
    %2313 = vmatprep.subr.bf16.mxu0 0
    %2314 = vmatpush2.bf16.msra.mxu0 0
    %2315 = vmatprep.subr.bf16.mxu0 0
    %2316 = vmatpush2.bf16.msra.mxu0 0
    %2317 = vmatprep.subr.bf16.mxu0 0
    %2318 = vmatpush2.bf16.msra.mxu0 0
    %2319 = vmatprep.subr.bf16.mxu0 0
    %2320 = vmatpush2.bf16.msra.mxu0 0
    %2321 = vmatprep.subr.bf16.mxu0 0
    %2322 = vmatpush2.bf16.msra.mxu0 0
    %2323 = vmatprep.subr.bf16.mxu0 0
    %2324 = vmatpush2.bf16.msra.mxu0 0
    %2325 = vmatprep.mubr.bf16.mxu0 0
    %2326 = vmatmul.mubr.bf16.gmra.mxu0 0
    %v2327 = vpop.f32.mrf.mxu0
    %v2328 = vadd.f32 0.0, %v2327
    %v2329 = vpop.f32.mrf.mxu0
    %v2330 = vadd.f32 0.0, %v2329
    %v2331 = vpop.f32.mrf.mxu0
    %v2332 = vpop.f32.mrf.mxu0
    %2333 = vdwg.mxu0
    %2334 = vmatprep.subr.bf16.mxu0 %v2260
    %2335 = vmatpush1.bf16.msra.mxu0 %v2259
    %2336 = vmatprep.subr.bf16.mxu0 %v2256
    %2337 = vmatpush1.bf16.msra.mxu0 %v2255
    %2338 = vmatprep.subr.bf16.mxu0 %v2252
    %2339 = vmatpush1.bf16.msra.mxu0 %v2251
    %2340 = vmatprep.subr.bf16.mxu0 %v2248
    %2341 = vmatpush1.bf16.msra.mxu0 %v2247
    %2342 = vmatprep.subr.bf16.mxu0 %v2244
    %2343 = vmatpush1.bf16.msra.mxu0 %v2243
    %2344 = vmatprep.subr.bf16.mxu0 %v2240
    %2345 = vmatpush1.bf16.msra.mxu0 %v2239
    %2346 = vmatprep.subr.bf16.mxu0 %v2236
    %2347 = vmatpush1.bf16.msra.mxu0 %v2235
    %2348 = vmatprep.subr.bf16.mxu0 %v2232
    %2349 = vmatpush1.bf16.msra.mxu0 %v2231
    %2350 = vmatprep.subr.bf16.mxu0 0
    %2351 = vmatpush2.bf16.msra.mxu0 0
    %2352 = vmatprep.subr.bf16.mxu0 0
    %2353 = vmatpush2.bf16.msra.mxu0 0
    %2354 = vmatprep.subr.bf16.mxu0 0
    %2355 = vmatpush2.bf16.msra.mxu0 0
    %2356 = vmatprep.subr.bf16.mxu0 0
    %2357 = vmatpush2.bf16.msra.mxu0 0
    %2358 = vmatprep.subr.bf16.mxu0 0
    %2359 = vmatpush2.bf16.msra.mxu0 0
    %2360 = vmatprep.subr.bf16.mxu0 0
    %2361 = vmatpush2.bf16.msra.mxu0 0
    %2362 = vmatprep.subr.bf16.mxu0 0
    %2363 = vmatpush2.bf16.msra.mxu0 0
    %2364 = vmatprep.subr.bf16.mxu0 0
    %2365 = vmatpush2.bf16.msra.mxu0 0
    %2366 = vmatprep.mubr.bf16.mxu0 0
    %2367 = vmatmul.mubr.bf16.gmra.mxu0 0
    %v2368 = vpop.f32.mrf.mxu0
    %v2369 = vadd.f32 0.0, %v2368
    %v2370 = vpop.f32.mrf.mxu0
    %v2371 = vadd.f32 0.0, %v2370
    %v2372 = vpop.f32.mrf.mxu0
    %v2373 = vpop.f32.mrf.mxu0
    %2374 = vdwg.mxu0
    %v2375 = vadd.f32 %v2129, %v2328
    %v2376 = vadd.f32 %v2130, %v2330
    %v2377 = vadd.f32 %v2131, %v2369
    %v2378 = vadd.f32 %v2132, %v2371
    %v2379 = vxor.u32 %v2375, 2147483648
    %v2380 = vxor.u32 %v2376, 2147483648
    %v2381 = vxor.u32 %v2377, 2147483648
    %v2382 = vmul.f32 %v2379, 1.442695
    %v2383 = vpow.pop %v2382
    %v2384 = vmul.f32 %v2380, 1.442695
    %v2385 = vpow.pop %v2384
    %v2386 = vmul.f32 %v2381, 1.442695
    %v2387 = vpow.pop %v2386
    %v2388 = vadd.f32 %v2383, 1.0
    %v2389 = vadd.f32 %v2385, 1.0
    %v2390 = vadd.f32 %v2387, 1.0
    %v2391 = vrcp.pop %v2388
    %v2392 = vmul.f32 1.0, %v2391
    %v2393 = vrcp.pop %v2389
    %v2394 = vmul.f32 1.0, %v2393
    %v2395 = vrcp.pop %v2390
    %v2396 = vmul.f32 1.0, %v2395
    %v2397 = vtanh.pop %v2378
    %v2398 = vmul.f32 %v2394, 0.0
    %v2399 = vmul.f32 %v2392, %v2397
    %v2400 = vadd.f32 %v2398, %v2399
    %v2401 = vtanh.pop %v2400
    %v2402 = vmul.f32 %v2396, %v2401
    %vm2403 = vcmp.eq.s32.totalorder %v78, 0
    %v2404 = vsel %vm2403, 1, 0
    %2405 = vset.pattern.permute.xlu0 0
    %2406 = vperm.xlu0 %2405, %v2404
    %v2407 = vpop.permute.xlu0 %2406
    %vm2408 = vcmp.eq.s32.totalorder %v2407, 1
    %v2409 = vsel %vm2408, %v2402, 0.0
    %v2410 = vld [vmem:[%s739] sm:$0xff]
    %v2411 = vld [vmem:[%s739 + $0x8] sm:$0xff]
    %v2412 = vunpack.c.l.bf16 %v2410
    %v2413 = vunpack.c.h.bf16 %v2410
    %v2414 = vunpack.c.l.bf16 %v2411
    %v2415 = vunpack.c.h.bf16 %v2411
    %v2416 = vpack.c.bf16 %v2402, %v2402
    %2417 = vmatprep.subr.bf16.mxu0 %v2258
    %2418 = vmatpush1.bf16.msra.mxu0 %v2257
    %2419 = vmatprep.subr.bf16.mxu0 %v2254
    %2420 = vmatpush1.bf16.msra.mxu0 %v2253
    %2421 = vmatprep.subr.bf16.mxu0 %v2250
    %2422 = vmatpush1.bf16.msra.mxu0 %v2249
    %2423 = vmatprep.subr.bf16.mxu0 %v2246
    %2424 = vmatpush1.bf16.msra.mxu0 %v2245
    %2425 = vmatprep.subr.bf16.mxu0 %v2242
    %2426 = vmatpush1.bf16.msra.mxu0 %v2241
    %2427 = vmatprep.subr.bf16.mxu0 %v2238
    %2428 = vmatpush1.bf16.msra.mxu0 %v2237
    %2429 = vmatprep.subr.bf16.mxu0 %v2234
    %2430 = vmatpush1.bf16.msra.mxu0 %v2233
    %2431 = vmatprep.subr.bf16.mxu0 %v2230
    %2432 = vmatpush1.bf16.msra.mxu0 %v2229
    %2433 = vmatprep.subr.bf16.mxu0 0
    %2434 = vmatpush2.bf16.msra.mxu0 0
    %2435 = vmatprep.subr.bf16.mxu0 0
    %2436 = vmatpush2.bf16.msra.mxu0 0
    %2437 = vmatprep.subr.bf16.mxu0 0
    %2438 = vmatpush2.bf16.msra.mxu0 0
    %2439 = vmatprep.subr.bf16.mxu0 0
    %2440 = vmatpush2.bf16.msra.mxu0 0
    %2441 = vmatprep.subr.bf16.mxu0 0
    %2442 = vmatpush2.bf16.msra.mxu0 0
    %2443 = vmatprep.subr.bf16.mxu0 0
    %2444 = vmatpush2.bf16.msra.mxu0 0
    %2445 = vmatprep.subr.bf16.mxu0 0
    %2446 = vmatpush2.bf16.msra.mxu0 0
    %2447 = vmatprep.subr.bf16.mxu0 0
    %2448 = vmatpush2.bf16.msra.mxu0 0
    %2449 = vmatprep.mubr.bf16.mxu0 0
    %2450 = vmatmul.mubr.bf16.gmra.mxu0 %v2416
    %v2451 = vpop.f32.mrf.mxu0
    %v2452 = vadd.f32 0.0, %v2451
    %v2453 = vpop.f32.mrf.mxu0
    %v2454 = vadd.f32 0.0, %v2453
    %v2455 = vpop.f32.mrf.mxu0
    %v2456 = vpop.f32.mrf.mxu0
    %2457 = vdwg.mxu0
    %2458 = vmatprep.subr.bf16.mxu0 %v2260
    %2459 = vmatpush1.bf16.msra.mxu0 %v2259
    %2460 = vmatprep.subr.bf16.mxu0 %v2256
    %2461 = vmatpush1.bf16.msra.mxu0 %v2255
    %2462 = vmatprep.subr.bf16.mxu0 %v2252
    %2463 = vmatpush1.bf16.msra.mxu0 %v2251
    %2464 = vmatprep.subr.bf16.mxu0 %v2248
    %2465 = vmatpush1.bf16.msra.mxu0 %v2247
    %2466 = vmatprep.subr.bf16.mxu0 %v2244
    %2467 = vmatpush1.bf16.msra.mxu0 %v2243
    %2468 = vmatprep.subr.bf16.mxu0 %v2240
    %2469 = vmatpush1.bf16.msra.mxu0 %v2239
    %2470 = vmatprep.subr.bf16.mxu0 %v2236
    %2471 = vmatpush1.bf16.msra.mxu0 %v2235
    %2472 = vmatprep.subr.bf16.mxu0 %v2232
    %2473 = vmatpush1.bf16.msra.mxu0 %v2231
    %2474 = vmatprep.subr.bf16.mxu0 0
    %2475 = vmatpush2.bf16.msra.mxu0 0
    %2476 = vmatprep.subr.bf16.mxu0 0
    %2477 = vmatpush2.bf16.msra.mxu0 0
    %2478 = vmatprep.subr.bf16.mxu0 0
    %2479 = vmatpush2.bf16.msra.mxu0 0
    %2480 = vmatprep.subr.bf16.mxu0 0
    %2481 = vmatpush2.bf16.msra.mxu0 0
    %2482 = vmatprep.subr.bf16.mxu0 0
    %2483 = vmatpush2.bf16.msra.mxu0 0
    %2484 = vmatprep.subr.bf16.mxu0 0
    %2485 = vmatpush2.bf16.msra.mxu0 0
    %2486 = vmatprep.subr.bf16.mxu0 0
    %2487 = vmatpush2.bf16.msra.mxu0 0
    %2488 = vmatprep.subr.bf16.mxu0 0
    %2489 = vmatpush2.bf16.msra.mxu0 0
    %2490 = vmatprep.mubr.bf16.mxu0 0
    %2491 = vmatmul.mubr.bf16.gmra.mxu0 %v2416
    %v2492 = vpop.f32.mrf.mxu0
    %v2493 = vadd.f32 0.0, %v2492
    %v2494 = vpop.f32.mrf.mxu0
    %v2495 = vadd.f32 0.0, %v2494
    %v2496 = vpop.f32.mrf.mxu0
    %v2497 = vpop.f32.mrf.mxu0
    %2498 = vdwg.mxu0
    %v2499 = vadd.f32 %v2412, %v2452
    %v2500 = vadd.f32 %v2413, %v2454
    %v2501 = vadd.f32 %v2414, %v2493
    %v2502 = vadd.f32 %v2415, %v2495
    %v2503 = vxor.u32 %v2499, 2147483648
    %v2504 = vxor.u32 %v2500, 2147483648
    %v2505 = vxor.u32 %v2501, 2147483648
    %v2506 = vmul.f32 %v2503, 1.442695
    %v2507 = vpow.pop %v2506
    %v2508 = vmul.f32 %v2504, 1.442695
    %v2509 = vpow.pop %v2508
    %v2510 = vmul.f32 %v2505, 1.442695
    %v2511 = vpow.pop %v2510
    %v2512 = vadd.f32 %v2507, 1.0
    %v2513 = vadd.f32 %v2509, 1.0
    %v2514 = vadd.f32 %v2511, 1.0
    %v2515 = vrcp.pop %v2512
    %v2516 = vmul.f32 1.0, %v2515
    %v2517 = vrcp.pop %v2513
    %v2518 = vmul.f32 1.0, %v2517
    %v2519 = vrcp.pop %v2514
    %v2520 = vmul.f32 1.0, %v2519
    %v2521 = vtanh.pop %v2502
    %v2522 = vmul.f32 %v2518, %v2400
    %v2523 = vmul.f32 %v2516, %v2521
    %v2524 = vadd.f32 %v2522, %v2523
    %v2525 = vtanh.pop %v2524
    %v2526 = vmul.f32 %v2520, %v2525
    %vm2527 = vcmp.eq.s32.totalorder %v78, 1
    %v2528 = vsel %vm2527, 1, 0
    %2529 = vset.pattern.permute.xlu0 0
    %2530 = vperm.xlu0 %2529, %v2528
    %v2531 = vpop.permute.xlu0 %2530
    %vm2532 = vcmp.eq.s32.totalorder %v2531, 1
    %v2533 = vsel %vm2532, %v2526, %v2409
    %v2534 = vld [vmem:[%s861] sm:$0xff]
    %v2535 = vld [vmem:[%s861 + $0x8] sm:$0xff]
    %v2536 = vunpack.c.l.bf16 %v2534
    %v2537 = vunpack.c.h.bf16 %v2534
    %v2538 = vunpack.c.l.bf16 %v2535
    %v2539 = vunpack.c.h.bf16 %v2535
    %v2540 = vpack.c.bf16 %v2526, %v2526
    %2541 = vmatprep.subr.bf16.mxu0 %v2258
    %2542 = vmatpush1.bf16.msra.mxu0 %v2257
    %2543 = vmatprep.subr.bf16.mxu0 %v2254
    %2544 = vmatpush1.bf16.msra.mxu0 %v2253
    %2545 = vmatprep.subr.bf16.mxu0 %v2250
    %2546 = vmatpush1.bf16.msra.mxu0 %v2249
    %2547 = vmatprep.subr.bf16.mxu0 %v2246
    %2548 = vmatpush1.bf16.msra.mxu0 %v2245
    %2549 = vmatprep.subr.bf16.mxu0 %v2242
    %2550 = vmatpush1.bf16.msra.mxu0 %v2241
    %2551 = vmatprep.subr.bf16.mxu0 %v2238
    %2552 = vmatpush1.bf16.msra.mxu0 %v2237
    %2553 = vmatprep.subr.bf16.mxu0 %v2234
    %2554 = vmatpush1.bf16.msra.mxu0 %v2233
    %2555 = vmatprep.subr.bf16.mxu0 %v2230
    %2556 = vmatpush1.bf16.msra.mxu0 %v2229
    %2557 = vmatprep.subr.bf16.mxu0 0
    %2558 = vmatpush2.bf16.msra.mxu0 0
    %2559 = vmatprep.subr.bf16.mxu0 0
    %2560 = vmatpush2.bf16.msra.mxu0 0
    %2561 = vmatprep.subr.bf16.mxu0 0
    %2562 = vmatpush2.bf16.msra.mxu0 0
    %2563 = vmatprep.subr.bf16.mxu0 0
    %2564 = vmatpush2.bf16.msra.mxu0 0
    %2565 = vmatprep.subr.bf16.mxu0 0
    %2566 = vmatpush2.bf16.msra.mxu0 0
    %2567 = vmatprep.subr.bf16.mxu0 0
    %2568 = vmatpush2.bf16.msra.mxu0 0
    %2569 = vmatprep.subr.bf16.mxu0 0
    %2570 = vmatpush2.bf16.msra.mxu0 0
    %2571 = vmatprep.subr.bf16.mxu0 0
    %2572 = vmatpush2.bf16.msra.mxu0 0
    %2573 = vmatprep.mubr.bf16.mxu0 0
    %2574 = vmatmul.mubr.bf16.gmra.mxu0 %v2540
    %v2575 = vpop.f32.mrf.mxu0
    %v2576 = vadd.f32 0.0, %v2575
    %v2577 = vpop.f32.mrf.mxu0
    %v2578 = vadd.f32 0.0, %v2577
    %v2579 = vpop.f32.mrf.mxu0
    %v2580 = vpop.f32.mrf.mxu0
    %2581 = vdwg.mxu0
    %2582 = vmatprep.subr.bf16.mxu0 %v2260
    %2583 = vmatpush1.bf16.msra.mxu0 %v2259
    %2584 = vmatprep.subr.bf16.mxu0 %v2256
    %2585 = vmatpush1.bf16.msra.mxu0 %v2255
    %2586 = vmatprep.subr.bf16.mxu0 %v2252
    %2587 = vmatpush1.bf16.msra.mxu0 %v2251
    %2588 = vmatprep.subr.bf16.mxu0 %v2248
    %2589 = vmatpush1.bf16.msra.mxu0 %v2247
    %2590 = vmatprep.subr.bf16.mxu0 %v2244
    %2591 = vmatpush1.bf16.msra.mxu0 %v2243
    %2592 = vmatprep.subr.bf16.mxu0 %v2240
    %2593 = vmatpush1.bf16.msra.mxu0 %v2239
    %2594 = vmatprep.subr.bf16.mxu0 %v2236
    %2595 = vmatpush1.bf16.msra.mxu0 %v2235
    %2596 = vmatprep.subr.bf16.mxu0 %v2232
    %2597 = vmatpush1.bf16.msra.mxu0 %v2231
    %2598 = vmatprep.subr.bf16.mxu0 0
    %2599 = vmatpush2.bf16.msra.mxu0 0
    %2600 = vmatprep.subr.bf16.mxu0 0
    %2601 = vmatpush2.bf16.msra.mxu0 0
    %2602 = vmatprep.subr.bf16.mxu0 0
    %2603 = vmatpush2.bf16.msra.mxu0 0
    %2604 = vmatprep.subr.bf16.mxu0 0
    %2605 = vmatpush2.bf16.msra.mxu0 0
    %2606 = vmatprep.subr.bf16.mxu0 0
    %2607 = vmatpush2.bf16.msra.mxu0 0
    %2608 = vmatprep.subr.bf16.mxu0 0
    %2609 = vmatpush2.bf16.msra.mxu0 0
    %2610 = vmatprep.subr.bf16.mxu0 0
    %2611 = vmatpush2.bf16.msra.mxu0 0
    %2612 = vmatprep.subr.bf16.mxu0 0
    %2613 = vmatpush2.bf16.msra.mxu0 0
    %2614 = vmatprep.mubr.bf16.mxu0 0
    %2615 = vmatmul.mubr.bf16.gmra.mxu0 %v2540
    %v2616 = vpop.f32.mrf.mxu0
    %v2617 = vadd.f32 0.0, %v2616
    %v2618 = vpop.f32.mrf.mxu0
    %v2619 = vadd.f32 0.0, %v2618
    %v2620 = vpop.f32.mrf.mxu0
    %v2621 = vpop.f32.mrf.mxu0
    %2622 = vdwg.mxu0
    %v2623 = vadd.f32 %v2536, %v2576
    %v2624 = vadd.f32 %v2537, %v2578
    %v2625 = vadd.f32 %v2538, %v2617
    %v2626 = vadd.f32 %v2539, %v2619
    %v2627 = vxor.u32 %v2623, 2147483648
    %v2628 = vxor.u32 %v2624, 2147483648
    %v2629 = vxor.u32 %v2625, 2147483648
    %v2630 = vmul.f32 %v2627, 1.442695
    %v2631 = vpow.pop %v2630
    %v2632 = vmul.f32 %v2628, 1.442695
    %v2633 = vpow.pop %v2632
    %v2634 = vmul.f32 %v2629, 1.442695
    %v2635 = vpow.pop %v2634
    %v2636 = vadd.f32 %v2631, 1.0
    %v2637 = vadd.f32 %v2633, 1.0
    %v2638 = vadd.f32 %v2635, 1.0
    %v2639 = vrcp.pop %v2636
    %v2640 = vmul.f32 1.0, %v2639
    %v2641 = vrcp.pop %v2637
    %v2642 = vmul.f32 1.0, %v2641
    %v2643 = vrcp.pop %v2638
    %v2644 = vmul.f32 1.0, %v2643
    %v2645 = vtanh.pop %v2626
    %v2646 = vmul.f32 %v2642, %v2524
    %v2647 = vmul.f32 %v2640, %v2645
    %v2648 = vadd.f32 %v2646, %v2647
    %v2649 = vtanh.pop %v2648
    %v2650 = vmul.f32 %v2644, %v2649
    %vm2651 = vcmp.eq.s32.totalorder %v78, 2
    %v2652 = vsel %vm2651, 1, 0
    %2653 = vset.pattern.permute.xlu0 0
    %2654 = vperm.xlu0 %2653, %v2652
    %v2655 = vpop.permute.xlu0 %2654
    %vm2656 = vcmp.eq.s32.totalorder %v2655, 1
    %v2657 = vsel %vm2656, %v2650, %v2533
    %v2658 = vld [vmem:[%s983] sm:$0xff]
    %v2659 = vld [vmem:[%s983 + $0x8] sm:$0xff]
    %v2660 = vunpack.c.l.bf16 %v2658
    %v2661 = vunpack.c.h.bf16 %v2658
    %v2662 = vunpack.c.l.bf16 %v2659
    %v2663 = vunpack.c.h.bf16 %v2659
    %v2664 = vpack.c.bf16 %v2650, %v2650
    %2665 = vmatprep.subr.bf16.mxu0 %v2258
    %2666 = vmatpush1.bf16.msra.mxu0 %v2257
    %2667 = vmatprep.subr.bf16.mxu0 %v2254
    %2668 = vmatpush1.bf16.msra.mxu0 %v2253
    %2669 = vmatprep.subr.bf16.mxu0 %v2250
    %2670 = vmatpush1.bf16.msra.mxu0 %v2249
    %2671 = vmatprep.subr.bf16.mxu0 %v2246
    %2672 = vmatpush1.bf16.msra.mxu0 %v2245
    %2673 = vmatprep.subr.bf16.mxu0 %v2242
    %2674 = vmatpush1.bf16.msra.mxu0 %v2241
    %2675 = vmatprep.subr.bf16.mxu0 %v2238
    %2676 = vmatpush1.bf16.msra.mxu0 %v2237
    %2677 = vmatprep.subr.bf16.mxu0 %v2234
    %2678 = vmatpush1.bf16.msra.mxu0 %v2233
    %2679 = vmatprep.subr.bf16.mxu0 %v2230
    %2680 = vmatpush1.bf16.msra.mxu0 %v2229
    %2681 = vmatprep.subr.bf16.mxu0 0
    %2682 = vmatpush2.bf16.msra.mxu0 0
    %2683 = vmatprep.subr.bf16.mxu0 0
    %2684 = vmatpush2.bf16.msra.mxu0 0
    %2685 = vmatprep.subr.bf16.mxu0 0
    %2686 = vmatpush2.bf16.msra.mxu0 0
    %2687 = vmatprep.subr.bf16.mxu0 0
    %2688 = vmatpush2.bf16.msra.mxu0 0
    %2689 = vmatprep.subr.bf16.mxu0 0
    %2690 = vmatpush2.bf16.msra.mxu0 0
    %2691 = vmatprep.subr.bf16.mxu0 0
    %2692 = vmatpush2.bf16.msra.mxu0 0
    %2693 = vmatprep.subr.bf16.mxu0 0
    %2694 = vmatpush2.bf16.msra.mxu0 0
    %2695 = vmatprep.subr.bf16.mxu0 0
    %2696 = vmatpush2.bf16.msra.mxu0 0
    %2697 = vmatprep.mubr.bf16.mxu0 0
    %2698 = vmatmul.mubr.bf16.gmra.mxu0 %v2664
    %v2699 = vpop.f32.mrf.mxu0
    %v2700 = vadd.f32 0.0, %v2699
    %v2701 = vpop.f32.mrf.mxu0
    %v2702 = vadd.f32 0.0, %v2701
    %v2703 = vpop.f32.mrf.mxu0
    %v2704 = vpop.f32.mrf.mxu0
    %2705 = vdwg.mxu0
    %2706 = vmatprep.subr.bf16.mxu0 %v2260
    %2707 = vmatpush1.bf16.msra.mxu0 %v2259
    %2708 = vmatprep.subr.bf16.mxu0 %v2256
    %2709 = vmatpush1.bf16.msra.mxu0 %v2255
    %2710 = vmatprep.subr.bf16.mxu0 %v2252
    %2711 = vmatpush1.bf16.msra.mxu0 %v2251
    %2712 = vmatprep.subr.bf16.mxu0 %v2248
    %2713 = vmatpush1.bf16.msra.mxu0 %v2247
    %2714 = vmatprep.subr.bf16.mxu0 %v2244
    %2715 = vmatpush1.bf16.msra.mxu0 %v2243
    %2716 = vmatprep.subr.bf16.mxu0 %v2240
    %2717 = vmatpush1.bf16.msra.mxu0 %v2239
    %2718 = vmatprep.subr.bf16.mxu0 %v2236
    %2719 = vmatpush1.bf16.msra.mxu0 %v2235
    %2720 = vmatprep.subr.bf16.mxu0 %v2232
    %2721 = vmatpush1.bf16.msra.mxu0 %v2231
    %2722 = vmatprep.subr.bf16.mxu0 0
    %2723 = vmatpush2.bf16.msra.mxu0 0
    %2724 = vmatprep.subr.bf16.mxu0 0
    %2725 = vmatpush2.bf16.msra.mxu0 0
    %2726 = vmatprep.subr.bf16.mxu0 0
    %2727 = vmatpush2.bf16.msra.mxu0 0
    %2728 = vmatprep.subr.bf16.mxu0 0
    %2729 = vmatpush2.bf16.msra.mxu0 0
    %2730 = vmatprep.subr.bf16.mxu0 0
    %2731 = vmatpush2.bf16.msra.mxu0 0
    %2732 = vmatprep.subr.bf16.mxu0 0
    %2733 = vmatpush2.bf16.msra.mxu0 0
    %2734 = vmatprep.subr.bf16.mxu0 0
    %2735 = vmatpush2.bf16.msra.mxu0 0
    %2736 = vmatprep.subr.bf16.mxu0 0
    %2737 = vmatpush2.bf16.msra.mxu0 0
    %2738 = vmatprep.mubr.bf16.mxu0 0
    %2739 = vmatmul.mubr.bf16.gmra.mxu0 %v2664
    %v2740 = vpop.f32.mrf.mxu0
    %v2741 = vadd.f32 0.0, %v2740
    %v2742 = vpop.f32.mrf.mxu0
    %v2743 = vadd.f32 0.0, %v2742
    %v2744 = vpop.f32.mrf.mxu0
    %v2745 = vpop.f32.mrf.mxu0
    %2746 = vdwg.mxu0
    %v2747 = vadd.f32 %v2660, %v2700
    %v2748 = vadd.f32 %v2661, %v2702
    %v2749 = vadd.f32 %v2662, %v2741
    %v2750 = vadd.f32 %v2663, %v2743
    %v2751 = vxor.u32 %v2747, 2147483648
    %v2752 = vxor.u32 %v2748, 2147483648
    %v2753 = vxor.u32 %v2749, 2147483648
    %v2754 = vmul.f32 %v2751, 1.442695
    %v2755 = vpow.pop %v2754
    %v2756 = vmul.f32 %v2752, 1.442695
    %v2757 = vpow.pop %v2756
    %v2758 = vmul.f32 %v2753, 1.442695
    %v2759 = vpow.pop %v2758
    %v2760 = vadd.f32 %v2755, 1.0
    %v2761 = vadd.f32 %v2757, 1.0
    %v2762 = vadd.f32 %v2759, 1.0
    %v2763 = vrcp.pop %v2760
    %v2764 = vmul.f32 1.0, %v2763
    %v2765 = vrcp.pop %v2761
    %v2766 = vmul.f32 1.0, %v2765
    %v2767 = vrcp.pop %v2762
    %v2768 = vmul.f32 1.0, %v2767
    %v2769 = vtanh.pop %v2750
    %v2770 = vmul.f32 %v2766, %v2648
    %v2771 = vmul.f32 %v2764, %v2769
    %v2772 = vadd.f32 %v2770, %v2771
    %v2773 = vtanh.pop %v2772
    %v2774 = vmul.f32 %v2768, %v2773
    %vm2775 = vcmp.eq.s32.totalorder %v78, 3
    %v2776 = vsel %vm2775, 1, 0
    %2777 = vset.pattern.permute.xlu0 0
    %2778 = vperm.xlu0 %2777, %v2776
    %v2779 = vpop.permute.xlu0 %2778
    %vm2780 = vcmp.eq.s32.totalorder %v2779, 1
    %v2781 = vsel %vm2780, %v2774, %v2657
    %v2782 = vld [vmem:[%s1105] sm:$0xff]
    %v2783 = vld [vmem:[%s1105 + $0x8] sm:$0xff]
    %v2784 = vunpack.c.l.bf16 %v2782
    %v2785 = vunpack.c.h.bf16 %v2782
    %v2786 = vunpack.c.l.bf16 %v2783
    %v2787 = vunpack.c.h.bf16 %v2783
    %v2788 = vpack.c.bf16 %v2774, %v2774
    %2789 = vmatprep.subr.bf16.mxu0 %v2258
    %2790 = vmatpush1.bf16.msra.mxu0 %v2257
    %2791 = vmatprep.subr.bf16.mxu0 %v2254
    %2792 = vmatpush1.bf16.msra.mxu0 %v2253
    %2793 = vmatprep.subr.bf16.mxu0 %v2250
    %2794 = vmatpush1.bf16.msra.mxu0 %v2249
    %2795 = vmatprep.subr.bf16.mxu0 %v2246
    %2796 = vmatpush1.bf16.msra.mxu0 %v2245
    %2797 = vmatprep.subr.bf16.mxu0 %v2242
    %2798 = vmatpush1.bf16.msra.mxu0 %v2241
    %2799 = vmatprep.subr.bf16.mxu0 %v2238
    %2800 = vmatpush1.bf16.msra.mxu0 %v2237
    %2801 = vmatprep.subr.bf16.mxu0 %v2234
    %2802 = vmatpush1.bf16.msra.mxu0 %v2233
    %2803 = vmatprep.subr.bf16.mxu0 %v2230
    %2804 = vmatpush1.bf16.msra.mxu0 %v2229
    %2805 = vmatprep.subr.bf16.mxu0 0
    %2806 = vmatpush2.bf16.msra.mxu0 0
    %2807 = vmatprep.subr.bf16.mxu0 0
    %2808 = vmatpush2.bf16.msra.mxu0 0
    %2809 = vmatprep.subr.bf16.mxu0 0
    %2810 = vmatpush2.bf16.msra.mxu0 0
    %2811 = vmatprep.subr.bf16.mxu0 0
    %2812 = vmatpush2.bf16.msra.mxu0 0
    %2813 = vmatprep.subr.bf16.mxu0 0
    %2814 = vmatpush2.bf16.msra.mxu0 0
    %2815 = vmatprep.subr.bf16.mxu0 0
    %2816 = vmatpush2.bf16.msra.mxu0 0
    %2817 = vmatprep.subr.bf16.mxu0 0
    %2818 = vmatpush2.bf16.msra.mxu0 0
    %2819 = vmatprep.subr.bf16.mxu0 0
    %2820 = vmatpush2.bf16.msra.mxu0 0
    %2821 = vmatprep.mubr.bf16.mxu0 0
    %2822 = vmatmul.mubr.bf16.gmra.mxu0 %v2788
    %v2823 = vpop.f32.mrf.mxu0
    %v2824 = vadd.f32 0.0, %v2823
    %v2825 = vpop.f32.mrf.mxu0
    %v2826 = vadd.f32 0.0, %v2825
    %v2827 = vpop.f32.mrf.mxu0
    %v2828 = vpop.f32.mrf.mxu0
    %2829 = vdwg.mxu0
    %2830 = vmatprep.subr.bf16.mxu0 %v2260
    %2831 = vmatpush1.bf16.msra.mxu0 %v2259
    %2832 = vmatprep.subr.bf16.mxu0 %v2256
    %2833 = vmatpush1.bf16.msra.mxu0 %v2255
    %2834 = vmatprep.subr.bf16.mxu0 %v2252
    %2835 = vmatpush1.bf16.msra.mxu0 %v2251
    %2836 = vmatprep.subr.bf16.mxu0 %v2248
    %2837 = vmatpush1.bf16.msra.mxu0 %v2247
    %2838 = vmatprep.subr.bf16.mxu0 %v2244
    %2839 = vmatpush1.bf16.msra.mxu0 %v2243
    %2840 = vmatprep.subr.bf16.mxu0 %v2240
    %2841 = vmatpush1.bf16.msra.mxu0 %v2239
    %2842 = vmatprep.subr.bf16.mxu0 %v2236
    %2843 = vmatpush1.bf16.msra.mxu0 %v2235
    %2844 = vmatprep.subr.bf16.mxu0 %v2232
    %2845 = vmatpush1.bf16.msra.mxu0 %v2231
    %2846 = vmatprep.subr.bf16.mxu0 0
    %2847 = vmatpush2.bf16.msra.mxu0 0
    %2848 = vmatprep.subr.bf16.mxu0 0
    %2849 = vmatpush2.bf16.msra.mxu0 0
    %2850 = vmatprep.subr.bf16.mxu0 0
    %2851 = vmatpush2.bf16.msra.mxu0 0
    %2852 = vmatprep.subr.bf16.mxu0 0
    %2853 = vmatpush2.bf16.msra.mxu0 0
    %2854 = vmatprep.subr.bf16.mxu0 0
    %2855 = vmatpush2.bf16.msra.mxu0 0
    %2856 = vmatprep.subr.bf16.mxu0 0
    %2857 = vmatpush2.bf16.msra.mxu0 0
    %2858 = vmatprep.subr.bf16.mxu0 0
    %2859 = vmatpush2.bf16.msra.mxu0 0
    %2860 = vmatprep.subr.bf16.mxu0 0
    %2861 = vmatpush2.bf16.msra.mxu0 0
    %2862 = vmatprep.mubr.bf16.mxu0 0
    %2863 = vmatmul.mubr.bf16.gmra.mxu0 %v2788
    %v2864 = vpop.f32.mrf.mxu0
    %v2865 = vadd.f32 0.0, %v2864
    %v2866 = vpop.f32.mrf.mxu0
    %v2867 = vadd.f32 0.0, %v2866
    %v2868 = vpop.f32.mrf.mxu0
    %v2869 = vpop.f32.mrf.mxu0
    %2870 = vdwg.mxu0
    %v2871 = vadd.f32 %v2784, %v2824
    %v2872 = vadd.f32 %v2785, %v2826
    %v2873 = vadd.f32 %v2786, %v2865
    %v2874 = vadd.f32 %v2787, %v2867
    %v2875 = vxor.u32 %v2871, 2147483648
    %v2876 = vxor.u32 %v2872, 2147483648
    %v2877 = vxor.u32 %v2873, 2147483648
    %v2878 = vmul.f32 %v2875, 1.442695
    %v2879 = vpow.pop %v2878
    %v2880 = vmul.f32 %v2876, 1.442695
    %v2881 = vpow.pop %v2880
    %v2882 = vmul.f32 %v2877, 1.442695
    %v2883 = vpow.pop %v2882
    %v2884 = vadd.f32 %v2879, 1.0
    %v2885 = vadd.f32 %v2881, 1.0
    %v2886 = vadd.f32 %v2883, 1.0
    %v2887 = vrcp.pop %v2884
    %v2888 = vmul.f32 1.0, %v2887
    %v2889 = vrcp.pop %v2885
    %v2890 = vmul.f32 1.0, %v2889
    %v2891 = vrcp.pop %v2886
    %v2892 = vmul.f32 1.0, %v2891
    %v2893 = vtanh.pop %v2874
    %v2894 = vmul.f32 %v2890, %v2772
    %v2895 = vmul.f32 %v2888, %v2893
    %v2896 = vadd.f32 %v2894, %v2895
    %v2897 = vtanh.pop %v2896
    %v2898 = vmul.f32 %v2892, %v2897
    %vm2899 = vcmp.eq.s32.totalorder %v78, 4
    %v2900 = vsel %vm2899, 1, 0
    %2901 = vset.pattern.permute.xlu0 0
    %2902 = vperm.xlu0 %2901, %v2900
    %v2903 = vpop.permute.xlu0 %2902
    %vm2904 = vcmp.eq.s32.totalorder %v2903, 1
    %v2905 = vsel %vm2904, %v2898, %v2781
    %v2906 = vld [vmem:[%s1227] sm:$0xff]
    %v2907 = vld [vmem:[%s1227 + $0x8] sm:$0xff]
    %v2908 = vunpack.c.l.bf16 %v2906
    %v2909 = vunpack.c.h.bf16 %v2906
    %v2910 = vunpack.c.l.bf16 %v2907
    %v2911 = vunpack.c.h.bf16 %v2907
    %v2912 = vpack.c.bf16 %v2898, %v2898
    %2913 = vmatprep.subr.bf16.mxu0 %v2258
    %2914 = vmatpush1.bf16.msra.mxu0 %v2257
    %2915 = vmatprep.subr.bf16.mxu0 %v2254
    %2916 = vmatpush1.bf16.msra.mxu0 %v2253
    %2917 = vmatprep.subr.bf16.mxu0 %v2250
    %2918 = vmatpush1.bf16.msra.mxu0 %v2249
    %2919 = vmatprep.subr.bf16.mxu0 %v2246
    %2920 = vmatpush1.bf16.msra.mxu0 %v2245
    %2921 = vmatprep.subr.bf16.mxu0 %v2242
    %2922 = vmatpush1.bf16.msra.mxu0 %v2241
    %2923 = vmatprep.subr.bf16.mxu0 %v2238
    %2924 = vmatpush1.bf16.msra.mxu0 %v2237
    %2925 = vmatprep.subr.bf16.mxu0 %v2234
    %2926 = vmatpush1.bf16.msra.mxu0 %v2233
    %2927 = vmatprep.subr.bf16.mxu0 %v2230
    %2928 = vmatpush1.bf16.msra.mxu0 %v2229
    %2929 = vmatprep.subr.bf16.mxu0 0
    %2930 = vmatpush2.bf16.msra.mxu0 0
    %2931 = vmatprep.subr.bf16.mxu0 0
    %2932 = vmatpush2.bf16.msra.mxu0 0
    %2933 = vmatprep.subr.bf16.mxu0 0
    %2934 = vmatpush2.bf16.msra.mxu0 0
    %2935 = vmatprep.subr.bf16.mxu0 0
    %2936 = vmatpush2.bf16.msra.mxu0 0
    %2937 = vmatprep.subr.bf16.mxu0 0
    %2938 = vmatpush2.bf16.msra.mxu0 0
    %2939 = vmatprep.subr.bf16.mxu0 0
    %2940 = vmatpush2.bf16.msra.mxu0 0
    %2941 = vmatprep.subr.bf16.mxu0 0
    %2942 = vmatpush2.bf16.msra.mxu0 0
    %2943 = vmatprep.subr.bf16.mxu0 0
    %2944 = vmatpush2.bf16.msra.mxu0 0
    %2945 = vmatprep.mubr.bf16.mxu0 0
    %2946 = vmatmul.mubr.bf16.gmra.mxu0 %v2912
    %v2947 = vpop.f32.mrf.mxu0
    %v2948 = vadd.f32 0.0, %v2947
    %v2949 = vpop.f32.mrf.mxu0
    %v2950 = vadd.f32 0.0, %v2949
    %v2951 = vpop.f32.mrf.mxu0
    %v2952 = vpop.f32.mrf.mxu0
    %2953 = vdwg.mxu0
    %2954 = vmatprep.subr.bf16.mxu0 %v2260
    %2955 = vmatpush1.bf16.msra.mxu0 %v2259
    %2956 = vmatprep.subr.bf16.mxu0 %v2256
    %2957 = vmatpush1.bf16.msra.mxu0 %v2255
    %2958 = vmatprep.subr.bf16.mxu0 %v2252
    %2959 = vmatpush1.bf16.msra.mxu0 %v2251
    %2960 = vmatprep.subr.bf16.mxu0 %v2248
    %2961 = vmatpush1.bf16.msra.mxu0 %v2247
    %2962 = vmatprep.subr.bf16.mxu0 %v2244
    %2963 = vmatpush1.bf16.msra.mxu0 %v2243
    %2964 = vmatprep.subr.bf16.mxu0 %v2240
    %2965 = vmatpush1.bf16.msra.mxu0 %v2239
    %2966 = vmatprep.subr.bf16.mxu0 %v2236
    %2967 = vmatpush1.bf16.msra.mxu0 %v2235
    %2968 = vmatprep.subr.bf16.mxu0 %v2232
    %2969 = vmatpush1.bf16.msra.mxu0 %v2231
    %2970 = vmatprep.subr.bf16.mxu0 0
    %2971 = vmatpush2.bf16.msra.mxu0 0
    %2972 = vmatprep.subr.bf16.mxu0 0
    %2973 = vmatpush2.bf16.msra.mxu0 0
    %2974 = vmatprep.subr.bf16.mxu0 0
    %2975 = vmatpush2.bf16.msra.mxu0 0
    %2976 = vmatprep.subr.bf16.mxu0 0
    %2977 = vmatpush2.bf16.msra.mxu0 0
    %2978 = vmatprep.subr.bf16.mxu0 0
    %2979 = vmatpush2.bf16.msra.mxu0 0
    %2980 = vmatprep.subr.bf16.mxu0 0
    %2981 = vmatpush2.bf16.msra.mxu0 0
    %2982 = vmatprep.subr.bf16.mxu0 0
    %2983 = vmatpush2.bf16.msra.mxu0 0
    %2984 = vmatprep.subr.bf16.mxu0 0
    %2985 = vmatpush2.bf16.msra.mxu0 0
    %2986 = vmatprep.mubr.bf16.mxu0 0
    %2987 = vmatmul.mubr.bf16.gmra.mxu0 %v2912
    %v2988 = vpop.f32.mrf.mxu0
    %v2989 = vadd.f32 0.0, %v2988
    %v2990 = vpop.f32.mrf.mxu0
    %v2991 = vadd.f32 0.0, %v2990
    %v2992 = vpop.f32.mrf.mxu0
    %v2993 = vpop.f32.mrf.mxu0
    %2994 = vdwg.mxu0
    %v2995 = vadd.f32 %v2908, %v2948
    %v2996 = vadd.f32 %v2909, %v2950
    %v2997 = vadd.f32 %v2910, %v2989
    %v2998 = vadd.f32 %v2911, %v2991
    %v2999 = vxor.u32 %v2995, 2147483648
    %v3000 = vxor.u32 %v2996, 2147483648
    %v3001 = vxor.u32 %v2997, 2147483648
    %v3002 = vmul.f32 %v2999, 1.442695
    %v3003 = vpow.pop %v3002
    %v3004 = vmul.f32 %v3000, 1.442695
    %v3005 = vpow.pop %v3004
    %v3006 = vmul.f32 %v3001, 1.442695
    %v3007 = vpow.pop %v3006
    %v3008 = vadd.f32 %v3003, 1.0
    %v3009 = vadd.f32 %v3005, 1.0
    %v3010 = vadd.f32 %v3007, 1.0
    %v3011 = vrcp.pop %v3008
    %v3012 = vmul.f32 1.0, %v3011
    %v3013 = vrcp.pop %v3009
    %v3014 = vmul.f32 1.0, %v3013
    %v3015 = vrcp.pop %v3010
    %v3016 = vmul.f32 1.0, %v3015
    %v3017 = vtanh.pop %v2998
    %v3018 = vmul.f32 %v3014, %v2896
    %v3019 = vmul.f32 %v3012, %v3017
    %v3020 = vadd.f32 %v3018, %v3019
    %v3021 = vtanh.pop %v3020
    %v3022 = vmul.f32 %v3016, %v3021
    %vm3023 = vcmp.eq.s32.totalorder %v78, 5
    %v3024 = vsel %vm3023, 1, 0
    %3025 = vset.pattern.permute.xlu0 0
    %3026 = vperm.xlu0 %3025, %v3024
    %v3027 = vpop.permute.xlu0 %3026
    %vm3028 = vcmp.eq.s32.totalorder %v3027, 1
    %v3029 = vsel %vm3028, %v3022, %v2905
    %v3030 = vld [vmem:[%s1349] sm:$0xff]
    %v3031 = vld [vmem:[%s1349 + $0x8] sm:$0xff]
    %v3032 = vunpack.c.l.bf16 %v3030
    %v3033 = vunpack.c.h.bf16 %v3030
    %v3034 = vunpack.c.l.bf16 %v3031
    %v3035 = vunpack.c.h.bf16 %v3031
    %v3036 = vpack.c.bf16 %v3022, %v3022
    %3037 = vmatprep.subr.bf16.mxu0 %v2258
    %3038 = vmatpush1.bf16.msra.mxu0 %v2257
    %3039 = vmatprep.subr.bf16.mxu0 %v2254
    %3040 = vmatpush1.bf16.msra.mxu0 %v2253
    %3041 = vmatprep.subr.bf16.mxu0 %v2250
    %3042 = vmatpush1.bf16.msra.mxu0 %v2249
    %3043 = vmatprep.subr.bf16.mxu0 %v2246
    %3044 = vmatpush1.bf16.msra.mxu0 %v2245
    %3045 = vmatprep.subr.bf16.mxu0 %v2242
    %3046 = vmatpush1.bf16.msra.mxu0 %v2241
    %3047 = vmatprep.subr.bf16.mxu0 %v2238
    %3048 = vmatpush1.bf16.msra.mxu0 %v2237
    %3049 = vmatprep.subr.bf16.mxu0 %v2234
    %3050 = vmatpush1.bf16.msra.mxu0 %v2233
    %3051 = vmatprep.subr.bf16.mxu0 %v2230
    %3052 = vmatpush1.bf16.msra.mxu0 %v2229
    %3053 = vmatprep.subr.bf16.mxu0 0
    %3054 = vmatpush2.bf16.msra.mxu0 0
    %3055 = vmatprep.subr.bf16.mxu0 0
    %3056 = vmatpush2.bf16.msra.mxu0 0
    %3057 = vmatprep.subr.bf16.mxu0 0
    %3058 = vmatpush2.bf16.msra.mxu0 0
    %3059 = vmatprep.subr.bf16.mxu0 0
    %3060 = vmatpush2.bf16.msra.mxu0 0
    %3061 = vmatprep.subr.bf16.mxu0 0
    %3062 = vmatpush2.bf16.msra.mxu0 0
    %3063 = vmatprep.subr.bf16.mxu0 0
    %3064 = vmatpush2.bf16.msra.mxu0 0
    %3065 = vmatprep.subr.bf16.mxu0 0
    %3066 = vmatpush2.bf16.msra.mxu0 0
    %3067 = vmatprep.subr.bf16.mxu0 0
    %3068 = vmatpush2.bf16.msra.mxu0 0
    %3069 = vmatprep.mubr.bf16.mxu0 0
    %3070 = vmatmul.mubr.bf16.gmra.mxu0 %v3036
    %v3071 = vpop.f32.mrf.mxu0
    %v3072 = vadd.f32 0.0, %v3071
    %v3073 = vpop.f32.mrf.mxu0
    %v3074 = vadd.f32 0.0, %v3073
    %v3075 = vpop.f32.mrf.mxu0
    %v3076 = vpop.f32.mrf.mxu0
    %3077 = vdwg.mxu0
    %3078 = vmatprep.subr.bf16.mxu0 %v2260
    %3079 = vmatpush1.bf16.msra.mxu0 %v2259
    %3080 = vmatprep.subr.bf16.mxu0 %v2256
    %3081 = vmatpush1.bf16.msra.mxu0 %v2255
    %3082 = vmatprep.subr.bf16.mxu0 %v2252
    %3083 = vmatpush1.bf16.msra.mxu0 %v2251
    %3084 = vmatprep.subr.bf16.mxu0 %v2248
    %3085 = vmatpush1.bf16.msra.mxu0 %v2247
    %3086 = vmatprep.subr.bf16.mxu0 %v2244
    %3087 = vmatpush1.bf16.msra.mxu0 %v2243
    %3088 = vmatprep.subr.bf16.mxu0 %v2240
    %3089 = vmatpush1.bf16.msra.mxu0 %v2239
    %3090 = vmatprep.subr.bf16.mxu0 %v2236
    %3091 = vmatpush1.bf16.msra.mxu0 %v2235
    %3092 = vmatprep.subr.bf16.mxu0 %v2232
    %3093 = vmatpush1.bf16.msra.mxu0 %v2231
    %3094 = vmatprep.subr.bf16.mxu0 0
    %3095 = vmatpush2.bf16.msra.mxu0 0
    %3096 = vmatprep.subr.bf16.mxu0 0
    %3097 = vmatpush2.bf16.msra.mxu0 0
    %3098 = vmatprep.subr.bf16.mxu0 0
    %3099 = vmatpush2.bf16.msra.mxu0 0
    %3100 = vmatprep.subr.bf16.mxu0 0
    %3101 = vmatpush2.bf16.msra.mxu0 0
    %3102 = vmatprep.subr.bf16.mxu0 0
    %3103 = vmatpush2.bf16.msra.mxu0 0
    %3104 = vmatprep.subr.bf16.mxu0 0
    %3105 = vmatpush2.bf16.msra.mxu0 0
    %3106 = vmatprep.subr.bf16.mxu0 0
    %3107 = vmatpush2.bf16.msra.mxu0 0
    %3108 = vmatprep.subr.bf16.mxu0 0
    %3109 = vmatpush2.bf16.msra.mxu0 0
    %3110 = vmatprep.mubr.bf16.mxu0 0
    %3111 = vmatmul.mubr.bf16.gmra.mxu0 %v3036
    %v3112 = vpop.f32.mrf.mxu0
    %v3113 = vadd.f32 0.0, %v3112
    %v3114 = vpop.f32.mrf.mxu0
    %v3115 = vadd.f32 0.0, %v3114
    %v3116 = vpop.f32.mrf.mxu0
    %v3117 = vpop.f32.mrf.mxu0
    %3118 = vdwg.mxu0
    %v3119 = vadd.f32 %v3032, %v3072
    %v3120 = vadd.f32 %v3033, %v3074
    %v3121 = vadd.f32 %v3034, %v3113
    %v3122 = vadd.f32 %v3035, %v3115
    %v3123 = vxor.u32 %v3119, 2147483648
    %v3124 = vxor.u32 %v3120, 2147483648
    %v3125 = vxor.u32 %v3121, 2147483648
    %v3126 = vmul.f32 %v3123, 1.442695
    %v3127 = vpow.pop %v3126
    %v3128 = vmul.f32 %v3124, 1.442695
    %v3129 = vpow.pop %v3128
    %v3130 = vmul.f32 %v3125, 1.442695
    %v3131 = vpow.pop %v3130
    %v3132 = vadd.f32 %v3127, 1.0
    %v3133 = vadd.f32 %v3129, 1.0
    %v3134 = vadd.f32 %v3131, 1.0
    %v3135 = vrcp.pop %v3132
    %v3136 = vmul.f32 1.0, %v3135
    %v3137 = vrcp.pop %v3133
    %v3138 = vmul.f32 1.0, %v3137
    %v3139 = vrcp.pop %v3134
    %v3140 = vmul.f32 1.0, %v3139
    %v3141 = vtanh.pop %v3122
    %v3142 = vmul.f32 %v3138, %v3020
    %v3143 = vmul.f32 %v3136, %v3141
    %v3144 = vadd.f32 %v3142, %v3143
    %v3145 = vtanh.pop %v3144
    %v3146 = vmul.f32 %v3140, %v3145
    %vm3147 = vcmp.eq.s32.totalorder %v78, 6
    %v3148 = vsel %vm3147, 1, 0
    %3149 = vset.pattern.permute.xlu0 0
    %3150 = vperm.xlu0 %3149, %v3148
    %v3151 = vpop.permute.xlu0 %3150
    %vm3152 = vcmp.eq.s32.totalorder %v3151, 1
    %v3153 = vsel %vm3152, %v3146, %v3029
    %v3154 = vld [vmem:[%s1471] sm:$0xff]
    %v3155 = vld [vmem:[%s1471 + $0x8] sm:$0xff]
    %v3156 = vunpack.c.l.bf16 %v3154
    %v3157 = vunpack.c.h.bf16 %v3154
    %v3158 = vunpack.c.l.bf16 %v3155
    %v3159 = vunpack.c.h.bf16 %v3155
    %v3160 = vpack.c.bf16 %v3146, %v3146
    %3161 = vmatprep.subr.bf16.mxu0 %v2258
    %3162 = vmatpush1.bf16.msra.mxu0 %v2257
    %3163 = vmatprep.subr.bf16.mxu0 %v2254
    %3164 = vmatpush1.bf16.msra.mxu0 %v2253
    %3165 = vmatprep.subr.bf16.mxu0 %v2250
    %3166 = vmatpush1.bf16.msra.mxu0 %v2249
    %3167 = vmatprep.subr.bf16.mxu0 %v2246
    %3168 = vmatpush1.bf16.msra.mxu0 %v2245
    %3169 = vmatprep.subr.bf16.mxu0 %v2242
    %3170 = vmatpush1.bf16.msra.mxu0 %v2241
    %3171 = vmatprep.subr.bf16.mxu0 %v2238
    %3172 = vmatpush1.bf16.msra.mxu0 %v2237
    %3173 = vmatprep.subr.bf16.mxu0 %v2234
    %3174 = vmatpush1.bf16.msra.mxu0 %v2233
    %3175 = vmatprep.subr.bf16.mxu0 %v2230
    %3176 = vmatpush1.bf16.msra.mxu0 %v2229
    %3177 = vmatprep.subr.bf16.mxu0 0
    %3178 = vmatpush2.bf16.msra.mxu0 0
    %3179 = vmatprep.subr.bf16.mxu0 0
    %3180 = vmatpush2.bf16.msra.mxu0 0
    %3181 = vmatprep.subr.bf16.mxu0 0
    %3182 = vmatpush2.bf16.msra.mxu0 0
    %3183 = vmatprep.subr.bf16.mxu0 0
    %3184 = vmatpush2.bf16.msra.mxu0 0
    %3185 = vmatprep.subr.bf16.mxu0 0
    %3186 = vmatpush2.bf16.msra.mxu0 0
    %3187 = vmatprep.subr.bf16.mxu0 0
    %3188 = vmatpush2.bf16.msra.mxu0 0
    %3189 = vmatprep.subr.bf16.mxu0 0
    %3190 = vmatpush2.bf16.msra.mxu0 0
    %3191 = vmatprep.subr.bf16.mxu0 0
    %3192 = vmatpush2.bf16.msra.mxu0 0
    %3193 = vmatprep.mubr.bf16.mxu0 0
    %3194 = vmatmul.mubr.bf16.gmra.mxu0 %v3160
    %v3195 = vpop.f32.mrf.mxu0
    %v3196 = vadd.f32 0.0, %v3195
    %v3197 = vpop.f32.mrf.mxu0
    %v3198 = vadd.f32 0.0, %v3197
    %v3199 = vpop.f32.mrf.mxu0
    %v3200 = vpop.f32.mrf.mxu0
    %3201 = vdwg.mxu0
    %3202 = vmatprep.subr.bf16.mxu0 %v2260
    %3203 = vmatpush1.bf16.msra.mxu0 %v2259
    %3204 = vmatprep.subr.bf16.mxu0 %v2256
    %3205 = vmatpush1.bf16.msra.mxu0 %v2255
    %3206 = vmatprep.subr.bf16.mxu0 %v2252
    %3207 = vmatpush1.bf16.msra.mxu0 %v2251
    %3208 = vmatprep.subr.bf16.mxu0 %v2248
    %3209 = vmatpush1.bf16.msra.mxu0 %v2247
    %3210 = vmatprep.subr.bf16.mxu0 %v2244
    %3211 = vmatpush1.bf16.msra.mxu0 %v2243
    %3212 = vmatprep.subr.bf16.mxu0 %v2240
    %3213 = vmatpush1.bf16.msra.mxu0 %v2239
    %3214 = vmatprep.subr.bf16.mxu0 %v2236
    %3215 = vmatpush1.bf16.msra.mxu0 %v2235
    %3216 = vmatprep.subr.bf16.mxu0 %v2232
    %3217 = vmatpush1.bf16.msra.mxu0 %v2231
    %3218 = vmatprep.subr.bf16.mxu0 0
    %3219 = vmatpush2.bf16.msra.mxu0 0
    %3220 = vmatprep.subr.bf16.mxu0 0
    %3221 = vmatpush2.bf16.msra.mxu0 0
    %3222 = vmatprep.subr.bf16.mxu0 0
    %3223 = vmatpush2.bf16.msra.mxu0 0
    %3224 = vmatprep.subr.bf16.mxu0 0
    %3225 = vmatpush2.bf16.msra.mxu0 0
    %3226 = vmatprep.subr.bf16.mxu0 0
    %3227 = vmatpush2.bf16.msra.mxu0 0
    %3228 = vmatprep.subr.bf16.mxu0 0
    %3229 = vmatpush2.bf16.msra.mxu0 0
    %3230 = vmatprep.subr.bf16.mxu0 0
    %3231 = vmatpush2.bf16.msra.mxu0 0
    %3232 = vmatprep.subr.bf16.mxu0 0
    %3233 = vmatpush2.bf16.msra.mxu0 0
    %3234 = vmatprep.mubr.bf16.mxu0 0
    %3235 = vmatmul.mubr.bf16.gmra.mxu0 %v3160
    %v3236 = vpop.f32.mrf.mxu0
    %v3237 = vadd.f32 0.0, %v3236
    %v3238 = vpop.f32.mrf.mxu0
    %v3239 = vadd.f32 0.0, %v3238
    %v3240 = vpop.f32.mrf.mxu0
    %v3241 = vpop.f32.mrf.mxu0
    %3242 = vdwg.mxu0
    %v3243 = vadd.f32 %v3156, %v3196
    %v3244 = vadd.f32 %v3157, %v3198
    %v3245 = vadd.f32 %v3158, %v3237
    %v3246 = vadd.f32 %v3159, %v3239
    %v3247 = vxor.u32 %v3243, 2147483648
    %v3248 = vxor.u32 %v3244, 2147483648
    %v3249 = vxor.u32 %v3245, 2147483648
    %v3250 = vmul.f32 %v3247, 1.442695
    %v3251 = vpow.pop %v3250
    %v3252 = vmul.f32 %v3248, 1.442695
    %v3253 = vpow.pop %v3252
    %v3254 = vmul.f32 %v3249, 1.442695
    %v3255 = vpow.pop %v3254
    %v3256 = vadd.f32 %v3251, 1.0
    %v3257 = vadd.f32 %v3253, 1.0
    %v3258 = vadd.f32 %v3255, 1.0
    %v3259 = vrcp.pop %v3256
    %v3260 = vmul.f32 1.0, %v3259
    %v3261 = vrcp.pop %v3257
    %v3262 = vmul.f32 1.0, %v3261
    %v3263 = vrcp.pop %v3258
    %v3264 = vmul.f32 1.0, %v3263
    %v3265 = vtanh.pop %v3246
    %v3266 = vmul.f32 %v3262, %v3144
    %v3267 = vmul.f32 %v3260, %v3265
    %v3268 = vadd.f32 %v3266, %v3267
    %v3269 = vtanh.pop %v3268
    %v3270 = vmul.f32 %v3264, %v3269
    %vm3271 = vcmp.eq.s32.totalorder %v78, 7
    %v3272 = vsel %vm3271, 1, 0
    %3273 = vset.pattern.permute.xlu0 0
    %3274 = vperm.xlu0 %3273, %v3272
    %v3275 = vpop.permute.xlu0 %3274
    %vm3276 = vcmp.eq.s32.totalorder %v3275, 1
    %v3277 = vsel %vm3276, %v3270, %v3153
    %v3278 = vtanh.pop %v3277
    %v3279 = vpack.c.bf16 %v3278, %v3278
    %v3280 = vld [vmem:[%s8] sm:$0xf]
    %v3281 = vld [vmem:[%s8 + $0x4] sm:$0xf]
    %v3282 = vld [vmem:[%s8 + $0x8] sm:$0xf]
    %v3283 = vld [vmem:[%s8 + $0xc] sm:$0xf]
    %v3284 = vld [vmem:[%s8 + $0x10] sm:$0xf]
    %v3285 = vld [vmem:[%s8 + $0x14] sm:$0xf]
    %v3286 = vld [vmem:[%s8 + $0x18] sm:$0xf]
    %v3287 = vld [vmem:[%s8 + $0x1c] sm:$0xf]
    %v3288 = vld [vmem:[%s8 + $0x20] sm:$0xf]
    %v3289 = vld [vmem:[%s8 + $0x24] sm:$0xf]
    %v3290 = vld [vmem:[%s8 + $0x28] sm:$0xf]
    %v3291 = vld [vmem:[%s8 + $0x2c] sm:$0xf]
    %v3292 = vld [vmem:[%s8 + $0x30] sm:$0xf]
    %v3293 = vld [vmem:[%s8 + $0x34] sm:$0xf]
    %v3294 = vld [vmem:[%s8 + $0x38] sm:$0xf]
    %v3295 = vld [vmem:[%s8 + $0x3c] sm:$0xf]
    %v3296 = vld [vmem:[%s9] sm:$0x1]
    %v3298 = vlaneseq
    %v3299 = vshrl.u32 %v3298, 7
    %v3300 = vsub.s32 0, %v3299
    %v3301 = vrot.slane %v3296, %v3300
    %v3319 = vunpack.c.l.b16 %v3280
    %v3320 = vunpack.c.l.b16 %v3281
    %v3321 = vunpack.c.l.b16 %v3282
    %v3322 = vunpack.c.l.b16 %v3283
    %v3323 = vunpack.c.l.b16 %v3284
    %v3324 = vunpack.c.l.b16 %v3285
    %v3325 = vunpack.c.l.b16 %v3286
    %v3326 = vunpack.c.l.b16 %v3287
    %v3327 = vunpack.c.l.b16 %v3288
    %v3328 = vunpack.c.l.b16 %v3289
    %v3329 = vunpack.c.l.b16 %v3290
    %v3330 = vunpack.c.l.b16 %v3291
    %v3331 = vunpack.c.l.b16 %v3292
    %v3332 = vunpack.c.l.b16 %v3293
    %v3333 = vunpack.c.l.b16 %v3294
    %v3334 = vunpack.c.l.b16 %v3295
    %v3335 = vpack.c.b16 %v3320, %v3319
    %v3336 = vpack.c.b16 %v3322, %v3321
    %v3337 = vpack.c.b16 %v3324, %v3323
    %v3338 = vpack.c.b16 %v3326, %v3325
    %v3339 = vpack.c.b16 %v3328, %v3327
    %v3340 = vpack.c.b16 %v3330, %v3329
    %v3341 = vpack.c.b16 %v3332, %v3331
    %v3342 = vpack.c.b16 %v3334, %v3333
    %3351 = vmatprep.subr.bf16.mxu0 0
    %3352 = vmatpush1.bf16.msra.mxu0 %v3342
    %3353 = vmatprep.subr.bf16.mxu0 0
    %3354 = vmatpush1.bf16.msra.mxu0 %v3341
    %3355 = vmatprep.subr.bf16.mxu0 0
    %3356 = vmatpush1.bf16.msra.mxu0 %v3340
    %3357 = vmatprep.subr.bf16.mxu0 0
    %3358 = vmatpush1.bf16.msra.mxu0 %v3339
    %3359 = vmatprep.subr.bf16.mxu0 0
    %3360 = vmatpush1.bf16.msra.mxu0 %v3338
    %3361 = vmatprep.subr.bf16.mxu0 0
    %3362 = vmatpush1.bf16.msra.mxu0 %v3337
    %3363 = vmatprep.subr.bf16.mxu0 0
    %3364 = vmatpush1.bf16.msra.mxu0 %v3336
    %3365 = vmatprep.subr.bf16.mxu0 0
    %3366 = vmatpush1.bf16.msra.mxu0 %v3335
    %3367 = vmatprep.subr.bf16.mxu0 0
    %3368 = vmatpush2.bf16.msra.mxu0 0
    %3369 = vmatprep.subr.bf16.mxu0 0
    %3370 = vmatpush2.bf16.msra.mxu0 0
    %3371 = vmatprep.subr.bf16.mxu0 0
    %3372 = vmatpush2.bf16.msra.mxu0 0
    %3373 = vmatprep.subr.bf16.mxu0 0
    %3374 = vmatpush2.bf16.msra.mxu0 0
    %3375 = vmatprep.subr.bf16.mxu0 0
    %3376 = vmatpush2.bf16.msra.mxu0 0
    %3377 = vmatprep.subr.bf16.mxu0 0
    %3378 = vmatpush2.bf16.msra.mxu0 0
    %3379 = vmatprep.subr.bf16.mxu0 0
    %3380 = vmatpush2.bf16.msra.mxu0 0
    %3381 = vmatprep.subr.bf16.mxu0 0
    %3382 = vmatpush2.bf16.msra.mxu0 0
    %3383 = vmatprep.mubr.bf16.mxu0 0
    %3384 = vmatmul.mubr.bf16.gmra.mxu0 %v3279
    %v3385 = vpop.f32.mrf.mxu0
    %v3386 = vadd.f32 %v3301, %v3385
    %v3387 = vpop.f32.mrf.mxu0
    %v3388 = vpop.f32.mrf.mxu0
    %v3389 = vpop.f32.mrf.mxu0
    %3390 = vdwg.mxu0
    %3391 = vst.msk [vmem:[#allocation10] sm:$0xff] %vm185, %v3386
    // Predicated region
    $region54: #{tpu_custom_call.1} parent=1 // pred_check
      _
    $region55: #{tpu_custom_call.1} parent=1 // pred_check_branch
      %3393 = sbr.rel (0) target = $region57
    $region56: #{tpu_custom_call.1} parent=1 // pred_region
      %s3395 = ssub.s32 128, 128
      %3396 = vsyncadd [#allocation6], %s3395
      %s3398 = sshll.u32 [#allocation10], 4
      %s3399 = int_to_ptr.vmem [resolvable:$true] %s3398
      %3401 = dma.vmem_to_hbm [thread:$0]  %s3399, 128, %s10, [#allocation6]
    $region57: #{tpu_custom_call.1} parent=1 // pred_fallthru
      _
    // Predicated region
    $region58: #{tpu_custom_call.1} parent=1 // pred_check
      _
    $region59: #{tpu_custom_call.1} parent=1 // pred_check_branch
      %3403 = sbr.rel (0) target = $region61
    $region60: #{tpu_custom_call.1} parent=1 // pred_region
      %3404 = dma.done [#allocation6], 128
    $region61: #{tpu_custom_call.1} parent=1 // pred_fallthru
      _
    %3405 = vsyncpa [#allocation5], 1
    %3406 = vsyncpa [#allocation8], 1
    %3407 = vsyncpa [#allocation6], 1

</llo_original>
